<compile_context>
chip_gen: v6e
topology: v6e:2x2x1
jax: 0.10.0
libtpu: 0.0.40
codegen_flags: <defaults>
</compile_context>

<pallas_src>
import functools

import jax
import jax.numpy as jnp
from jax.experimental import pallas as pl
from jax.experimental.pallas import tpu as pltpu

EPS = 1e-5
EXPANSION = 4
LANE = 128  # TPU lane width; channel dims are padded to multiples of this.


def _rup(v, m):
    return ((v + m - 1) // m) * m


# ----------------------------------------------------------------------------
# Fused bottleneck kernel
# ----------------------------------------------------------------------------
def _bottleneck_kernel(*refs, W, pad0, has_proj):
    if has_proj:
        (x_ref, nl_ref, nr_ref, w1_ref, b1_ref, w2_ref, b2_ref, w3_ref, b3_ref,
         ws_ref, bs_ref, o_ref, pad_ref) = refs
    else:
        (x_ref, nl_ref, nr_ref, w1_ref, b1_ref, w2_ref, b2_ref, w3_ref, b3_ref,
         o_ref, pad_ref) = refs
        ws_ref = bs_ref = None

    f32 = jnp.float32
    M = x_ref.shape[1]          # H*W pixels of one image
    Pp = w1_ref.shape[1]        # padded `planes`

    # Zero the halo strips of the flat-padded out1 scratch.  Re-done every grid
    # step so the kernel stays correct when the parallel grid axis is sharded
    # across TensorCores (each core has its own scratch instance).
    pad_ref[0:pad0, :] = jnp.zeros((pad0, Pp), pad_ref.dtype)
    pad_ref[pad0 + M:, :] = jnp.zeros((pad_ref.shape[0] - pad0 - M, Pp),
                                      pad_ref.dtype)

    x = x_ref[0]                # (M, Ci) bf16

    # conv1 (1x1) + folded bn1 + relu  -- bf16 operands, f32 accumulate on the MXU.
    out1 = jnp.maximum(
        jnp.dot(x, w1_ref[...], preferred_element_type=f32) + b1_ref[...], 0.0)
    # Store flat, zero-padded out1 (bf16) for the in-kernel im2col of conv2.
    pad_ref[pad0:pad0 + M, :] = out1.astype(pad_ref.dtype)

    # conv2 (3x3, pad=1, stride handled by the caller) + folded bn2 + relu:
    # 9 shifted matmuls over the padded flat out1 -- no HBM patches tensor.
    not_left = nl_ref[...]      # (M, 1) bf16: 0 where output column j == 0
    not_right = nr_ref[...]     # (M, 1) bf16: 0 where output column j == W-1
    acc2 = jnp.zeros((M, Pp), f32)
    taps = ((-1, -1), (-1, 0), (-1, 1),
            (0, -1), (0, 0), (0, 1),
            (1, -1), (1, 0), (1, 1))
    for t, (dy, dx) in enumerate(taps):
        start = pad0 + dy * W + dx
        win = pad_ref[start:start + M, :]            # shifted view of out1
        if dx == -1:
            win = win * not_left                     # kill wrap-around from prev row
        elif dx == 1:
            win = win * not_right                    # kill wrap-around from next row
        acc2 = acc2 + jnp.dot(win, w2_ref[t * Pp:(t + 1) * Pp, :],
                              preferred_element_type=f32)
    out2 = jnp.maximum(acc2 + b2_ref[...], 0.0).astype(jnp.bfloat16)

    # conv3 (1x1) + folded bn3, shortcut, residual add, final relu -- all fused.
    acc3 = jnp.dot(out2, w3_ref[...], preferred_element_type=f32) + b3_ref[...]
    if has_proj:
        shortcut = jnp.dot(x, ws_ref[...], preferred_element_type=f32) + bs_ref[...]
    else:
        shortcut = x.astype(f32)                     # identity (padded chans are 0)
    o_ref[0] = jnp.maximum(acc3 + shortcut, 0.0).astype(o_ref.dtype)


def _fused_bottleneck(x3, not_left, not_right, prep, *, W, has_proj):
    """x3: (N, H*W, Ci) bf16, channel-padded.  Returns (N, H*W, Op) f32."""
    N, M, Ci = x3.shape
    Pp = prep["w1"].shape[1]
    Op = prep["w3"].shape[1]
    pad0 = _rup(W + 1, 8)          # halo rows (>= W+1, 8-aligned store offset)
    Mpad = M + 2 * pad0

    kernel = functools.partial(_bottleneck_kernel, W=W, pad0=pad0,
                               has_proj=has_proj)

    in_specs = [
        pl.BlockSpec((1, M, Ci), lambda i: (i, 0, 0)),   # x  (one image / step)
        pl.BlockSpec((M, 1), lambda i: (0, 0)),          # not_left mask
        pl.BlockSpec((M, 1), lambda i: (0, 0)),          # not_right mask
        pl.BlockSpec((Ci, Pp), lambda i: (0, 0)),        # w1 (BN-folded, bf16)
        pl.BlockSpec((1, Pp), lambda i: (0, 0)),         # b1
        pl.BlockSpec((9 * Pp, Pp), lambda i: (0, 0)),    # w2 (9 stacked taps)
        pl.BlockSpec((1, Pp), lambda i: (0, 0)),         # b2
        pl.BlockSpec((Pp, Op), lambda i: (0, 0)),        # w3
        pl.BlockSpec((1, Op), lambda i: (0, 0)),         # b3
    ]
    args = [x3, not_left, not_right, prep["w1"], prep["b1"], prep["w2"],
            prep["b2"], prep["w3"], prep["b3"]]
    if has_proj:
        in_specs += [pl.BlockSpec((Ci, Op), lambda i: (0, 0)),   # ws
                     pl.BlockSpec((1, Op), lambda i: (0, 0))]    # bs
        args += [prep["ws"], prep["bs"]]

    flops = 2 * N * M * (Ci * Pp + 9 * Pp * Pp + Pp * Op
                         + (Ci * Op if has_proj else 0))
    bytes_accessed = (sum(int(a.size) * a.dtype.itemsize for a in args)
                      + N * M * Op * 4)

    return pl.pallas_call(
        kernel,
        out_shape=jax.ShapeDtypeStruct((N, M, Op), jnp.float32),
        grid=(N,),
        in_specs=in_specs,
        out_specs=pl.BlockSpec((1, M, Op), lambda i: (i, 0, 0)),
        scratch_shapes=[pltpu.VMEM((Mpad, Pp), jnp.bfloat16)],
        compiler_params=pltpu.CompilerParams(
            # >= 2 parallel steps whenever N >= 2 so v7x's two TensorCores are used.
            dimension_semantics=("parallel",),
            # Budgeted against v7x's 64 MiB physical VMEM (v5e/v6e have 128 MiB).
            vmem_limit_bytes=48 * 1024 * 1024,
        ),
        cost_estimate=pl.CostEstimate(flops=flops, transcendentals=0,
                                      bytes_accessed=bytes_accessed),
    )(*args)


# ----------------------------------------------------------------------------
# Parameter preparation: fold BN once, pad channels to lane multiples, cast bf16
# ----------------------------------------------------------------------------
def fold_bn(bn_params):
    """Return (scale, bias) so that bn(y) == y * scale + bias (eval mode)."""
    gamma, beta, mean, var = bn_params
    scale = gamma / jnp.sqrt(var + EPS)
    return scale, beta - mean * scale


def _pad2(a, rows, cols):
    r, c = a.shape
    return jnp.pad(a, ((0, rows - r), (0, cols - c)))


def prepare_block_params(params, stride):
    """One-time preprocessing: BN folded into conv weights, channel dims padded
    to multiples of 128 (lane-dense), weights in bf16, biases in f32."""
    w1 = params["w1"]
    planes, in_planes = int(w1.shape[0]), int(w1.shape[1])
    out_planes = EXPANSION * planes
    Ci, Pp, Op = _rup(in_planes, LANE), _rup(planes, LANE), _rup(out_planes, LANE)

    s1, b1 = fold_bn(params["bn1"])
    w1m = w1[:, :, 0, 0].T * s1[None, :]                        # (Cin, P)

    s2, b2 = fold_bn(params["bn2"])
    w2m = jnp.transpose(params["w2"], (2, 3, 1, 0)) * s2        # (3, 3, P, P)
    w2p = jnp.pad(w2m.reshape(9, planes, planes),
                  ((0, 0), (0, Pp - planes), (0, Pp - planes))).reshape(9 * Pp, Pp)

    s3, b3 = fold_bn(params["bn3"])
    w3m = params["w3"][:, :, 0, 0].T * s3[None, :]              # (P, 4P)

    prep = {
        "w1": _pad2(w1m, Ci, Pp).astype(jnp.bfloat16),
        "b1": jnp.pad(b1, (0, Pp - planes)).reshape(1, Pp).astype(jnp.float32),
        "w2": w2p.astype(jnp.bfloat16),
        "b2": jnp.pad(b2, (0, Pp - planes)).reshape(1, Pp).astype(jnp.float32),
        "w3": _pad2(w3m, Pp, Op).astype(jnp.bfloat16),
        "b3": jnp.pad(b3, (0, Op - out_planes)).reshape(1, Op).astype(jnp.float32),
    }
    if (stride != 1) or (in_planes != out_planes):
        ss, bs = fold_bn(params["bns"])
        wsm = params["ws"][:, :, 0, 0].T * ss[None, :]          # (Cin, 4P)
        prep["ws"] = _pad2(wsm, Ci, Op).astype(jnp.bfloat16)
        prep["bs"] = jnp.pad(bs, (0, Op - out_planes)).reshape(1, Op).astype(jnp.float32)
    return prep


# ----------------------------------------------------------------------------
# Forward
# ----------------------------------------------------------------------------
def bottleneck_forward_nhwc(x_nhwc, prep, *, planes, stride):
    N, H, W, Cin = x_nhwc.shape
    out_planes = EXPANSION * planes
    Ci = prep["w1"].shape[0]
    Op = prep["w3"].shape[1]
    has_proj = "ws" in prep

    # Pad input channels to a lane multiple, cast to bf16, flatten spatial dims.
    xp = jnp.pad(x_nhwc, ((0, 0), (0, 0), (0, 0), (0, Ci - Cin))).astype(jnp.bfloat16)
    x3 = xp.reshape(N, H * W, Ci)

    # Precomputed column-edge masks for the 3x3 taps with dx = -1 / +1.
    col = jnp.arange(H * W, dtype=jnp.int32) % W
    not_left = (col != 0).astype(jnp.bfloat16).reshape(H * W, 1)
    not_right = (col != W - 1).astype(jnp.bfloat16).reshape(H * W, 1)

    out_flat = _fused_bottleneck(x3, not_left, not_right, prep, W=W,
                                 has_proj=has_proj)                 # (N, H*W, Op)
    out = out_flat.reshape(N, H, W, Op)[..., :out_planes]
    if stride != 1:
        # Exact: all post-conv2 ops are pointwise, so strided conv == full-res
        # conv subsampled at the kept positions (see TODO at top of file).
        out = out[:, ::stride, ::stride, :]
    return out


def bottleneck_forward(x_nchw, prep, *, planes, stride):
    # NOTE: transposes only at the block boundary to match the PyTorch NCHW API;
    # a full NHWC network would drop these entirely.
    x_nhwc = jnp.transpose(x_nchw, (0, 2, 3, 1)).astype(jnp.float32)
    out = bottleneck_forward_nhwc(x_nhwc, prep, planes=planes, stride=stride)
    return jnp.transpose(out, (0, 3, 1, 2))


# ----------------------------------------------------------------------------
# Pure-JAX reference (lax conv, NCHW, eval-mode BN) for validation
# ----------------------------------------------------------------------------
def reference_forward(x, params, stride, has_proj):
    def conv(inp, w, s=1, pad=0):
        return jax.lax.conv_general_dilated(
            inp, w, (s, s), [(pad, pad), (pad, pad)],
            dimension_numbers=("NCHW", "OIHW", "NCHW"))

    def bn(y, bn_params):
        scale, bias = fold_bn(bn_params)
        return y * scale[None, :, None, None] + bias[None, :, None, None]

    out = jax.nn.relu(bn(conv(x, params["w1"]), params["bn1"]))
    out = jax.nn.relu(bn(conv(out, params["w2"], stride, 1), params["bn2"]))
    out = bn(conv(out, params["w3"]), params["bn3"])
    sc = bn(conv(x, params["ws"], stride), params["bns"]) if has_proj else x
    return jax.nn.relu(out + sc)


# ----------------------------------------------------------------------------
# Deterministic parameter construction (shapes per Bottleneck.__init__)
# ----------------------------------------------------------------------------
def make_params(key, in_planes, planes):
    out_planes = EXPANSION * planes
    ks = jax.random.split(key, 8)

    def wconv(k, cout, cin, kh, kw):
        return jax.random.normal(k, (cout, cin, kh, kw), jnp.float32) * 0.1

    def bn_params(k, c):
        k1, k2, k3, k4 = jax.random.split(k, 4)
        gamma = 1.0 + 0.1 * jax.random.normal(k1, (c,), jnp.float32)
        beta = 0.1 * jax.random.normal(k2, (c,), jnp.float32)
        mean = 0.1 * jax.random.normal(k3, (c,), jnp.float32)
        var = 0.5 + jnp.abs(jax.random.normal(k4, (c,), jnp.float32))
        return (gamma, beta, mean, var)

    return {
        "w1": wconv(ks[0], planes, in_planes, 1, 1),
        "bn1": bn_params(ks[1], planes),
        "w2": wconv(ks[2], planes, planes, 3, 3),
        "bn2": bn_params(ks[3], planes),
        "w3": wconv(ks[4], out_planes, planes, 1, 1),
        "bn3": bn_params(ks[5], out_planes),
        "ws": wconv(ks[6], out_planes, in_planes, 1, 1),
        "bns": bn_params(ks[7], out_planes),
    }


if __name__ == "__main__":
    key = jax.random.PRNGKey(0)

    configs = [
        # (N, in_planes, planes, H, W, stride)
        (2, 4, 4, 16, 16, 2),    # projection shortcut, stride 2 (as in the spec test)
        (2, 16, 4, 16, 16, 1),   # identity shortcut (in_planes == 4*planes), stride 1
    ]

    for cfg_i, (N, in_planes, planes, H, W, stride) in enumerate(configs):
        k_x, k_p = jax.random.split(jax.random.fold_in(key, cfg_i))
        x = jax.random.normal(k_x, (N, in_planes, H, W), jnp.float32)
        params = make_params(k_p, in_planes, planes)

        # Fold BN / pad / cast ONCE (inference-time constant preprocessing).
        prep = prepare_block_params(params, stride)

        fwd = jax.jit(functools.partial(bottleneck_forward, planes=planes,
                                        stride=stride))
        out = jax.block_until_ready(fwd(x, prep))

        has_proj = (stride != 1) or (in_planes != EXPANSION * planes)
        ref = jax.block_until_ready(reference_forward(x, params, stride, has_proj))

        Ho = (H + 2 - 3) // stride + 1
        Wo = (W + 2 - 3) // stride + 1
        assert out.shape == ref.shape == (N, EXPANSION * planes, Ho, Wo), (
            out.shape, ref.shape)
        max_err = float(jnp.max(jnp.abs(out - ref)))
        # bf16 MXU operands (f32 accumulate) vs pure-f32 reference.
        assert jnp.allclose(out, ref, atol=3e-2, rtol=3e-2), max_err

    print("KERNEL_OK")
</pallas_src>

<mosaic_0001>
module attributes {stable_mosaic.version = 11 : i64} {
  func.func @_bottleneck_kernel(%arg0: i32, %arg1: memref<1x256x128xbf16, #tpu.memory_space<vmem>>, %arg2: memref<256x1xbf16, #tpu.memory_space<vmem>>, %arg3: memref<256x1xbf16, #tpu.memory_space<vmem>>, %arg4: memref<128x128xbf16, #tpu.memory_space<vmem>>, %arg5: memref<1x128xf32, #tpu.memory_space<vmem>>, %arg6: memref<1152x128xbf16, #tpu.memory_space<vmem>>, %arg7: memref<1x128xf32, #tpu.memory_space<vmem>>, %arg8: memref<128x128xbf16, #tpu.memory_space<vmem>>, %arg9: memref<1x128xf32, #tpu.memory_space<vmem>>, %arg10: memref<128x128xbf16, #tpu.memory_space<vmem>>, %arg11: memref<1x128xf32, #tpu.memory_space<vmem>>, %arg12: memref<1x256x128xf32, #tpu.memory_space<vmem>>, %arg13: memref<304x128xbf16, #tpu.memory_space<vmem>>) attributes {dimension_semantics = [#tpu.dimension_semantics<parallel>], iteration_bounds = array<i64: 2>, scalar_prefetch = 0 : i64, scratch_operands = 1 : i64, tpu.core_type = #tpu.core_type<tc>, window_params = [{transform_indices = @transform_0, window_bounds = array<i64: 1, 256, 128>}, {pipeline_mode = #tpu.pipeline_mode<synchronous>, transform_indices = @transform_1, window_bounds = array<i64: 256, 1>}, {pipeline_mode = #tpu.pipeline_mode<synchronous>, transform_indices = @transform_2, window_bounds = array<i64: 256, 1>}, {pipeline_mode = #tpu.pipeline_mode<synchronous>, transform_indices = @transform_3, window_bounds = array<i64: 128, 128>}, {pipeline_mode = #tpu.pipeline_mode<synchronous>, transform_indices = @transform_4, window_bounds = array<i64: 1, 128>}, {pipeline_mode = #tpu.pipeline_mode<synchronous>, transform_indices = @transform_5, window_bounds = array<i64: 1152, 128>}, {pipeline_mode = #tpu.pipeline_mode<synchronous>, transform_indices = @transform_6, window_bounds = array<i64: 1, 128>}, {pipeline_mode = #tpu.pipeline_mode<synchronous>, transform_indices = @transform_7, window_bounds = array<i64: 128, 128>}, {pipeline_mode = #tpu.pipeline_mode<synchronous>, transform_indices = @transform_8, window_bounds = array<i64: 1, 128>}, {pipeline_mode = #tpu.pipeline_mode<synchronous>, transform_indices = @transform_9, window_bounds = array<i64: 128, 128>}, {pipeline_mode = #tpu.pipeline_mode<synchronous>, transform_indices = @transform_10, window_bounds = array<i64: 1, 128>}, {transform_indices = @transform_11, window_bounds = array<i64: 1, 256, 128>}]} {
    %cst = arith.constant 0.000000e+00 : bf16
    %0 = vector.broadcast %cst : bf16 to vector<24x128xbf16>
    %c0 = arith.constant 0 : index
    %c0_0 = arith.constant 0 : index
    %1 = vector.load %arg13[%c0, %c0_0] : memref<304x128xbf16, #tpu.memory_space<vmem>>, vector<24x128xbf16>
    tpu.vector_store %arg13[%c0, %c0_0], %0 {strides = array<i32>} : memref<304x128xbf16, #tpu.memory_space<vmem>>, vector<24x128xbf16>,
    %cst_1 = arith.constant 0.000000e+00 : bf16
    %2 = vector.broadcast %cst_1 : bf16 to vector<24x128xbf16>
    %c280 = arith.constant 280 : index
    %c0_2 = arith.constant 0 : index
    %3 = vector.load %arg13[%c280, %c0_2] : memref<304x128xbf16, #tpu.memory_space<vmem>>, vector<24x128xbf16>
    tpu.vector_store %arg13[%c280, %c0_2], %2 {strides = array<i32>} : memref<304x128xbf16, #tpu.memory_space<vmem>>, vector<24x128xbf16>,
    %c0_3 = arith.constant 0 : index
    %c0_4 = arith.constant 0 : index
    %c0_5 = arith.constant 0 : index
    %4 = vector.load %arg1[%c0_3, %c0_4, %c0_5] : memref<1x256x128xbf16, #tpu.memory_space<vmem>>, vector<1x256x128xbf16>
    %5 = vector.shape_cast %4 : vector<1x256x128xbf16> to vector<256x128xbf16>
    %c0_6 = arith.constant 0 : index
    %c0_7 = arith.constant 0 : index
    %6 = vector.load %arg4[%c0_6, %c0_7] : memref<128x128xbf16, #tpu.memory_space<vmem>>, vector<128x128xbf16>
    %cst_8 = arith.constant dense<0.000000e+00> : vector<256x128xf32>
    %7 = tpu.matmul %5, %6, %cst_8 {dimension_numbers = #tpu.dot_dimension_numbers<[1], [0], [0], [1], [0, 0, 1, 1], [], []>} : vector<256x128xbf16>, vector<128x128xbf16>, vector<256x128xf32> -> vector<256x128xf32>
    %c0_9 = arith.constant 0 : index
    %c0_10 = arith.constant 0 : index
    %8 = vector.load %arg5[%c0_9, %c0_10] : memref<1x128xf32, #tpu.memory_space<vmem>>, vector<1x128xf32>
    %9 = vector.broadcast %8 : vector<1x128xf32> to vector<256x128xf32>
    %10 = arith.addf %7, %9 : vector<256x128xf32>
    %cst_11 = arith.constant 0.000000e+00 : f32
    %11 = vector.broadcast %cst_11 : f32 to vector<256x128xf32>
    %12 = arith.maximumf %10, %11 : vector<256x128xf32>
    %13 = arith.truncf %12 : vector<256x128xf32> to vector<256x128xbf16>
    %c24 = arith.constant 24 : index
    %c0_12 = arith.constant 0 : index
    %14 = vector.load %arg13[%c24, %c0_12] : memref<304x128xbf16, #tpu.memory_space<vmem>>, vector<256x128xbf16>
    tpu.vector_store %arg13[%c24, %c0_12], %13 {strides = array<i32>} : memref<304x128xbf16, #tpu.memory_space<vmem>>, vector<256x128xbf16>,
    %c0_13 = arith.constant 0 : index
    %c0_14 = arith.constant 0 : index
    %15 = vector.load %arg2[%c0_13, %c0_14] : memref<256x1xbf16, #tpu.memory_space<vmem>>, vector<256x1xbf16>
    %c0_15 = arith.constant 0 : index
    %c0_16 = arith.constant 0 : index
    %16 = vector.load %arg3[%c0_15, %c0_16] : memref<256x1xbf16, #tpu.memory_space<vmem>>, vector<256x1xbf16>
    %cst_17 = arith.constant 0.000000e+00 : f32
    %17 = vector.broadcast %cst_17 : f32 to vector<256x128xf32>
    %c7 = arith.constant 7 : index
    %c0_18 = arith.constant 0 : index
    %18 = vector.load %arg13[%c7, %c0_18] : memref<304x128xbf16, #tpu.memory_space<vmem>>, vector<256x128xbf16>
    %19 = vector.broadcast %15 : vector<256x1xbf16> to vector<256x128xbf16>
    %20 = arith.mulf %18, %19 : vector<256x128xbf16>
    %c0_19 = arith.constant 0 : index
    %c0_20 = arith.constant 0 : index
    %21 = vector.load %arg6[%c0_19, %c0_20] : memref<1152x128xbf16, #tpu.memory_space<vmem>>, vector<128x128xbf16>
    %cst_21 = arith.constant dense<0.000000e+00> : vector<256x128xf32>
    %22 = tpu.matmul %20, %21, %cst_21 {dimension_numbers = #tpu.dot_dimension_numbers<[1], [0], [0], [1], [0, 0, 1, 1], [], []>} : vector<256x128xbf16>, vector<128x128xbf16>, vector<256x128xf32> -> vector<256x128xf32>
    %23 = arith.addf %17, %22 : vector<256x128xf32>
    %c8 = arith.constant 8 : index
    %c0_22 = arith.constant 0 : index
    %24 = vector.load %arg13[%c8, %c0_22] : memref<304x128xbf16, #tpu.memory_space<vmem>>, vector<256x128xbf16>
    %c128 = arith.constant 128 : index
    %c0_23 = arith.constant 0 : index
    %25 = vector.load %arg6[%c128, %c0_23] : memref<1152x128xbf16, #tpu.memory_space<vmem>>, vector<128x128xbf16>
    %cst_24 = arith.constant dense<0.000000e+00> : vector<256x128xf32>
    %26 = tpu.matmul %24, %25, %cst_24 {dimension_numbers = #tpu.dot_dimension_numbers<[1], [0], [0], [1], [0, 0, 1, 1], [], []>} : vector<256x128xbf16>, vector<128x128xbf16>, vector<256x128xf32> -> vector<256x128xf32>
    %27 = arith.addf %23, %26 : vector<256x128xf32>
    %c9 = arith.constant 9 : index
    %c0_25 = arith.constant 0 : index
    %28 = vector.load %arg13[%c9, %c0_25] : memref<304x128xbf16, #tpu.memory_space<vmem>>, vector<256x128xbf16>
    %29 = vector.broadcast %16 : vector<256x1xbf16> to vector<256x128xbf16>
    %30 = arith.mulf %28, %29 : vector<256x128xbf16>
    %c256 = arith.constant 256 : index
    %c0_26 = arith.constant 0 : index
    %31 = vector.load %arg6[%c256, %c0_26] : memref<1152x128xbf16, #tpu.memory_space<vmem>>, vector<128x128xbf16>
    %cst_27 = arith.constant dense<0.000000e+00> : vector<256x128xf32>
    %32 = tpu.matmul %30, %31, %cst_27 {dimension_numbers = #tpu.dot_dimension_numbers<[1], [0], [0], [1], [0, 0, 1, 1], [], []>} : vector<256x128xbf16>, vector<128x128xbf16>, vector<256x128xf32> -> vector<256x128xf32>
    %33 = arith.addf %27, %32 : vector<256x128xf32>
    %c23 = arith.constant 23 : index
    %c0_28 = arith.constant 0 : index
    %34 = vector.load %arg13[%c23, %c0_28] : memref<304x128xbf16, #tpu.memory_space<vmem>>, vector<256x128xbf16>
    %35 = vector.broadcast %15 : vector<256x1xbf16> to vector<256x128xbf16>
    %36 = arith.mulf %34, %35 : vector<256x128xbf16>
    %c384 = arith.constant 384 : index
    %c0_29 = arith.constant 0 : index
    %37 = vector.load %arg6[%c384, %c0_29] : memref<1152x128xbf16, #tpu.memory_space<vmem>>, vector<128x128xbf16>
    %cst_30 = arith.constant dense<0.000000e+00> : vector<256x128xf32>
    %38 = tpu.matmul %36, %37, %cst_30 {dimension_numbers = #tpu.dot_dimension_numbers<[1], [0], [0], [1], [0, 0, 1, 1], [], []>} : vector<256x128xbf16>, vector<128x128xbf16>, vector<256x128xf32> -> vector<256x128xf32>
    %39 = arith.addf %33, %38 : vector<256x128xf32>
    %c24_31 = arith.constant 24 : index
    %c0_32 = arith.constant 0 : index
    %40 = vector.load %arg13[%c24_31, %c0_32] : memref<304x128xbf16, #tpu.memory_space<vmem>>, vector<256x128xbf16>
    %c512 = arith.constant 512 : index
    %c0_33 = arith.constant 0 : index
    %41 = vector.load %arg6[%c512, %c0_33] : memref<1152x128xbf16, #tpu.memory_space<vmem>>, vector<128x128xbf16>
    %cst_34 = arith.constant dense<0.000000e+00> : vector<256x128xf32>
    %42 = tpu.matmul %40, %41, %cst_34 {dimension_numbers = #tpu.dot_dimension_numbers<[1], [0], [0], [1], [0, 0, 1, 1], [], []>} : vector<256x128xbf16>, vector<128x128xbf16>, vector<256x128xf32> -> vector<256x128xf32>
    %43 = arith.addf %39, %42 : vector<256x128xf32>
    %c25 = arith.constant 25 : index
    %c0_35 = arith.constant 0 : index
    %44 = vector.load %arg13[%c25, %c0_35] : memref<304x128xbf16, #tpu.memory_space<vmem>>, vector<256x128xbf16>
    %45 = vector.broadcast %16 : vector<256x1xbf16> to vector<256x128xbf16>
    %46 = arith.mulf %44, %45 : vector<256x128xbf16>
    %c640 = arith.constant 640 : index
    %c0_36 = arith.constant 0 : index
    %47 = vector.load %arg6[%c640, %c0_36] : memref<1152x128xbf16, #tpu.memory_space<vmem>>, vector<128x128xbf16>
    %cst_37 = arith.constant dense<0.000000e+00> : vector<256x128xf32>
    %48 = tpu.matmul %46, %47, %cst_37 {dimension_numbers = #tpu.dot_dimension_numbers<[1], [0], [0], [1], [0, 0, 1, 1], [], []>} : vector<256x128xbf16>, vector<128x128xbf16>, vector<256x128xf32> -> vector<256x128xf32>
    %49 = arith.addf %43, %48 : vector<256x128xf32>
    %c39 = arith.constant 39 : index
    %c0_38 = arith.constant 0 : index
    %50 = vector.load %arg13[%c39, %c0_38] : memref<304x128xbf16, #tpu.memory_space<vmem>>, vector<256x128xbf16>
    %51 = vector.broadcast %15 : vector<256x1xbf16> to vector<256x128xbf16>
    %52 = arith.mulf %50, %51 : vector<256x128xbf16>
    %c768 = arith.constant 768 : index
    %c0_39 = arith.constant 0 : index
    %53 = vector.load %arg6[%c768, %c0_39] : memref<1152x128xbf16, #tpu.memory_space<vmem>>, vector<128x128xbf16>
    %cst_40 = arith.constant dense<0.000000e+00> : vector<256x128xf32>
    %54 = tpu.matmul %52, %53, %cst_40 {dimension_numbers = #tpu.dot_dimension_numbers<[1], [0], [0], [1], [0, 0, 1, 1], [], []>} : vector<256x128xbf16>, vector<128x128xbf16>, vector<256x128xf32> -> vector<256x128xf32>
    %55 = arith.addf %49, %54 : vector<256x128xf32>
    %c40 = arith.constant 40 : index
    %c0_41 = arith.constant 0 : index
    %56 = vector.load %arg13[%c40, %c0_41] : memref<304x128xbf16, #tpu.memory_space<vmem>>, vector<256x128xbf16>
    %c896 = arith.constant 896 : index
    %c0_42 = arith.constant 0 : index
    %57 = vector.load %arg6[%c896, %c0_42] : memref<1152x128xbf16, #tpu.memory_space<vmem>>, vector<128x128xbf16>
    %cst_43 = arith.constant dense<0.000000e+00> : vector<256x128xf32>
    %58 = tpu.matmul %56, %57, %cst_43 {dimension_numbers = #tpu.dot_dimension_numbers<[1], [0], [0], [1], [0, 0, 1, 1], [], []>} : vector<256x128xbf16>, vector<128x128xbf16>, vector<256x128xf32> -> vector<256x128xf32>
    %59 = arith.addf %55, %58 : vector<256x128xf32>
    %c41 = arith.constant 41 : index
    %c0_44 = arith.constant 0 : index
    %60 = vector.load %arg13[%c41, %c0_44] : memref<304x128xbf16, #tpu.memory_space<vmem>>, vector<256x128xbf16>
    %61 = vector.broadcast %16 : vector<256x1xbf16> to vector<256x128xbf16>
    %62 = arith.mulf %60, %61 : vector<256x128xbf16>
    %c1024 = arith.constant 1024 : index
    %c0_45 = arith.constant 0 : index
    %63 = vector.load %arg6[%c1024, %c0_45] : memref<1152x128xbf16, #tpu.memory_space<vmem>>, vector<128x128xbf16>
    %cst_46 = arith.constant dense<0.000000e+00> : vector<256x128xf32>
    %64 = tpu.matmul %62, %63, %cst_46 {dimension_numbers = #tpu.dot_dimension_numbers<[1], [0], [0], [1], [0, 0, 1, 1], [], []>} : vector<256x128xbf16>, vector<128x128xbf16>, vector<256x128xf32> -> vector<256x128xf32>
    %65 = arith.addf %59, %64 : vector<256x128xf32>
    %c0_47 = arith.constant 0 : index
    %c0_48 = arith.constant 0 : index
    %66 = vector.load %arg7[%c0_47, %c0_48] : memref<1x128xf32, #tpu.memory_space<vmem>>, vector<1x128xf32>
    %67 = vector.broadcast %66 : vector<1x128xf32> to vector<256x128xf32>
    %68 = arith.addf %65, %67 : vector<256x128xf32>
    %cst_49 = arith.constant 0.000000e+00 : f32
    %69 = vector.broadcast %cst_49 : f32 to vector<256x128xf32>
    %70 = arith.maximumf %68, %69 : vector<256x128xf32>
    %71 = arith.truncf %70 : vector<256x128xf32> to vector<256x128xbf16>
    %c0_50 = arith.constant 0 : index
    %c0_51 = arith.constant 0 : index
    %72 = vector.load %arg8[%c0_50, %c0_51] : memref<128x128xbf16, #tpu.memory_space<vmem>>, vector<128x128xbf16>
    %cst_52 = arith.constant dense<0.000000e+00> : vector<256x128xf32>
    %73 = tpu.matmul %71, %72, %cst_52 {dimension_numbers = #tpu.dot_dimension_numbers<[1], [0], [0], [1], [0, 0, 1, 1], [], []>} : vector<256x128xbf16>, vector<128x128xbf16>, vector<256x128xf32> -> vector<256x128xf32>
    %c0_53 = arith.constant 0 : index
    %c0_54 = arith.constant 0 : index
    %74 = vector.load %arg9[%c0_53, %c0_54] : memref<1x128xf32, #tpu.memory_space<vmem>>, vector<1x128xf32>
    %75 = vector.broadcast %74 : vector<1x128xf32> to vector<256x128xf32>
    %76 = arith.addf %73, %75 : vector<256x128xf32>
    %c0_55 = arith.constant 0 : index
    %c0_56 = arith.constant 0 : index
    %77 = vector.load %arg10[%c0_55, %c0_56] : memref<128x128xbf16, #tpu.memory_space<vmem>>, vector<128x128xbf16>
    %cst_57 = arith.constant dense<0.000000e+00> : vector<256x128xf32>
    %78 = tpu.matmul %5, %77, %cst_57 {dimension_numbers = #tpu.dot_dimension_numbers<[1], [0], [0], [1], [0, 0, 1, 1], [], []>} : vector<256x128xbf16>, vector<128x128xbf16>, vector<256x128xf32> -> vector<256x128xf32>
    %c0_58 = arith.constant 0 : index
    %c0_59 = arith.constant 0 : index
    %79 = vector.load %arg11[%c0_58, %c0_59] : memref<1x128xf32, #tpu.memory_space<vmem>>, vector<1x128xf32>
    %80 = vector.broadcast %79 : vector<1x128xf32> to vector<256x128xf32>
    %81 = arith.addf %78, %80 : vector<256x128xf32>
    %82 = arith.addf %76, %81 : vector<256x128xf32>
    %cst_60 = arith.constant 0.000000e+00 : f32
    %83 = vector.broadcast %cst_60 : f32 to vector<256x128xf32>
    %84 = arith.maximumf %82, %83 : vector<256x128xf32>
    %c0_61 = arith.constant 0 : index
    %c0_62 = arith.constant 0 : index
    %c0_63 = arith.constant 0 : index
    %85 = vector.load %arg12[%c0_61, %c0_62, %c0_63] : memref<1x256x128xf32, #tpu.memory_space<vmem>>, vector<1x256x128xf32>
    %86 = vector.shape_cast %85 : vector<1x256x128xf32> to vector<256x128xf32>
    %87 = vector.shape_cast %84 : vector<256x128xf32> to vector<1x256x128xf32>
    tpu.vector_store %arg12[%c0_61, %c0_62, %c0_63], %87 {strides = array<i32>} : memref<1x256x128xf32, #tpu.memory_space<vmem>>, vector<1x256x128xf32>,
    return
  }
  func.func @transform_0(%arg0: i32) -> (i32, i32, i32) {
    %c0_i32 = arith.constant 0 : i32
    %c0_i32_0 = arith.constant 0 : i32
    %c0_i32_1 = arith.constant 0 : i32
    return %arg0, %c0_i32, %c0_i32_0 : i32, i32, i32
  }
  func.func @transform_1(%arg0: i32) -> (i32, i32) {
    %c0_i32 = arith.constant 0 : i32
    %c0_i32_0 = arith.constant 0 : i32
    %c0_i32_1 = arith.constant 0 : i32
    return %c0_i32, %c0_i32_0 : i32, i32
  }
  func.func @transform_2(%arg0: i32) -> (i32, i32) {
    %c0_i32 = arith.constant 0 : i32
    %c0_i32_0 = arith.constant 0 : i32
    %c0_i32_1 = arith.constant 0 : i32
    return %c0_i32, %c0_i32_0 : i32, i32
  }
  func.func @transform_3(%arg0: i32) -> (i32, i32) {
    %c0_i32 = arith.constant 0 : i32
    %c0_i32_0 = arith.constant 0 : i32
    %c0_i32_1 = arith.constant 0 : i32
    return %c0_i32, %c0_i32_0 : i32, i32
  }
  func.func @transform_4(%arg0: i32) -> (i32, i32) {
    %c0_i32 = arith.constant 0 : i32
    %c0_i32_0 = arith.constant 0 : i32
    %c0_i32_1 = arith.constant 0 : i32
    return %c0_i32, %c0_i32_0 : i32, i32
  }
  func.func @transform_5(%arg0: i32) -> (i32, i32) {
    %c0_i32 = arith.constant 0 : i32
    %c0_i32_0 = arith.constant 0 : i32
    %c0_i32_1 = arith.constant 0 : i32
    return %c0_i32, %c0_i32_0 : i32, i32
  }
  func.func @transform_6(%arg0: i32) -> (i32, i32) {
    %c0_i32 = arith.constant 0 : i32
    %c0_i32_0 = arith.constant 0 : i32
    %c0_i32_1 = arith.constant 0 : i32
    return %c0_i32, %c0_i32_0 : i32, i32
  }
  func.func @transform_7(%arg0: i32) -> (i32, i32) {
    %c0_i32 = arith.constant 0 : i32
    %c0_i32_0 = arith.constant 0 : i32
    %c0_i32_1 = arith.constant 0 : i32
    return %c0_i32, %c0_i32_0 : i32, i32
  }
  func.func @transform_8(%arg0: i32) -> (i32, i32) {
    %c0_i32 = arith.constant 0 : i32
    %c0_i32_0 = arith.constant 0 : i32
    %c0_i32_1 = arith.constant 0 : i32
    return %c0_i32, %c0_i32_0 : i32, i32
  }
  func.func @transform_9(%arg0: i32) -> (i32, i32) {
    %c0_i32 = arith.constant 0 : i32
    %c0_i32_0 = arith.constant 0 : i32
    %c0_i32_1 = arith.constant 0 : i32
    return %c0_i32, %c0_i32_0 : i32, i32
  }
  func.func @transform_10(%arg0: i32) -> (i32, i32) {
    %c0_i32 = arith.constant 0 : i32
    %c0_i32_0 = arith.constant 0 : i32
    %c0_i32_1 = arith.constant 0 : i32
    return %c0_i32, %c0_i32_0 : i32, i32
  }
  func.func @transform_11(%arg0: i32) -> (i32, i32, i32) {
    %c0_i32 = arith.constant 0 : i32
    %c0_i32_0 = arith.constant 0 : i32
    %c0_i32_1 = arith.constant 0 : i32
    return %arg0, %c0_i32, %c0_i32_0 : i32, i32, i32
  }
}

</mosaic_0001>

<llo_original>
// kernel: bottleneck_forward.1
$region0: #{bottleneck_forward.1}
  #allocation0 [shape = 'u32[]', space=smem, size = 0x4, offset = 0x4, fixed_abs, tag = 'smem constant byte address 0x4 - core index']
  #allocation1 [shape = 'u32[144,128]{1,0:T(1,128)}', space=vmem, size = 0x12000, scoped, tag = 'internal scratch']
  #allocation2 [shape = 'bf16[304,128]{1,0:T(8,128)(2,1)}', space=vmem, size = 0x13000, scoped, tag = 'scratch operand']
  %s0 = inlined_call_operand.vmem [shape: bf16[2,256,128], index: 0, kind: input, shape index: {}]
  %s1 = inlined_call_operand.vmem [shape: bf16[256,1], index: 1, kind: input, shape index: {}]
  %s2 = inlined_call_operand.vmem [shape: bf16[256,1], index: 2, kind: input, shape index: {}]
  %s3 = inlined_call_operand.vmem [shape: bf16[128,128], index: 3, kind: input, shape index: {}]
  %s4 = inlined_call_operand.vmem [shape: f32[1,128], index: 4, kind: input, shape index: {}]
  %s5 = inlined_call_operand.vmem [shape: bf16[1152,128], index: 5, kind: input, shape index: {}]
  %s6 = inlined_call_operand.vmem [shape: f32[1,128], index: 6, kind: input, shape index: {}]
  %s7 = inlined_call_operand.vmem [shape: bf16[128,128], index: 7, kind: input, shape index: {}]
  %s8 = inlined_call_operand.vmem [shape: f32[1,128], index: 8, kind: input, shape index: {}]
  %s9 = inlined_call_operand.vmem [shape: bf16[128,128], index: 9, kind: input, shape index: {}]
  %s10 = inlined_call_operand.vmem [shape: f32[1,128], index: 10, kind: input, shape index: {}]
  %s11 = inlined_call_operand.vmem [shape: f32[2,256,128], index: 11, kind: output, shape index: {}]
  %s12 = sld [smem:[#allocation0]]
  $region77: #{bottleneck_forward.1} parent=0
    _
  %s14 = ssub.s32 1, %s12
  %s15 = scalar_select 0, %s14, %s12
  loop: start=0, step=1, limit=4
  $region2: #{bottleneck_forward.1} parent=0 // loop_pre_header
    _
  $region3: #{bottleneck_forward.1} parent=0 // loop_header
    %s17 = sphi 0, %s21
    %p18 = scmp.ge.s32.totalorder %s17, 4
    %s27 = sphi 0, %s29
    %s30 = sphi 0, %s27
    %s31 = sphi 0, %s30
    %s47 = sphi 0, %s31
    %s51 = sphi 0, %s51
    %s53 = sphi 0, %s51
    %s54 = sphi 0, %s53
    %s68 = sphi 0, %s54
    %s72 = sphi 0, %s72
    %s74 = sphi 0, %s72
    %s75 = sphi 0, %s74
    %s89 = sphi 0, %s75
    %s93 = sphi 0, %s93
    %s95 = sphi 0, %s93
    %s96 = sphi 0, %s95
    %s110 = sphi 0, %s96
    %s114 = sphi 0, %s114
    %s116 = sphi 0, %s114
    %s117 = sphi 0, %s116
    %s131 = sphi 0, %s117
    %s135 = sphi 0, %s135
    %s137 = sphi 0, %s135
    %s138 = sphi 0, %s137
    %s152 = sphi 0, %s138
    %s156 = sphi 0, %s156
    %s158 = sphi 0, %s156
    %s159 = sphi 0, %s158
    %s173 = sphi 0, %s159
    %s177 = sphi 0, %s177
    %s179 = sphi 0, %s177
    %s180 = sphi 0, %s179
    %s194 = sphi 0, %s180
    %s198 = sphi 0, %s198
    %s200 = sphi 0, %s198
    %s201 = sphi 0, %s200
    %s215 = sphi 0, %s201
    %s219 = sphi 0, %s219
    %s221 = sphi 0, %s219
    %s222 = sphi 0, %s221
    %s236 = sphi 0, %s222
    %s240 = sphi 0, %s240
    %s242 = sphi 0, %s240
    %s243 = sphi 0, %s242
    %s257 = sphi 0, %s243
    %s263 = sphi 0, %s265
    %s266 = sphi 0, %s263
    %s267 = sphi 0, %s266
    %s283 = sphi 0, %s267
  $region4: #{bottleneck_forward.1} parent=0 // loop_header_branch
    %20 = sbr.rel (%p18) target = $region8
  $region5: #{bottleneck_forward.1} parent=0 // loop_body
    %s22 = ssub.s32 %s17, 1
    %s23 = ssub.s32 %s17, 2
    %s24 = sadd.s32 %s17, 1
    %s25 = ssub.s32 %s17, %s24
    %p26 = scmp.eq.s32.totalorder %s25, 0
    %s28 = sadd.s32 %s27, 1
    %s29 = scalar_select %p26, %s27, %s28
    %p32 = pneg %p26
    %p33 = scmp.eq.s32.totalorder %s17, 1
    %p34 = por %p32, %p33
    %p35 = scmp.ne.s32.totalorder %s27, %s30
    %p36 = scmp.eq.s32.totalorder %s17, 0
    %p37 = por %p35, %p36
    %p38 = scmp.ne.s32.totalorder %s27, %s30
    %p39 = scmp.eq.s32.totalorder %s22, 1
    %p40 = por %p38, %p39
    %p41 = scmp.ne.s32.totalorder %s30, %s31
    %p42 = scmp.eq.s32.totalorder %s22, 0
    %p43 = por %p41, %p42
    %p44 = scmp.ne.s32.totalorder %s30, %s31
    %p45 = scmp.eq.s32.totalorder %s23, 1
    %p46 = por %p44, %p45
    %p48 = scmp.ne.s32.totalorder %s31, %s47
    %p49 = scmp.eq.s32.totalorder %s23, 0
    %p50 = por %p48, %p49
    %s52 = sadd.s32 %s51, 1
    %p55 = scmp.eq.s32.totalorder %s17, 1
    %p56 = scmp.ne.s32.totalorder %s51, %s53
    %p57 = scmp.eq.s32.totalorder %s17, 0
    %p58 = por %p56, %p57
    %p59 = scmp.ne.s32.totalorder %s51, %s53
    %p60 = scmp.eq.s32.totalorder %s22, 1
    %p61 = por %p59, %p60
    %p62 = scmp.ne.s32.totalorder %s53, %s54
    %p63 = scmp.eq.s32.totalorder %s22, 0
    %p64 = por %p62, %p63
    %p65 = scmp.ne.s32.totalorder %s53, %s54
    %p66 = scmp.eq.s32.totalorder %s23, 1
    %p67 = por %p65, %p66
    %p69 = scmp.ne.s32.totalorder %s54, %s68
    %p70 = scmp.eq.s32.totalorder %s23, 0
    %p71 = por %p69, %p70
    %s73 = sadd.s32 %s72, 1
    %p76 = scmp.eq.s32.totalorder %s17, 1
    %p77 = scmp.ne.s32.totalorder %s72, %s74
    %p78 = scmp.eq.s32.totalorder %s17, 0
    %p79 = por %p77, %p78
    %p80 = scmp.ne.s32.totalorder %s72, %s74
    %p81 = scmp.eq.s32.totalorder %s22, 1
    %p82 = por %p80, %p81
    %p83 = scmp.ne.s32.totalorder %s74, %s75
    %p84 = scmp.eq.s32.totalorder %s22, 0
    %p85 = por %p83, %p84
    %p86 = scmp.ne.s32.totalorder %s74, %s75
    %p87 = scmp.eq.s32.totalorder %s23, 1
    %p88 = por %p86, %p87
    %p90 = scmp.ne.s32.totalorder %s75, %s89
    %p91 = scmp.eq.s32.totalorder %s23, 0
    %p92 = por %p90, %p91
    %s94 = sadd.s32 %s93, 1
    %p97 = scmp.eq.s32.totalorder %s17, 1
    %p98 = scmp.ne.s32.totalorder %s93, %s95
    %p99 = scmp.eq.s32.totalorder %s17, 0
    %p100 = por %p98, %p99
    %p101 = scmp.ne.s32.totalorder %s93, %s95
    %p102 = scmp.eq.s32.totalorder %s22, 1
    %p103 = por %p101, %p102
    %p104 = scmp.ne.s32.totalorder %s95, %s96
    %p105 = scmp.eq.s32.totalorder %s22, 0
    %p106 = por %p104, %p105
    %p107 = scmp.ne.s32.totalorder %s95, %s96
    %p108 = scmp.eq.s32.totalorder %s23, 1
    %p109 = por %p107, %p108
    %p111 = scmp.ne.s32.totalorder %s96, %s110
    %p112 = scmp.eq.s32.totalorder %s23, 0
    %p113 = por %p111, %p112
    %s115 = sadd.s32 %s114, 1
    %p118 = scmp.eq.s32.totalorder %s17, 1
    %p119 = scmp.ne.s32.totalorder %s114, %s116
    %p120 = scmp.eq.s32.totalorder %s17, 0
    %p121 = por %p119, %p120
    %p122 = scmp.ne.s32.totalorder %s114, %s116
    %p123 = scmp.eq.s32.totalorder %s22, 1
    %p124 = por %p122, %p123
    %p125 = scmp.ne.s32.totalorder %s116, %s117
    %p126 = scmp.eq.s32.totalorder %s22, 0
    %p127 = por %p125, %p126
    %p128 = scmp.ne.s32.totalorder %s116, %s117
    %p129 = scmp.eq.s32.totalorder %s23, 1
    %p130 = por %p128, %p129
    %p132 = scmp.ne.s32.totalorder %s117, %s131
    %p133 = scmp.eq.s32.totalorder %s23, 0
    %p134 = por %p132, %p133
    %s136 = sadd.s32 %s135, 1
    %p139 = scmp.eq.s32.totalorder %s17, 1
    %p140 = scmp.ne.s32.totalorder %s135, %s137
    %p141 = scmp.eq.s32.totalorder %s17, 0
    %p142 = por %p140, %p141
    %p143 = scmp.ne.s32.totalorder %s135, %s137
    %p144 = scmp.eq.s32.totalorder %s22, 1
    %p145 = por %p143, %p144
    %p146 = scmp.ne.s32.totalorder %s137, %s138
    %p147 = scmp.eq.s32.totalorder %s22, 0
    %p148 = por %p146, %p147
    %p149 = scmp.ne.s32.totalorder %s137, %s138
    %p150 = scmp.eq.s32.totalorder %s23, 1
    %p151 = por %p149, %p150
    %p153 = scmp.ne.s32.totalorder %s138, %s152
    %p154 = scmp.eq.s32.totalorder %s23, 0
    %p155 = por %p153, %p154
    %s157 = sadd.s32 %s156, 1
    %p160 = scmp.eq.s32.totalorder %s17, 1
    %p161 = scmp.ne.s32.totalorder %s156, %s158
    %p162 = scmp.eq.s32.totalorder %s17, 0
    %p163 = por %p161, %p162
    %p164 = scmp.ne.s32.totalorder %s156, %s158
    %p165 = scmp.eq.s32.totalorder %s22, 1
    %p166 = por %p164, %p165
    %p167 = scmp.ne.s32.totalorder %s158, %s159
    %p168 = scmp.eq.s32.totalorder %s22, 0
    %p169 = por %p167, %p168
    %p170 = scmp.ne.s32.totalorder %s158, %s159
    %p171 = scmp.eq.s32.totalorder %s23, 1
    %p172 = por %p170, %p171
    %p174 = scmp.ne.s32.totalorder %s159, %s173
    %p175 = scmp.eq.s32.totalorder %s23, 0
    %p176 = por %p174, %p175
    %s178 = sadd.s32 %s177, 1
    %p181 = scmp.eq.s32.totalorder %s17, 1
    %p182 = scmp.ne.s32.totalorder %s177, %s179
    %p183 = scmp.eq.s32.totalorder %s17, 0
    %p184 = por %p182, %p183
    %p185 = scmp.ne.s32.totalorder %s177, %s179
    %p186 = scmp.eq.s32.totalorder %s22, 1
    %p187 = por %p185, %p186
    %p188 = scmp.ne.s32.totalorder %s179, %s180
    %p189 = scmp.eq.s32.totalorder %s22, 0
    %p190 = por %p188, %p189
    %p191 = scmp.ne.s32.totalorder %s179, %s180
    %p192 = scmp.eq.s32.totalorder %s23, 1
    %p193 = por %p191, %p192
    %p195 = scmp.ne.s32.totalorder %s180, %s194
    %p196 = scmp.eq.s32.totalorder %s23, 0
    %p197 = por %p195, %p196
    %s199 = sadd.s32 %s198, 1
    %p202 = scmp.eq.s32.totalorder %s17, 1
    %p203 = scmp.ne.s32.totalorder %s198, %s200
    %p204 = scmp.eq.s32.totalorder %s17, 0
    %p205 = por %p203, %p204
    %p206 = scmp.ne.s32.totalorder %s198, %s200
    %p207 = scmp.eq.s32.totalorder %s22, 1
    %p208 = por %p206, %p207
    %p209 = scmp.ne.s32.totalorder %s200, %s201
    %p210 = scmp.eq.s32.totalorder %s22, 0
    %p211 = por %p209, %p210
    %p212 = scmp.ne.s32.totalorder %s200, %s201
    %p213 = scmp.eq.s32.totalorder %s23, 1
    %p214 = por %p212, %p213
    %p216 = scmp.ne.s32.totalorder %s201, %s215
    %p217 = scmp.eq.s32.totalorder %s23, 0
    %p218 = por %p216, %p217
    %s220 = sadd.s32 %s219, 1
    %p223 = scmp.eq.s32.totalorder %s17, 1
    %p224 = scmp.ne.s32.totalorder %s219, %s221
    %p225 = scmp.eq.s32.totalorder %s17, 0
    %p226 = por %p224, %p225
    %p227 = scmp.ne.s32.totalorder %s219, %s221
    %p228 = scmp.eq.s32.totalorder %s22, 1
    %p229 = por %p227, %p228
    %p230 = scmp.ne.s32.totalorder %s221, %s222
    %p231 = scmp.eq.s32.totalorder %s22, 0
    %p232 = por %p230, %p231
    %p233 = scmp.ne.s32.totalorder %s221, %s222
    %p234 = scmp.eq.s32.totalorder %s23, 1
    %p235 = por %p233, %p234
    %p237 = scmp.ne.s32.totalorder %s222, %s236
    %p238 = scmp.eq.s32.totalorder %s23, 0
    %p239 = por %p237, %p238
    %s241 = sadd.s32 %s240, 1
    %p244 = scmp.eq.s32.totalorder %s17, 1
    %p245 = scmp.ne.s32.totalorder %s240, %s242
    %p246 = scmp.eq.s32.totalorder %s17, 0
    %p247 = por %p245, %p246
    %p248 = scmp.ne.s32.totalorder %s240, %s242
    %p249 = scmp.eq.s32.totalorder %s22, 1
    %p250 = por %p248, %p249
    %p251 = scmp.ne.s32.totalorder %s242, %s243
    %p252 = scmp.eq.s32.totalorder %s22, 0
    %p253 = por %p251, %p252
    %p254 = scmp.ne.s32.totalorder %s242, %s243
    %p255 = scmp.eq.s32.totalorder %s23, 1
    %p256 = por %p254, %p255
    %p258 = scmp.ne.s32.totalorder %s243, %s257
    %p259 = scmp.eq.s32.totalorder %s23, 0
    %p260 = por %p258, %p259
    %s261 = ssub.s32 %s17, %s24
    %p262 = scmp.eq.s32.totalorder %s261, 0
    %s264 = sadd.s32 %s263, 1
    %s265 = scalar_select %p262, %s263, %s264
    %p268 = pneg %p262
    %p269 = scmp.eq.s32.totalorder %s17, 1
    %p270 = por %p268, %p269
    %p271 = scmp.ne.s32.totalorder %s263, %s266
    %p272 = scmp.eq.s32.totalorder %s17, 0
    %p273 = por %p271, %p272
    %p274 = scmp.ne.s32.totalorder %s263, %s266
    %p275 = scmp.eq.s32.totalorder %s22, 1
    %p276 = por %p274, %p275
    %p277 = scmp.ne.s32.totalorder %s266, %s267
    %p278 = scmp.eq.s32.totalorder %s22, 0
    %p279 = por %p277, %p278
    %p280 = scmp.ne.s32.totalorder %s266, %s267
    %p281 = scmp.eq.s32.totalorder %s23, 1
    %p282 = por %p280, %p281
    %p284 = scmp.ne.s32.totalorder %s267, %s283
    %p285 = scmp.eq.s32.totalorder %s23, 0
    %p286 = por %p284, %p285
    %p287 = scmp.le.s32.totalorder 1, %s17
    %p288 = scmp.lt.s32.totalorder %s17, 3
    %p289 = pnand %p287, %p288
    %p290 = pneg %p289
    // Predicated region
    $region9: #{bottleneck_forward.1} parent=5 // pred_check
      _
    $region10: #{bottleneck_forward.1} parent=5 // pred_check_branch
      %292 = sbr.rel (%p289) target = $region12
    $region11: #{bottleneck_forward.1} parent=5 // pred_region
      %s293 = ssub.s32 %s17, 1
      // Predicated region
      $region13: #{bottleneck_forward.1} parent=11 // pred_check
        %p294 = pneg %p64
      $region14: #{bottleneck_forward.1} parent=11 // pred_check_branch
        %296 = sbr.rel (%p294) target = $region16
      $region15: #{bottleneck_forward.1} parent=11 // pred_region
        _
      $region16: #{bottleneck_forward.1} parent=11 // pred_fallthru
        _
      // Predicated region
      $region17: #{bottleneck_forward.1} parent=11 // pred_check
        %p297 = pneg %p85
      $region18: #{bottleneck_forward.1} parent=11 // pred_check_branch
        %299 = sbr.rel (%p297) target = $region20
      $region19: #{bottleneck_forward.1} parent=11 // pred_region
        _
      $region20: #{bottleneck_forward.1} parent=11 // pred_fallthru
        _
      // Predicated region
      $region21: #{bottleneck_forward.1} parent=11 // pred_check
        %p300 = pneg %p106
      $region22: #{bottleneck_forward.1} parent=11 // pred_check_branch
        %302 = sbr.rel (%p300) target = $region24
      $region23: #{bottleneck_forward.1} parent=11 // pred_region
        _
      $region24: #{bottleneck_forward.1} parent=11 // pred_fallthru
        _
      // Predicated region
      $region25: #{bottleneck_forward.1} parent=11 // pred_check
        %p303 = pneg %p127
      $region26: #{bottleneck_forward.1} parent=11 // pred_check_branch
        %305 = sbr.rel (%p303) target = $region28
      $region27: #{bottleneck_forward.1} parent=11 // pred_region
        _
      $region28: #{bottleneck_forward.1} parent=11 // pred_fallthru
        _
      // Predicated region
      $region29: #{bottleneck_forward.1} parent=11 // pred_check
        %p306 = pneg %p148
      $region30: #{bottleneck_forward.1} parent=11 // pred_check_branch
        %308 = sbr.rel (%p306) target = $region32
      $region31: #{bottleneck_forward.1} parent=11 // pred_region
        _
      $region32: #{bottleneck_forward.1} parent=11 // pred_fallthru
        _
      // Predicated region
      $region33: #{bottleneck_forward.1} parent=11 // pred_check
        %p309 = pneg %p169
      $region34: #{bottleneck_forward.1} parent=11 // pred_check_branch
        %311 = sbr.rel (%p309) target = $region36
      $region35: #{bottleneck_forward.1} parent=11 // pred_region
        _
      $region36: #{bottleneck_forward.1} parent=11 // pred_fallthru
        _
      // Predicated region
      $region37: #{bottleneck_forward.1} parent=11 // pred_check
        %p312 = pneg %p190
      $region38: #{bottleneck_forward.1} parent=11 // pred_check_branch
        %314 = sbr.rel (%p312) target = $region40
      $region39: #{bottleneck_forward.1} parent=11 // pred_region
        _
      $region40: #{bottleneck_forward.1} parent=11 // pred_fallthru
        _
      // Predicated region
      $region41: #{bottleneck_forward.1} parent=11 // pred_check
        %p315 = pneg %p211
      $region42: #{bottleneck_forward.1} parent=11 // pred_check_branch
        %317 = sbr.rel (%p315) target = $region44
      $region43: #{bottleneck_forward.1} parent=11 // pred_region
        _
      $region44: #{bottleneck_forward.1} parent=11 // pred_fallthru
        _
      // Predicated region
      $region45: #{bottleneck_forward.1} parent=11 // pred_check
        %p318 = pneg %p232
      $region46: #{bottleneck_forward.1} parent=11 // pred_check_branch
        %320 = sbr.rel (%p318) target = $region48
      $region47: #{bottleneck_forward.1} parent=11 // pred_region
        _
      $region48: #{bottleneck_forward.1} parent=11 // pred_fallthru
        _
      // Predicated region
      $region49: #{bottleneck_forward.1} parent=11 // pred_check
        %p321 = pneg %p253
      $region50: #{bottleneck_forward.1} parent=11 // pred_check_branch
        %323 = sbr.rel (%p321) target = $region52
      $region51: #{bottleneck_forward.1} parent=11 // pred_region
        _
      $region52: #{bottleneck_forward.1} parent=11 // pred_fallthru
        _
    $region12: #{bottleneck_forward.1} parent=5 // pred_fallthru
      _
    %p324 = scmp.lt.s32.totalorder %s17, 2
    // Predicated region
    $region53: #{bottleneck_forward.1} parent=5 // pred_check
      %p325 = pneg %p324
    $region54: #{bottleneck_forward.1} parent=5 // pred_check_branch
      %327 = sbr.rel (%p325) target = $region56
    $region55: #{bottleneck_forward.1} parent=5 // pred_region
      // Predicated region
      $region57: #{bottleneck_forward.1} parent=55 // pred_check
        %p328 = pneg %p37
      $region58: #{bottleneck_forward.1} parent=55 // pred_check_branch
        %330 = sbr.rel (%p328) target = $region60
      $region59: #{bottleneck_forward.1} parent=55 // pred_region
        %p331 = scmp.lt.s32.totalorder %s17, 1
        %s332 = scalar_select %p331, %s17, 1
        %s333 = smul.addr %s332, 32
        %s334 = smul.addr %s333, 4
        %s335 = scalar_lea.vmem %s0, %s334
      $region60: #{bottleneck_forward.1} parent=55 // pred_fallthru
        _
    $region56: #{bottleneck_forward.1} parent=5 // pred_fallthru
      _
    %p336 = scmp.le.s32.totalorder 1, %s17
    %p337 = scmp.lt.s32.totalorder %s17, 3
    %p338 = pnand %p336, %p337
    %p339 = pneg %p338
    // Predicated region
    $region61: #{bottleneck_forward.1} parent=5 // pred_check
      _
    $region62: #{bottleneck_forward.1} parent=5 // pred_check_branch
      %341 = sbr.rel (%p338) target = $region64
    $region63: #{bottleneck_forward.1} parent=5 // pred_region
      %s342 = ssub.s32 %s17, 1
      %p343 = scmp.lt.s32.totalorder %s22, 1
      %s344 = scalar_select %p343, %s22, 1
      %s345 = smul.addr %s344, 32
      %s346 = smul.addr %s345, 4
      %s347 = scalar_lea.vmem %s0, %s346
      %p348 = pneg %p43
      %p349 = pneg %p40
      %p350 = pneg %p64
      %p351 = pneg %p61
      %p352 = pneg %p85
      %p353 = pneg %p82
      %p354 = pneg %p106
      %p355 = pneg %p103
      %p356 = pneg %p127
      %p357 = pneg %p124
      %p358 = pneg %p148
      %p359 = pneg %p145
      %p360 = pneg %p169
      %p361 = pneg %p166
      %p362 = pneg %p190
      %p363 = pneg %p187
      %p364 = pneg %p211
      %p365 = pneg %p208
      %p366 = pneg %p232
      %p367 = pneg %p229
      %p368 = pneg %p253
      %p369 = pneg %p250
      %p370 = pneg %p279
      %p371 = pneg %p276
      %p372 = scmp.lt.s32.totalorder %s22, 1
      %s373 = scalar_select %p372, %s22, 1
      %s374 = smul.addr %s373, 32
      %s375 = smul.addr %s374, 8
      %s376 = scalar_lea.vmem %s11, %s375
      %p377 = scmp.lt.s32.totalorder %s22, 1
      %s378 = scalar_select %p377, %s22, 1
      %s379 = smul.addr %s378, 32
      %s380 = smul.addr %s379, 4
      %s381 = scalar_lea.vmem %s0, %s380
      %p382 = scmp.lt.s32.totalorder %s22, 1
      %s383 = scalar_select %p382, %s22, 1
      %s384 = smul.addr %s383, 32
      %s385 = smul.addr %s384, 8
      %s386 = scalar_lea.vmem %s11, %s385
      %388 = vst [vmem:[#allocation2] sm:$0xf] 0
      %389 = vst [vmem:[#allocation2 + $0x4] sm:$0xf] 0
      %390 = vst [vmem:[#allocation2 + $0x8] sm:$0xf] 0
      %391 = vst [vmem:[#allocation2 + $0x8c] sm:$0xf] 0
      %392 = vst [vmem:[#allocation2 + $0x90] sm:$0xf] 0
      %393 = vst [vmem:[#allocation2 + $0x94] sm:$0xf] 0
      %v394 = vld [vmem:[%s381] sm:$0xf]
      %v395 = vld [vmem:[%s381 + $0x4] sm:$0xf]
      %v396 = vld [vmem:[%s381 + $0x8] sm:$0xf]
      %v397 = vld [vmem:[%s381 + $0xc] sm:$0xf]
      %v398 = vld [vmem:[%s381 + $0x10] sm:$0xf]
      %v399 = vld [vmem:[%s381 + $0x14] sm:$0xf]
      %v400 = vld [vmem:[%s381 + $0x18] sm:$0xf]
      %v401 = vld [vmem:[%s381 + $0x1c] sm:$0xf]
      %v402 = vld [vmem:[%s381 + $0x20] sm:$0xf]
      %v403 = vld [vmem:[%s381 + $0x24] sm:$0xf]
      %v404 = vld [vmem:[%s381 + $0x28] sm:$0xf]
      %v405 = vld [vmem:[%s381 + $0x2c] sm:$0xf]
      %v406 = vld [vmem:[%s381 + $0x30] sm:$0xf]
      %v407 = vld [vmem:[%s381 + $0x34] sm:$0xf]
      %v408 = vld [vmem:[%s381 + $0x38] sm:$0xf]
      %v409 = vld [vmem:[%s381 + $0x3c] sm:$0xf]
      %v410 = vld [vmem:[%s381 + $0x40] sm:$0xf]
      %v411 = vld [vmem:[%s381 + $0x44] sm:$0xf]
      %v412 = vld [vmem:[%s381 + $0x48] sm:$0xf]
      %v413 = vld [vmem:[%s381 + $0x4c] sm:$0xf]
      %v414 = vld [vmem:[%s381 + $0x50] sm:$0xf]
      %v415 = vld [vmem:[%s381 + $0x54] sm:$0xf]
      %v416 = vld [vmem:[%s381 + $0x58] sm:$0xf]
      %v417 = vld [vmem:[%s381 + $0x5c] sm:$0xf]
      %v418 = vld [vmem:[%s381 + $0x60] sm:$0xf]
      %v419 = vld [vmem:[%s381 + $0x64] sm:$0xf]
      %v420 = vld [vmem:[%s381 + $0x68] sm:$0xf]
      %v421 = vld [vmem:[%s381 + $0x6c] sm:$0xf]
      %v422 = vld [vmem:[%s381 + $0x70] sm:$0xf]
      %v423 = vld [vmem:[%s381 + $0x74] sm:$0xf]
      %v424 = vld [vmem:[%s381 + $0x78] sm:$0xf]
      %v425 = vld [vmem:[%s381 + $0x7c] sm:$0xf]
      %v426 = vld [vmem:[%s3] sm:$0xf]
      %v427 = vld [vmem:[%s3 + $0x4] sm:$0xf]
      %v428 = vld [vmem:[%s3 + $0x8] sm:$0xf]
      %v429 = vld [vmem:[%s3 + $0xc] sm:$0xf]
      %v430 = vld [vmem:[%s3 + $0x10] sm:$0xf]
      %v431 = vld [vmem:[%s3 + $0x14] sm:$0xf]
      %v432 = vld [vmem:[%s3 + $0x18] sm:$0xf]
      %v433 = vld [vmem:[%s3 + $0x1c] sm:$0xf]
      %v434 = vld [vmem:[%s3 + $0x20] sm:$0xf]
      %v435 = vld [vmem:[%s3 + $0x24] sm:$0xf]
      %v436 = vld [vmem:[%s3 + $0x28] sm:$0xf]
      %v437 = vld [vmem:[%s3 + $0x2c] sm:$0xf]
      %v438 = vld [vmem:[%s3 + $0x30] sm:$0xf]
      %v439 = vld [vmem:[%s3 + $0x34] sm:$0xf]
      %v440 = vld [vmem:[%s3 + $0x38] sm:$0xf]
      %v441 = vld [vmem:[%s3 + $0x3c] sm:$0xf]
      %v442 = vld [vmem:[%s4] sm:$0x1]
      %v444 = vlaneseq
      %v445 = vshrl.u32 %v444, 7
      %v446 = vsub.s32 0, %v445
      %v447 = vrot.slane %v442, %v446
      %v481 = vunpack.c.l.b16 %v394
      %v482 = vunpack.c.l.b16 %v395
      %v483 = vunpack.c.l.b16 %v396
      %v484 = vunpack.c.l.b16 %v397
      %v485 = vunpack.c.l.b16 %v398
      %v486 = vunpack.c.l.b16 %v399
      %v487 = vunpack.c.l.b16 %v400
      %v488 = vunpack.c.l.b16 %v401
      %v489 = vunpack.c.l.b16 %v402
      %v490 = vunpack.c.l.b16 %v403
      %v491 = vunpack.c.l.b16 %v404
      %v492 = vunpack.c.l.b16 %v405
      %v493 = vunpack.c.l.b16 %v406
      %v494 = vunpack.c.l.b16 %v407
      %v495 = vunpack.c.l.b16 %v408
      %v496 = vunpack.c.l.b16 %v409
      %v497 = vunpack.c.l.b16 %v410
      %v498 = vunpack.c.l.b16 %v411
      %v499 = vunpack.c.l.b16 %v412
      %v500 = vunpack.c.l.b16 %v413
      %v501 = vunpack.c.l.b16 %v414
      %v502 = vunpack.c.l.b16 %v415
      %v503 = vunpack.c.l.b16 %v416
      %v504 = vunpack.c.l.b16 %v417
      %v505 = vunpack.c.l.b16 %v418
      %v506 = vunpack.c.l.b16 %v419
      %v507 = vunpack.c.l.b16 %v420
      %v508 = vunpack.c.l.b16 %v421
      %v509 = vunpack.c.l.b16 %v422
      %v510 = vunpack.c.l.b16 %v423
      %v511 = vunpack.c.l.b16 %v424
      %v512 = vunpack.c.l.b16 %v425
      %v513 = vpack.c.b16 %v482, %v481
      %v514 = vpack.c.b16 %v484, %v483
      %v515 = vpack.c.b16 %v486, %v485
      %v516 = vpack.c.b16 %v488, %v487
      %v517 = vpack.c.b16 %v490, %v489
      %v518 = vpack.c.b16 %v492, %v491
      %v519 = vpack.c.b16 %v494, %v493
      %v520 = vpack.c.b16 %v496, %v495
      %v521 = vpack.c.b16 %v498, %v497
      %v522 = vpack.c.b16 %v500, %v499
      %v523 = vpack.c.b16 %v502, %v501
      %v524 = vpack.c.b16 %v504, %v503
      %v525 = vpack.c.b16 %v506, %v505
      %v526 = vpack.c.b16 %v508, %v507
      %v527 = vpack.c.b16 %v510, %v509
      %v528 = vpack.c.b16 %v512, %v511
      %v561 = vunpack.c.l.b16 %v426
      %v562 = vunpack.c.l.b16 %v427
      %v563 = vunpack.c.l.b16 %v428
      %v564 = vunpack.c.l.b16 %v429
      %v565 = vunpack.c.l.b16 %v430
      %v566 = vunpack.c.l.b16 %v431
      %v567 = vunpack.c.l.b16 %v432
      %v568 = vunpack.c.l.b16 %v433
      %v569 = vunpack.c.l.b16 %v434
      %v570 = vunpack.c.l.b16 %v435
      %v571 = vunpack.c.l.b16 %v436
      %v572 = vunpack.c.l.b16 %v437
      %v573 = vunpack.c.l.b16 %v438
      %v574 = vunpack.c.l.b16 %v439
      %v575 = vunpack.c.l.b16 %v440
      %v576 = vunpack.c.l.b16 %v441
      %v577 = vpack.c.b16 %v562, %v561
      %v578 = vpack.c.b16 %v564, %v563
      %v579 = vpack.c.b16 %v566, %v565
      %v580 = vpack.c.b16 %v568, %v567
      %v581 = vpack.c.b16 %v570, %v569
      %v582 = vpack.c.b16 %v572, %v571
      %v583 = vpack.c.b16 %v574, %v573
      %v584 = vpack.c.b16 %v576, %v575
      %593 = vmatprep.subr.bf16.mxu0 0
      %594 = vmatpush1.bf16.msra.mxu0 %v584
      %595 = vmatprep.subr.bf16.mxu0 0
      %596 = vmatpush1.bf16.msra.mxu0 %v583
      %597 = vmatprep.subr.bf16.mxu0 0
      %598 = vmatpush1.bf16.msra.mxu0 %v582
      %599 = vmatprep.subr.bf16.mxu0 0
      %600 = vmatpush1.bf16.msra.mxu0 %v581
      %601 = vmatprep.subr.bf16.mxu0 0
      %602 = vmatpush1.bf16.msra.mxu0 %v580
      %603 = vmatprep.subr.bf16.mxu0 0
      %604 = vmatpush1.bf16.msra.mxu0 %v579
      %605 = vmatprep.subr.bf16.mxu0 0
      %606 = vmatpush1.bf16.msra.mxu0 %v578
      %607 = vmatprep.subr.bf16.mxu0 0
      %608 = vmatpush1.bf16.msra.mxu0 %v577
      %609 = vmatprep.subr.bf16.mxu0 0
      %610 = vmatpush2.bf16.msra.mxu0 0
      %611 = vmatprep.subr.bf16.mxu0 0
      %612 = vmatpush2.bf16.msra.mxu0 0
      %613 = vmatprep.subr.bf16.mxu0 0
      %614 = vmatpush2.bf16.msra.mxu0 0
      %615 = vmatprep.subr.bf16.mxu0 0
      %616 = vmatpush2.bf16.msra.mxu0 0
      %617 = vmatprep.subr.bf16.mxu0 0
      %618 = vmatpush2.bf16.msra.mxu0 0
      %619 = vmatprep.subr.bf16.mxu0 0
      %620 = vmatpush2.bf16.msra.mxu0 0
      %621 = vmatprep.subr.bf16.mxu0 0
      %622 = vmatpush2.bf16.msra.mxu0 0
      %623 = vmatprep.subr.bf16.mxu0 0
      %624 = vmatpush2.bf16.msra.mxu0 0
      %625 = vmatprep.mubr.bf16.mxu0 0
      %626 = vmatmul.mubr.bf16.gmra.mxu0 %v513
      %v627 = vpop.f32.mrf.mxu0
      %v628 = vadd.f32 %v447, %v627
      %v629 = vpop.f32.mrf.mxu0
      %v630 = vpop.f32.mrf.mxu0
      %v631 = vadd.f32 %v447, %v630
      %v632 = vpop.f32.mrf.mxu0
      %633 = vmatprep.mubr.bf16.mxu0 0
      %634 = vmatmul.mubr.bf16.gmra.mxu0 %v514
      %v635 = vpop.f32.mrf.mxu0
      %v636 = vadd.f32 %v447, %v635
      %v637 = vpop.f32.mrf.mxu0
      %v638 = vpop.f32.mrf.mxu0
      %v639 = vadd.f32 %v447, %v638
      %v640 = vpop.f32.mrf.mxu0
      %641 = vmatprep.mubr.bf16.mxu0 0
      %642 = vmatmul.mubr.bf16.gmra.mxu0 %v515
      %v643 = vpop.f32.mrf.mxu0
      %v644 = vadd.f32 %v447, %v643
      %v645 = vpop.f32.mrf.mxu0
      %v646 = vpop.f32.mrf.mxu0
      %v647 = vadd.f32 %v447, %v646
      %v648 = vpop.f32.mrf.mxu0
      %649 = vmatprep.mubr.bf16.mxu0 0
      %650 = vmatmul.mubr.bf16.gmra.mxu0 %v516
      %v651 = vpop.f32.mrf.mxu0
      %v652 = vadd.f32 %v447, %v651
      %v653 = vpop.f32.mrf.mxu0
      %v654 = vpop.f32.mrf.mxu0
      %v655 = vadd.f32 %v447, %v654
      %v656 = vpop.f32.mrf.mxu0
      %657 = vmatprep.mubr.bf16.mxu0 0
      %658 = vmatmul.mubr.bf16.gmra.mxu0 %v517
      %v659 = vpop.f32.mrf.mxu0
      %v660 = vadd.f32 %v447, %v659
      %v661 = vpop.f32.mrf.mxu0
      %v662 = vpop.f32.mrf.mxu0
      %v663 = vadd.f32 %v447, %v662
      %v664 = vpop.f32.mrf.mxu0
      %665 = vmatprep.mubr.bf16.mxu0 0
      %666 = vmatmul.mubr.bf16.gmra.mxu0 %v518
      %v667 = vpop.f32.mrf.mxu0
      %v668 = vadd.f32 %v447, %v667
      %v669 = vpop.f32.mrf.mxu0
      %v670 = vpop.f32.mrf.mxu0
      %v671 = vadd.f32 %v447, %v670
      %v672 = vpop.f32.mrf.mxu0
      %673 = vmatprep.mubr.bf16.mxu0 0
      %674 = vmatmul.mubr.bf16.gmra.mxu0 %v519
      %v675 = vpop.f32.mrf.mxu0
      %v676 = vadd.f32 %v447, %v675
      %v677 = vpop.f32.mrf.mxu0
      %v678 = vpop.f32.mrf.mxu0
      %v679 = vadd.f32 %v447, %v678
      %v680 = vpop.f32.mrf.mxu0
      %681 = vmatprep.mubr.bf16.mxu0 0
      %682 = vmatmul.mubr.bf16.gmra.mxu0 %v520
      %v683 = vpop.f32.mrf.mxu0
      %v684 = vadd.f32 %v447, %v683
      %v685 = vpop.f32.mrf.mxu0
      %v686 = vpop.f32.mrf.mxu0
      %v687 = vadd.f32 %v447, %v686
      %v688 = vpop.f32.mrf.mxu0
      %689 = vmatprep.mubr.bf16.mxu0 0
      %690 = vmatmul.mubr.bf16.gmra.mxu0 %v521
      %v691 = vpop.f32.mrf.mxu0
      %v692 = vadd.f32 %v447, %v691
      %v693 = vpop.f32.mrf.mxu0
      %v694 = vpop.f32.mrf.mxu0
      %v695 = vadd.f32 %v447, %v694
      %v696 = vpop.f32.mrf.mxu0
      %697 = vmatprep.mubr.bf16.mxu0 0
      %698 = vmatmul.mubr.bf16.gmra.mxu0 %v522
      %v699 = vpop.f32.mrf.mxu0
      %v700 = vadd.f32 %v447, %v699
      %v701 = vpop.f32.mrf.mxu0
      %v702 = vpop.f32.mrf.mxu0
      %v703 = vadd.f32 %v447, %v702
      %v704 = vpop.f32.mrf.mxu0
      %705 = vmatprep.mubr.bf16.mxu0 0
      %706 = vmatmul.mubr.bf16.gmra.mxu0 %v523
      %v707 = vpop.f32.mrf.mxu0
      %v708 = vadd.f32 %v447, %v707
      %v709 = vpop.f32.mrf.mxu0
      %v710 = vpop.f32.mrf.mxu0
      %v711 = vadd.f32 %v447, %v710
      %v712 = vpop.f32.mrf.mxu0
      %713 = vmatprep.mubr.bf16.mxu0 0
      %714 = vmatmul.mubr.bf16.gmra.mxu0 %v524
      %v715 = vpop.f32.mrf.mxu0
      %v716 = vadd.f32 %v447, %v715
      %v717 = vpop.f32.mrf.mxu0
      %v718 = vpop.f32.mrf.mxu0
      %v719 = vadd.f32 %v447, %v718
      %v720 = vpop.f32.mrf.mxu0
      %721 = vmatprep.mubr.bf16.mxu0 0
      %722 = vmatmul.mubr.bf16.gmra.mxu0 %v525
      %v723 = vpop.f32.mrf.mxu0
      %v724 = vadd.f32 %v447, %v723
      %v725 = vpop.f32.mrf.mxu0
      %v726 = vpop.f32.mrf.mxu0
      %v727 = vadd.f32 %v447, %v726
      %v728 = vpop.f32.mrf.mxu0
      %729 = vmatprep.mubr.bf16.mxu0 0
      %730 = vmatmul.mubr.bf16.gmra.mxu0 %v526
      %v731 = vpop.f32.mrf.mxu0
      %v732 = vadd.f32 %v447, %v731
      %v733 = vpop.f32.mrf.mxu0
      %v734 = vpop.f32.mrf.mxu0
      %v735 = vadd.f32 %v447, %v734
      %v736 = vpop.f32.mrf.mxu0
      %737 = vmatprep.mubr.bf16.mxu0 0
      %738 = vmatmul.mubr.bf16.gmra.mxu0 %v527
      %v739 = vpop.f32.mrf.mxu0
      %v740 = vadd.f32 %v447, %v739
      %v741 = vpop.f32.mrf.mxu0
      %v742 = vpop.f32.mrf.mxu0
      %v743 = vadd.f32 %v447, %v742
      %v744 = vpop.f32.mrf.mxu0
      %745 = vmatprep.mubr.bf16.mxu0 0
      %746 = vmatmul.mubr.bf16.gmra.mxu0 %v528
      %v747 = vpop.f32.mrf.mxu0
      %v748 = vadd.f32 %v447, %v747
      %v749 = vpop.f32.mrf.mxu0
      %v750 = vpop.f32.mrf.mxu0
      %v751 = vadd.f32 %v447, %v750
      %v752 = vpop.f32.mrf.mxu0
      %753 = vdwg.mxu0
      %v754 = vmax.f32 %v628, 0.0
      %v755 = vmax.f32 %v631, 0.0
      %v756 = vmax.f32 %v636, 0.0
      %v757 = vmax.f32 %v639, 0.0
      %v758 = vmax.f32 %v644, 0.0
      %v759 = vmax.f32 %v647, 0.0
      %v760 = vmax.f32 %v652, 0.0
      %v761 = vmax.f32 %v655, 0.0
      %v762 = vmax.f32 %v660, 0.0
      %v763 = vmax.f32 %v663, 0.0
      %v764 = vmax.f32 %v668, 0.0
      %v765 = vmax.f32 %v671, 0.0
      %v766 = vmax.f32 %v676, 0.0
      %v767 = vmax.f32 %v679, 0.0
      %v768 = vmax.f32 %v684, 0.0
      %v769 = vmax.f32 %v687, 0.0
      %v770 = vmax.f32 %v692, 0.0
      %v771 = vmax.f32 %v695, 0.0
      %v772 = vmax.f32 %v700, 0.0
      %v773 = vmax.f32 %v703, 0.0
      %v774 = vmax.f32 %v708, 0.0
      %v775 = vmax.f32 %v711, 0.0
      %v776 = vmax.f32 %v716, 0.0
      %v777 = vmax.f32 %v719, 0.0
      %v778 = vmax.f32 %v724, 0.0
      %v779 = vmax.f32 %v727, 0.0
      %v780 = vmax.f32 %v732, 0.0
      %v781 = vmax.f32 %v735, 0.0
      %v782 = vmax.f32 %v740, 0.0
      %v783 = vmax.f32 %v743, 0.0
      %v784 = vmax.f32 %v748, 0.0
      %v785 = vmax.f32 %v751, 0.0
      %v786 = vpack.c.bf16 %v755, %v754
      %v787 = vpack.c.bf16 %v757, %v756
      %v788 = vpack.c.bf16 %v759, %v758
      %v789 = vpack.c.bf16 %v761, %v760
      %v790 = vpack.c.bf16 %v763, %v762
      %v791 = vpack.c.bf16 %v765, %v764
      %v792 = vpack.c.bf16 %v767, %v766
      %v793 = vpack.c.bf16 %v769, %v768
      %v794 = vpack.c.bf16 %v771, %v770
      %v795 = vpack.c.bf16 %v773, %v772
      %v796 = vpack.c.bf16 %v775, %v774
      %v797 = vpack.c.bf16 %v777, %v776
      %v798 = vpack.c.bf16 %v779, %v778
      %v799 = vpack.c.bf16 %v781, %v780
      %v800 = vpack.c.bf16 %v783, %v782
      %v801 = vpack.c.bf16 %v785, %v784
      %v818 = vunpack.c.l.b16 %v786
      %v819 = vunpack.c.h.b16 %v786
      %v820 = vunpack.c.l.b16 %v787
      %v821 = vunpack.c.h.b16 %v787
      %v822 = vunpack.c.l.b16 %v788
      %v823 = vunpack.c.h.b16 %v788
      %v824 = vunpack.c.l.b16 %v789
      %v825 = vunpack.c.h.b16 %v789
      %v826 = vunpack.c.l.b16 %v790
      %v827 = vunpack.c.h.b16 %v790
      %v828 = vunpack.c.l.b16 %v791
      %v829 = vunpack.c.h.b16 %v791
      %v830 = vunpack.c.l.b16 %v792
      %v831 = vunpack.c.h.b16 %v792
      %v832 = vunpack.c.l.b16 %v793
      %v833 = vunpack.c.h.b16 %v793
      %v834 = vunpack.c.l.b16 %v794
      %v835 = vunpack.c.h.b16 %v794
      %v836 = vunpack.c.l.b16 %v795
      %v837 = vunpack.c.h.b16 %v795
      %v838 = vunpack.c.l.b16 %v796
      %v839 = vunpack.c.h.b16 %v796
      %v840 = vunpack.c.l.b16 %v797
      %v841 = vunpack.c.h.b16 %v797
      %v842 = vunpack.c.l.b16 %v798
      %v843 = vunpack.c.h.b16 %v798
      %v844 = vunpack.c.l.b16 %v799
      %v845 = vunpack.c.h.b16 %v799
      %v846 = vunpack.c.l.b16 %v800
      %v847 = vunpack.c.h.b16 %v800
      %v848 = vunpack.c.l.b16 %v801
      %v849 = vunpack.c.h.b16 %v801
      %v850 = vpack.c.b16 %v818, %v818
      %v851 = vpack.c.b16 %v819, %v819
      %v852 = vpack.c.b16 %v820, %v820
      %v853 = vpack.c.b16 %v821, %v821
      %v854 = vpack.c.b16 %v822, %v822
      %v855 = vpack.c.b16 %v823, %v823
      %v856 = vpack.c.b16 %v824, %v824
      %v857 = vpack.c.b16 %v825, %v825
      %v858 = vpack.c.b16 %v826, %v826
      %v859 = vpack.c.b16 %v827, %v827
      %v860 = vpack.c.b16 %v828, %v828
      %v861 = vpack.c.b16 %v829, %v829
      %v862 = vpack.c.b16 %v830, %v830
      %v863 = vpack.c.b16 %v831, %v831
      %v864 = vpack.c.b16 %v832, %v832
      %v865 = vpack.c.b16 %v833, %v833
      %v866 = vpack.c.b16 %v834, %v834
      %v867 = vpack.c.b16 %v835, %v835
      %v868 = vpack.c.b16 %v836, %v836
      %v869 = vpack.c.b16 %v837, %v837
      %v870 = vpack.c.b16 %v838, %v838
      %v871 = vpack.c.b16 %v839, %v839
      %v872 = vpack.c.b16 %v840, %v840
      %v873 = vpack.c.b16 %v841, %v841
      %v874 = vpack.c.b16 %v842, %v842
      %v875 = vpack.c.b16 %v843, %v843
      %v876 = vpack.c.b16 %v844, %v844
      %v877 = vpack.c.b16 %v845, %v845
      %v878 = vpack.c.b16 %v846, %v846
      %v879 = vpack.c.b16 %v847, %v847
      %v880 = vpack.c.b16 %v848, %v848
      %v881 = vpack.c.b16 %v849, %v849
      %914 = vst [vmem:[#allocation2 + $0xc] sm:$0xf] %v850
      %915 = vst [vmem:[#allocation2 + $0x10] sm:$0xf] %v851
      %916 = vst [vmem:[#allocation2 + $0x14] sm:$0xf] %v852
      %917 = vst [vmem:[#allocation2 + $0x18] sm:$0xf] %v853
      %918 = vst [vmem:[#allocation2 + $0x1c] sm:$0xf] %v854
      %919 = vst [vmem:[#allocation2 + $0x20] sm:$0xf] %v855
      %920 = vst [vmem:[#allocation2 + $0x24] sm:$0xf] %v856
      %921 = vst [vmem:[#allocation2 + $0x28] sm:$0xf] %v857
      %922 = vst [vmem:[#allocation2 + $0x2c] sm:$0xf] %v858
      %923 = vst [vmem:[#allocation2 + $0x30] sm:$0xf] %v859
      %924 = vst [vmem:[#allocation2 + $0x34] sm:$0xf] %v860
      %925 = vst [vmem:[#allocation2 + $0x38] sm:$0xf] %v861
      %926 = vst [vmem:[#allocation2 + $0x3c] sm:$0xf] %v862
      %927 = vst [vmem:[#allocation2 + $0x40] sm:$0xf] %v863
      %928 = vst [vmem:[#allocation2 + $0x44] sm:$0xf] %v864
      %929 = vst [vmem:[#allocation2 + $0x48] sm:$0xf] %v865
      %930 = vst [vmem:[#allocation2 + $0x4c] sm:$0xf] %v866
      %931 = vst [vmem:[#allocation2 + $0x50] sm:$0xf] %v867
      %932 = vst [vmem:[#allocation2 + $0x54] sm:$0xf] %v868
      %933 = vst [vmem:[#allocation2 + $0x58] sm:$0xf] %v869
      %934 = vst [vmem:[#allocation2 + $0x5c] sm:$0xf] %v870
      %935 = vst [vmem:[#allocation2 + $0x60] sm:$0xf] %v871
      %936 = vst [vmem:[#allocation2 + $0x64] sm:$0xf] %v872
      %937 = vst [vmem:[#allocation2 + $0x68] sm:$0xf] %v873
      %938 = vst [vmem:[#allocation2 + $0x6c] sm:$0xf] %v874
      %939 = vst [vmem:[#allocation2 + $0x70] sm:$0xf] %v875
      %940 = vst [vmem:[#allocation2 + $0x74] sm:$0xf] %v876
      %941 = vst [vmem:[#allocation2 + $0x78] sm:$0xf] %v877
      %942 = vst [vmem:[#allocation2 + $0x7c] sm:$0xf] %v878
      %943 = vst [vmem:[#allocation2 + $0x80] sm:$0xf] %v879
      %944 = vst [vmem:[#allocation2 + $0x84] sm:$0xf] %v880
      %945 = vst [vmem:[#allocation2 + $0x88] sm:$0xf] %v881
      %v946 = vld [vmem:[%s1] sm:$0xf]
      %v947 = vld [vmem:[%s1 + $0x4] sm:$0xf]
      %v948 = vld [vmem:[%s1 + $0x8] sm:$0xf]
      %v949 = vld [vmem:[%s1 + $0xc] sm:$0xf]
      %v950 = vld [vmem:[%s1 + $0x10] sm:$0xf]
      %v951 = vld [vmem:[%s1 + $0x14] sm:$0xf]
      %v952 = vld [vmem:[%s1 + $0x18] sm:$0xf]
      %v953 = vld [vmem:[%s1 + $0x1c] sm:$0xf]
      %v954 = vld [vmem:[%s1 + $0x20] sm:$0xf]
      %v955 = vld [vmem:[%s1 + $0x24] sm:$0xf]
      %v956 = vld [vmem:[%s1 + $0x28] sm:$0xf]
      %v957 = vld [vmem:[%s1 + $0x2c] sm:$0xf]
      %v958 = vld [vmem:[%s1 + $0x30] sm:$0xf]
      %v959 = vld [vmem:[%s1 + $0x34] sm:$0xf]
      %v960 = vld [vmem:[%s1 + $0x38] sm:$0xf]
      %v961 = vld [vmem:[%s1 + $0x3c] sm:$0xf]
      %v962 = vld [vmem:[%s1 + $0x40] sm:$0xf]
      %v963 = vld [vmem:[%s1 + $0x44] sm:$0xf]
      %v964 = vld [vmem:[%s1 + $0x48] sm:$0xf]
      %v965 = vld [vmem:[%s1 + $0x4c] sm:$0xf]
      %v966 = vld [vmem:[%s1 + $0x50] sm:$0xf]
      %v967 = vld [vmem:[%s1 + $0x54] sm:$0xf]
      %v968 = vld [vmem:[%s1 + $0x58] sm:$0xf]
      %v969 = vld [vmem:[%s1 + $0x5c] sm:$0xf]
      %v970 = vld [vmem:[%s1 + $0x60] sm:$0xf]
      %v971 = vld [vmem:[%s1 + $0x64] sm:$0xf]
      %v972 = vld [vmem:[%s1 + $0x68] sm:$0xf]
      %v973 = vld [vmem:[%s1 + $0x6c] sm:$0xf]
      %v974 = vld [vmem:[%s1 + $0x70] sm:$0xf]
      %v975 = vld [vmem:[%s1 + $0x74] sm:$0xf]
      %v976 = vld [vmem:[%s1 + $0x78] sm:$0xf]
      %v977 = vld [vmem:[%s1 + $0x7c] sm:$0xf]
      %v978 = vld [vmem:[%s2] sm:$0xf]
      %v979 = vld [vmem:[%s2 + $0x4] sm:$0xf]
      %v980 = vld [vmem:[%s2 + $0x8] sm:$0xf]
      %v981 = vld [vmem:[%s2 + $0xc] sm:$0xf]
      %v982 = vld [vmem:[%s2 + $0x10] sm:$0xf]
      %v983 = vld [vmem:[%s2 + $0x14] sm:$0xf]
      %v984 = vld [vmem:[%s2 + $0x18] sm:$0xf]
      %v985 = vld [vmem:[%s2 + $0x1c] sm:$0xf]
      %v986 = vld [vmem:[%s2 + $0x20] sm:$0xf]
      %v987 = vld [vmem:[%s2 + $0x24] sm:$0xf]
      %v988 = vld [vmem:[%s2 + $0x28] sm:$0xf]
      %v989 = vld [vmem:[%s2 + $0x2c] sm:$0xf]
      %v990 = vld [vmem:[%s2 + $0x30] sm:$0xf]
      %v991 = vld [vmem:[%s2 + $0x34] sm:$0xf]
      %v992 = vld [vmem:[%s2 + $0x38] sm:$0xf]
      %v993 = vld [vmem:[%s2 + $0x3c] sm:$0xf]
      %v994 = vld [vmem:[%s2 + $0x40] sm:$0xf]
      %v995 = vld [vmem:[%s2 + $0x44] sm:$0xf]
      %v996 = vld [vmem:[%s2 + $0x48] sm:$0xf]
      %v997 = vld [vmem:[%s2 + $0x4c] sm:$0xf]
      %v998 = vld [vmem:[%s2 + $0x50] sm:$0xf]
      %v999 = vld [vmem:[%s2 + $0x54] sm:$0xf]
      %v1000 = vld [vmem:[%s2 + $0x58] sm:$0xf]
      %v1001 = vld [vmem:[%s2 + $0x5c] sm:$0xf]
      %v1002 = vld [vmem:[%s2 + $0x60] sm:$0xf]
      %v1003 = vld [vmem:[%s2 + $0x64] sm:$0xf]
      %v1004 = vld [vmem:[%s2 + $0x68] sm:$0xf]
      %v1005 = vld [vmem:[%s2 + $0x6c] sm:$0xf]
      %v1006 = vld [vmem:[%s2 + $0x70] sm:$0xf]
      %v1007 = vld [vmem:[%s2 + $0x74] sm:$0xf]
      %v1008 = vld [vmem:[%s2 + $0x78] sm:$0xf]
      %v1009 = vld [vmem:[%s2 + $0x7c] sm:$0xf]
      %v1010 = vld [vmem:[#allocation2] sm:$0x8]
      %v1011 = vld [vmem:[#allocation2 + $0x4] sm:$0xf]
      %v1012 = vld [vmem:[#allocation2 + $0x8] sm:$0xf]
      %v1013 = vld [vmem:[#allocation2 + $0xc] sm:$0xf]
      %v1014 = vld [vmem:[#allocation2 + $0x10] sm:$0xf]
      %v1015 = vld [vmem:[#allocation2 + $0x14] sm:$0xf]
      %v1016 = vld [vmem:[#allocation2 + $0x18] sm:$0xf]
      %v1017 = vld [vmem:[#allocation2 + $0x1c] sm:$0xf]
      %v1018 = vld [vmem:[#allocation2 + $0x20] sm:$0xf]
      %v1019 = vld [vmem:[#allocation2 + $0x24] sm:$0xf]
      %v1020 = vld [vmem:[#allocation2 + $0x28] sm:$0xf]
      %v1021 = vld [vmem:[#allocation2 + $0x2c] sm:$0xf]
      %v1022 = vld [vmem:[#allocation2 + $0x30] sm:$0xf]
      %v1023 = vld [vmem:[#allocation2 + $0x34] sm:$0xf]
      %v1024 = vld [vmem:[#allocation2 + $0x38] sm:$0xf]
      %v1025 = vld [vmem:[#allocation2 + $0x3c] sm:$0xf]
      %v1026 = vld [vmem:[#allocation2 + $0x40] sm:$0xf]
      %v1027 = vld [vmem:[#allocation2 + $0x44] sm:$0xf]
      %v1028 = vld [vmem:[#allocation2 + $0x48] sm:$0xf]
      %v1029 = vld [vmem:[#allocation2 + $0x4c] sm:$0xf]
      %v1030 = vld [vmem:[#allocation2 + $0x50] sm:$0xf]
      %v1031 = vld [vmem:[#allocation2 + $0x54] sm:$0xf]
      %v1032 = vld [vmem:[#allocation2 + $0x58] sm:$0xf]
      %v1033 = vld [vmem:[#allocation2 + $0x5c] sm:$0xf]
      %v1034 = vld [vmem:[#allocation2 + $0x60] sm:$0xf]
      %v1035 = vld [vmem:[#allocation2 + $0x64] sm:$0xf]
      %v1036 = vld [vmem:[#allocation2 + $0x68] sm:$0xf]
      %v1037 = vld [vmem:[#allocation2 + $0x6c] sm:$0xf]
      %v1038 = vld [vmem:[#allocation2 + $0x70] sm:$0xf]
      %v1039 = vld [vmem:[#allocation2 + $0x74] sm:$0xf]
      %v1040 = vld [vmem:[#allocation2 + $0x78] sm:$0xf]
      %v1041 = vld [vmem:[#allocation2 + $0x7c] sm:$0xf]
      %v1042 = vld [vmem:[#allocation2 + $0x80] sm:$0xf]
      %1044 = vset.pattern.permute.xlu0 0
      %1045 = vperm.xlu0 %1044, %v946
      %v1046 = vpop.permute.xlu0 %1045
      %v1049 = vunpack.c.l.s4 839922192
      %v1050 = vunpack.c.0.s8 %v1049
      %v1051 = vlaneseq
      %v1052 = vshrl.u32 %v1051, 7
      %v1053 = vsub.s32 %v1050, %v1052
      %v1054 = vrot.slane %v1046, %v1053
      %1056 = vset.pattern.permute.xlu0 0
      %1057 = vperm.xlu0 %1056, %v947
      %v1058 = vpop.permute.xlu0 %1057
      %v1061 = vunpack.c.l.s4 839922192
      %v1062 = vunpack.c.0.s8 %v1061
      %v1063 = vlaneseq
      %v1064 = vshrl.u32 %v1063, 7
      %v1065 = vsub.s32 %v1062, %v1064
      %v1066 = vrot.slane %v1058, %v1065
      %1068 = vset.pattern.permute.xlu0 0
      %1069 = vperm.xlu0 %1068, %v948
      %v1070 = vpop.permute.xlu0 %1069
      %v1073 = vunpack.c.l.s4 839922192
      %v1074 = vunpack.c.0.s8 %v1073
      %v1075 = vlaneseq
      %v1076 = vshrl.u32 %v1075, 7
      %v1077 = vsub.s32 %v1074, %v1076
      %v1078 = vrot.slane %v1070, %v1077
      %1080 = vset.pattern.permute.xlu0 0
      %1081 = vperm.xlu0 %1080, %v949
      %v1082 = vpop.permute.xlu0 %1081
      %v1085 = vunpack.c.l.s4 839922192
      %v1086 = vunpack.c.0.s8 %v1085
      %v1087 = vlaneseq
      %v1088 = vshrl.u32 %v1087, 7
      %v1089 = vsub.s32 %v1086, %v1088
      %v1090 = vrot.slane %v1082, %v1089
      %1092 = vset.pattern.permute.xlu0 0
      %1093 = vperm.xlu0 %1092, %v950
      %v1094 = vpop.permute.xlu0 %1093
      %v1097 = vunpack.c.l.s4 839922192
      %v1098 = vunpack.c.0.s8 %v1097
      %v1099 = vlaneseq
      %v1100 = vshrl.u32 %v1099, 7
      %v1101 = vsub.s32 %v1098, %v1100
      %v1102 = vrot.slane %v1094, %v1101
      %1104 = vset.pattern.permute.xlu0 0
      %1105 = vperm.xlu0 %1104, %v951
      %v1106 = vpop.permute.xlu0 %1105
      %v1109 = vunpack.c.l.s4 839922192
      %v1110 = vunpack.c.0.s8 %v1109
      %v1111 = vlaneseq
      %v1112 = vshrl.u32 %v1111, 7
      %v1113 = vsub.s32 %v1110, %v1112
      %v1114 = vrot.slane %v1106, %v1113
      %1116 = vset.pattern.permute.xlu0 0
      %1117 = vperm.xlu0 %1116, %v952
      %v1118 = vpop.permute.xlu0 %1117
      %v1121 = vunpack.c.l.s4 839922192
      %v1122 = vunpack.c.0.s8 %v1121
      %v1123 = vlaneseq
      %v1124 = vshrl.u32 %v1123, 7
      %v1125 = vsub.s32 %v1122, %v1124
      %v1126 = vrot.slane %v1118, %v1125
      %1128 = vset.pattern.permute.xlu0 0
      %1129 = vperm.xlu0 %1128, %v953
      %v1130 = vpop.permute.xlu0 %1129
      %v1133 = vunpack.c.l.s4 839922192
      %v1134 = vunpack.c.0.s8 %v1133
      %v1135 = vlaneseq
      %v1136 = vshrl.u32 %v1135, 7
      %v1137 = vsub.s32 %v1134, %v1136
      %v1138 = vrot.slane %v1130, %v1137
      %1140 = vset.pattern.permute.xlu0 0
      %1141 = vperm.xlu0 %1140, %v954
      %v1142 = vpop.permute.xlu0 %1141
      %v1145 = vunpack.c.l.s4 839922192
      %v1146 = vunpack.c.0.s8 %v1145
      %v1147 = vlaneseq
      %v1148 = vshrl.u32 %v1147, 7
      %v1149 = vsub.s32 %v1146, %v1148
      %v1150 = vrot.slane %v1142, %v1149
      %1152 = vset.pattern.permute.xlu0 0
      %1153 = vperm.xlu0 %1152, %v955
      %v1154 = vpop.permute.xlu0 %1153
      %v1157 = vunpack.c.l.s4 839922192
      %v1158 = vunpack.c.0.s8 %v1157
      %v1159 = vlaneseq
      %v1160 = vshrl.u32 %v1159, 7
      %v1161 = vsub.s32 %v1158, %v1160
      %v1162 = vrot.slane %v1154, %v1161
      %1164 = vset.pattern.permute.xlu0 0
      %1165 = vperm.xlu0 %1164, %v956
      %v1166 = vpop.permute.xlu0 %1165
      %v1169 = vunpack.c.l.s4 839922192
      %v1170 = vunpack.c.0.s8 %v1169
      %v1171 = vlaneseq
      %v1172 = vshrl.u32 %v1171, 7
      %v1173 = vsub.s32 %v1170, %v1172
      %v1174 = vrot.slane %v1166, %v1173
      %1176 = vset.pattern.permute.xlu0 0
      %1177 = vperm.xlu0 %1176, %v957
      %v1178 = vpop.permute.xlu0 %1177
      %v1181 = vunpack.c.l.s4 839922192
      %v1182 = vunpack.c.0.s8 %v1181
      %v1183 = vlaneseq
      %v1184 = vshrl.u32 %v1183, 7
      %v1185 = vsub.s32 %v1182, %v1184
      %v1186 = vrot.slane %v1178, %v1185
      %1188 = vset.pattern.permute.xlu0 0
      %1189 = vperm.xlu0 %1188, %v958
      %v1190 = vpop.permute.xlu0 %1189
      %v1193 = vunpack.c.l.s4 839922192
      %v1194 = vunpack.c.0.s8 %v1193
      %v1195 = vlaneseq
      %v1196 = vshrl.u32 %v1195, 7
      %v1197 = vsub.s32 %v1194, %v1196
      %v1198 = vrot.slane %v1190, %v1197
      %1200 = vset.pattern.permute.xlu0 0
      %1201 = vperm.xlu0 %1200, %v959
      %v1202 = vpop.permute.xlu0 %1201
      %v1205 = vunpack.c.l.s4 839922192
      %v1206 = vunpack.c.0.s8 %v1205
      %v1207 = vlaneseq
      %v1208 = vshrl.u32 %v1207, 7
      %v1209 = vsub.s32 %v1206, %v1208
      %v1210 = vrot.slane %v1202, %v1209
      %1212 = vset.pattern.permute.xlu0 0
      %1213 = vperm.xlu0 %1212, %v960
      %v1214 = vpop.permute.xlu0 %1213
      %v1217 = vunpack.c.l.s4 839922192
      %v1218 = vunpack.c.0.s8 %v1217
      %v1219 = vlaneseq
      %v1220 = vshrl.u32 %v1219, 7
      %v1221 = vsub.s32 %v1218, %v1220
      %v1222 = vrot.slane %v1214, %v1221
      %1224 = vset.pattern.permute.xlu0 0
      %1225 = vperm.xlu0 %1224, %v961
      %v1226 = vpop.permute.xlu0 %1225
      %v1229 = vunpack.c.l.s4 839922192
      %v1230 = vunpack.c.0.s8 %v1229
      %v1231 = vlaneseq
      %v1232 = vshrl.u32 %v1231, 7
      %v1233 = vsub.s32 %v1230, %v1232
      %v1234 = vrot.slane %v1226, %v1233
      %1236 = vset.pattern.permute.xlu0 0
      %1237 = vperm.xlu0 %1236, %v962
      %v1238 = vpop.permute.xlu0 %1237
      %v1241 = vunpack.c.l.s4 839922192
      %v1242 = vunpack.c.0.s8 %v1241
      %v1243 = vlaneseq
      %v1244 = vshrl.u32 %v1243, 7
      %v1245 = vsub.s32 %v1242, %v1244
      %v1246 = vrot.slane %v1238, %v1245
      %1248 = vset.pattern.permute.xlu0 0
      %1249 = vperm.xlu0 %1248, %v963
      %v1250 = vpop.permute.xlu0 %1249
      %v1253 = vunpack.c.l.s4 839922192
      %v1254 = vunpack.c.0.s8 %v1253
      %v1255 = vlaneseq
      %v1256 = vshrl.u32 %v1255, 7
      %v1257 = vsub.s32 %v1254, %v1256
      %v1258 = vrot.slane %v1250, %v1257
      %1260 = vset.pattern.permute.xlu0 0
      %1261 = vperm.xlu0 %1260, %v964
      %v1262 = vpop.permute.xlu0 %1261
      %v1265 = vunpack.c.l.s4 839922192
      %v1266 = vunpack.c.0.s8 %v1265
      %v1267 = vlaneseq
      %v1268 = vshrl.u32 %v1267, 7
      %v1269 = vsub.s32 %v1266, %v1268
      %v1270 = vrot.slane %v1262, %v1269
      %1272 = vset.pattern.permute.xlu0 0
      %1273 = vperm.xlu0 %1272, %v965
      %v1274 = vpop.permute.xlu0 %1273
      %v1277 = vunpack.c.l.s4 839922192
      %v1278 = vunpack.c.0.s8 %v1277
      %v1279 = vlaneseq
      %v1280 = vshrl.u32 %v1279, 7
      %v1281 = vsub.s32 %v1278, %v1280
      %v1282 = vrot.slane %v1274, %v1281
      %1284 = vset.pattern.permute.xlu0 0
      %1285 = vperm.xlu0 %1284, %v966
      %v1286 = vpop.permute.xlu0 %1285
      %v1289 = vunpack.c.l.s4 839922192
      %v1290 = vunpack.c.0.s8 %v1289
      %v1291 = vlaneseq
      %v1292 = vshrl.u32 %v1291, 7
      %v1293 = vsub.s32 %v1290, %v1292
      %v1294 = vrot.slane %v1286, %v1293
      %1296 = vset.pattern.permute.xlu0 0
      %1297 = vperm.xlu0 %1296, %v967
      %v1298 = vpop.permute.xlu0 %1297
      %v1301 = vunpack.c.l.s4 839922192
      %v1302 = vunpack.c.0.s8 %v1301
      %v1303 = vlaneseq
      %v1304 = vshrl.u32 %v1303, 7
      %v1305 = vsub.s32 %v1302, %v1304
      %v1306 = vrot.slane %v1298, %v1305
      %1308 = vset.pattern.permute.xlu0 0
      %1309 = vperm.xlu0 %1308, %v968
      %v1310 = vpop.permute.xlu0 %1309
      %v1313 = vunpack.c.l.s4 839922192
      %v1314 = vunpack.c.0.s8 %v1313
      %v1315 = vlaneseq
      %v1316 = vshrl.u32 %v1315, 7
      %v1317 = vsub.s32 %v1314, %v1316
      %v1318 = vrot.slane %v1310, %v1317
      %1320 = vset.pattern.permute.xlu0 0
      %1321 = vperm.xlu0 %1320, %v969
      %v1322 = vpop.permute.xlu0 %1321
      %v1325 = vunpack.c.l.s4 839922192
      %v1326 = vunpack.c.0.s8 %v1325
      %v1327 = vlaneseq
      %v1328 = vshrl.u32 %v1327, 7
      %v1329 = vsub.s32 %v1326, %v1328
      %v1330 = vrot.slane %v1322, %v1329
      %1332 = vset.pattern.permute.xlu0 0
      %1333 = vperm.xlu0 %1332, %v970
      %v1334 = vpop.permute.xlu0 %1333
      %v1337 = vunpack.c.l.s4 839922192
      %v1338 = vunpack.c.0.s8 %v1337
      %v1339 = vlaneseq
      %v1340 = vshrl.u32 %v1339, 7
      %v1341 = vsub.s32 %v1338, %v1340
      %v1342 = vrot.slane %v1334, %v1341
      %1344 = vset.pattern.permute.xlu0 0
      %1345 = vperm.xlu0 %1344, %v971
      %v1346 = vpop.permute.xlu0 %1345
      %v1349 = vunpack.c.l.s4 839922192
      %v1350 = vunpack.c.0.s8 %v1349
      %v1351 = vlaneseq
      %v1352 = vshrl.u32 %v1351, 7
      %v1353 = vsub.s32 %v1350, %v1352
      %v1354 = vrot.slane %v1346, %v1353
      %1356 = vset.pattern.permute.xlu0 0
      %1357 = vperm.xlu0 %1356, %v972
      %v1358 = vpop.permute.xlu0 %1357
      %v1361 = vunpack.c.l.s4 839922192
      %v1362 = vunpack.c.0.s8 %v1361
      %v1363 = vlaneseq
      %v1364 = vshrl.u32 %v1363, 7
      %v1365 = vsub.s32 %v1362, %v1364
      %v1366 = vrot.slane %v1358, %v1365
      %1368 = vset.pattern.permute.xlu0 0
      %1369 = vperm.xlu0 %1368, %v973
      %v1370 = vpop.permute.xlu0 %1369
      %v1373 = vunpack.c.l.s4 839922192
      %v1374 = vunpack.c.0.s8 %v1373
      %v1375 = vlaneseq
      %v1376 = vshrl.u32 %v1375, 7
      %v1377 = vsub.s32 %v1374, %v1376
      %v1378 = vrot.slane %v1370, %v1377
      %1380 = vset.pattern.permute.xlu0 0
      %1381 = vperm.xlu0 %1380, %v974
      %v1382 = vpop.permute.xlu0 %1381
      %v1385 = vunpack.c.l.s4 839922192
      %v1386 = vunpack.c.0.s8 %v1385
      %v1387 = vlaneseq
      %v1388 = vshrl.u32 %v1387, 7
      %v1389 = vsub.s32 %v1386, %v1388
      %v1390 = vrot.slane %v1382, %v1389
      %1392 = vset.pattern.permute.xlu0 0
      %1393 = vperm.xlu0 %1392, %v975
      %v1394 = vpop.permute.xlu0 %1393
      %v1397 = vunpack.c.l.s4 839922192
      %v1398 = vunpack.c.0.s8 %v1397
      %v1399 = vlaneseq
      %v1400 = vshrl.u32 %v1399, 7
      %v1401 = vsub.s32 %v1398, %v1400
      %v1402 = vrot.slane %v1394, %v1401
      %1404 = vset.pattern.permute.xlu0 0
      %1405 = vperm.xlu0 %1404, %v976
      %v1406 = vpop.permute.xlu0 %1405
      %v1409 = vunpack.c.l.s4 839922192
      %v1410 = vunpack.c.0.s8 %v1409
      %v1411 = vlaneseq
      %v1412 = vshrl.u32 %v1411, 7
      %v1413 = vsub.s32 %v1410, %v1412
      %v1414 = vrot.slane %v1406, %v1413
      %1416 = vset.pattern.permute.xlu0 0
      %1417 = vperm.xlu0 %1416, %v977
      %v1418 = vpop.permute.xlu0 %1417
      %v1421 = vunpack.c.l.s4 839922192
      %v1422 = vunpack.c.0.s8 %v1421
      %v1423 = vlaneseq
      %v1424 = vshrl.u32 %v1423, 7
      %v1425 = vsub.s32 %v1422, %v1424
      %v1426 = vrot.slane %v1418, %v1425
      %vm1427 = vsmask.f32 3328
      %vm1428 = vsmask.f32 7440
      %vm1429 = vmor %vm1427, %vm1428
      %v1431 = vshll.u32 %v1054, 16
      %v1433 = vrot.slane %v1431, 5
      %v1434 = vshrl.u32 %v1054, 16
      %v1436 = vrot.slane %v1434, 4
      %v1437 = vor.u32 %v1436, %v1433
      %v1438 = vrot.slane %v1437, 4
      %v1440 = vshll.u32 %v1066, 16
      %v1442 = vrot.slane %v1440, 5
      %v1443 = vsel %vm1429, %v1438, %v1442
      %v1444 = vshrl.u32 %v1066, 16
      %v1446 = vrot.slane %v1444, 4
      %v1447 = vor.u32 %v1446, %v1442
      %v1448 = vrot.slane %v1447, 4
      %v1450 = vshll.u32 %v1078, 16
      %v1452 = vrot.slane %v1450, 5
      %v1453 = vsel %vm1429, %v1448, %v1452
      %v1454 = vshrl.u32 %v1078, 16
      %v1456 = vrot.slane %v1454, 4
      %v1457 = vor.u32 %v1456, %v1452
      %v1458 = vrot.slane %v1457, 4
      %v1460 = vshll.u32 %v1090, 16
      %v1462 = vrot.slane %v1460, 5
      %v1463 = vsel %vm1429, %v1458, %v1462
      %v1464 = vshrl.u32 %v1090, 16
      %v1466 = vrot.slane %v1464, 4
      %v1467 = vor.u32 %v1466, %v1462
      %v1468 = vrot.slane %v1467, 4
      %v1470 = vshll.u32 %v1102, 16
      %v1472 = vrot.slane %v1470, 5
      %v1473 = vsel %vm1429, %v1468, %v1472
      %v1474 = vshrl.u32 %v1102, 16
      %v1476 = vrot.slane %v1474, 4
      %v1477 = vor.u32 %v1476, %v1472
      %v1478 = vrot.slane %v1477, 4
      %v1480 = vshll.u32 %v1114, 16
      %v1482 = vrot.slane %v1480, 5
      %v1483 = vsel %vm1429, %v1478, %v1482
      %v1484 = vshrl.u32 %v1114, 16
      %v1486 = vrot.slane %v1484, 4
      %v1487 = vor.u32 %v1486, %v1482
      %v1488 = vrot.slane %v1487, 4
      %v1490 = vshll.u32 %v1126, 16
      %v1492 = vrot.slane %v1490, 5
      %v1493 = vsel %vm1429, %v1488, %v1492
      %v1494 = vshrl.u32 %v1126, 16
      %v1496 = vrot.slane %v1494, 4
      %v1497 = vor.u32 %v1496, %v1492
      %v1498 = vrot.slane %v1497, 4
      %v1500 = vshll.u32 %v1138, 16
      %v1502 = vrot.slane %v1500, 5
      %v1503 = vsel %vm1429, %v1498, %v1502
      %v1504 = vshrl.u32 %v1138, 16
      %v1506 = vrot.slane %v1504, 4
      %v1507 = vor.u32 %v1506, %v1502
      %v1508 = vrot.slane %v1507, 4
      %v1510 = vshll.u32 %v1150, 16
      %v1512 = vrot.slane %v1510, 5
      %v1513 = vsel %vm1429, %v1508, %v1512
      %v1514 = vshrl.u32 %v1150, 16
      %v1516 = vrot.slane %v1514, 4
      %v1517 = vor.u32 %v1516, %v1512
      %v1518 = vrot.slane %v1517, 4
      %v1520 = vshll.u32 %v1162, 16
      %v1522 = vrot.slane %v1520, 5
      %v1523 = vsel %vm1429, %v1518, %v1522
      %v1524 = vshrl.u32 %v1162, 16
      %v1526 = vrot.slane %v1524, 4
      %v1527 = vor.u32 %v1526, %v1522
      %v1528 = vrot.slane %v1527, 4
      %v1530 = vshll.u32 %v1174, 16
      %v1532 = vrot.slane %v1530, 5
      %v1533 = vsel %vm1429, %v1528, %v1532
      %v1534 = vshrl.u32 %v1174, 16
      %v1536 = vrot.slane %v1534, 4
      %v1537 = vor.u32 %v1536, %v1532
      %v1538 = vrot.slane %v1537, 4
      %v1540 = vshll.u32 %v1186, 16
      %v1542 = vrot.slane %v1540, 5
      %v1543 = vsel %vm1429, %v1538, %v1542
      %v1544 = vshrl.u32 %v1186, 16
      %v1546 = vrot.slane %v1544, 4
      %v1547 = vor.u32 %v1546, %v1542
      %v1548 = vrot.slane %v1547, 4
      %v1550 = vshll.u32 %v1198, 16
      %v1552 = vrot.slane %v1550, 5
      %v1553 = vsel %vm1429, %v1548, %v1552
      %v1554 = vshrl.u32 %v1198, 16
      %v1556 = vrot.slane %v1554, 4
      %v1557 = vor.u32 %v1556, %v1552
      %v1558 = vrot.slane %v1557, 4
      %v1560 = vshll.u32 %v1210, 16
      %v1562 = vrot.slane %v1560, 5
      %v1563 = vsel %vm1429, %v1558, %v1562
      %v1564 = vshrl.u32 %v1210, 16
      %v1566 = vrot.slane %v1564, 4
      %v1567 = vor.u32 %v1566, %v1562
      %v1568 = vrot.slane %v1567, 4
      %v1570 = vshll.u32 %v1222, 16
      %v1572 = vrot.slane %v1570, 5
      %v1573 = vsel %vm1429, %v1568, %v1572
      %v1574 = vshrl.u32 %v1222, 16
      %v1576 = vrot.slane %v1574, 4
      %v1577 = vor.u32 %v1576, %v1572
      %v1578 = vrot.slane %v1577, 4
      %v1580 = vshll.u32 %v1234, 16
      %v1582 = vrot.slane %v1580, 5
      %v1583 = vsel %vm1429, %v1578, %v1582
      %v1584 = vshrl.u32 %v1234, 16
      %v1586 = vrot.slane %v1584, 4
      %v1587 = vor.u32 %v1586, %v1582
      %v1588 = vrot.slane %v1587, 4
      %v1590 = vshll.u32 %v1246, 16
      %v1592 = vrot.slane %v1590, 5
      %v1593 = vsel %vm1429, %v1588, %v1592
      %v1594 = vshrl.u32 %v1246, 16
      %v1596 = vrot.slane %v1594, 4
      %v1597 = vor.u32 %v1596, %v1592
      %v1598 = vrot.slane %v1597, 4
      %v1600 = vshll.u32 %v1258, 16
      %v1602 = vrot.slane %v1600, 5
      %v1603 = vsel %vm1429, %v1598, %v1602
      %v1604 = vshrl.u32 %v1258, 16
      %v1606 = vrot.slane %v1604, 4
      %v1607 = vor.u32 %v1606, %v1602
      %v1608 = vrot.slane %v1607, 4
      %v1610 = vshll.u32 %v1270, 16
      %v1612 = vrot.slane %v1610, 5
      %v1613 = vsel %vm1429, %v1608, %v1612
      %v1614 = vshrl.u32 %v1270, 16
      %v1616 = vrot.slane %v1614, 4
      %v1617 = vor.u32 %v1616, %v1612
      %v1618 = vrot.slane %v1617, 4
      %v1620 = vshll.u32 %v1282, 16
      %v1622 = vrot.slane %v1620, 5
      %v1623 = vsel %vm1429, %v1618, %v1622
      %v1624 = vshrl.u32 %v1282, 16
      %v1626 = vrot.slane %v1624, 4
      %v1627 = vor.u32 %v1626, %v1622
      %v1628 = vrot.slane %v1627, 4
      %v1630 = vshll.u32 %v1294, 16
      %v1632 = vrot.slane %v1630, 5
      %v1633 = vsel %vm1429, %v1628, %v1632
      %v1634 = vshrl.u32 %v1294, 16
      %v1636 = vrot.slane %v1634, 4
      %v1637 = vor.u32 %v1636, %v1632
      %v1638 = vrot.slane %v1637, 4
      %v1640 = vshll.u32 %v1306, 16
      %v1642 = vrot.slane %v1640, 5
      %v1643 = vsel %vm1429, %v1638, %v1642
      %v1644 = vshrl.u32 %v1306, 16
      %v1646 = vrot.slane %v1644, 4
      %v1647 = vor.u32 %v1646, %v1642
      %v1648 = vrot.slane %v1647, 4
      %v1650 = vshll.u32 %v1318, 16
      %v1652 = vrot.slane %v1650, 5
      %v1653 = vsel %vm1429, %v1648, %v1652
      %v1654 = vshrl.u32 %v1318, 16
      %v1656 = vrot.slane %v1654, 4
      %v1657 = vor.u32 %v1656, %v1652
      %v1658 = vrot.slane %v1657, 4
      %v1660 = vshll.u32 %v1330, 16
      %v1662 = vrot.slane %v1660, 5
      %v1663 = vsel %vm1429, %v1658, %v1662
      %v1664 = vshrl.u32 %v1330, 16
      %v1666 = vrot.slane %v1664, 4
      %v1667 = vor.u32 %v1666, %v1662
      %v1668 = vrot.slane %v1667, 4
      %v1670 = vshll.u32 %v1342, 16
      %v1672 = vrot.slane %v1670, 5
      %v1673 = vsel %vm1429, %v1668, %v1672
      %v1674 = vshrl.u32 %v1342, 16
      %v1676 = vrot.slane %v1674, 4
      %v1677 = vor.u32 %v1676, %v1672
      %v1678 = vrot.slane %v1677, 4
      %v1680 = vshll.u32 %v1354, 16
      %v1682 = vrot.slane %v1680, 5
      %v1683 = vsel %vm1429, %v1678, %v1682
      %v1684 = vshrl.u32 %v1354, 16
      %v1686 = vrot.slane %v1684, 4
      %v1687 = vor.u32 %v1686, %v1682
      %v1688 = vrot.slane %v1687, 4
      %v1690 = vshll.u32 %v1366, 16
      %v1692 = vrot.slane %v1690, 5
      %v1693 = vsel %vm1429, %v1688, %v1692
      %v1694 = vshrl.u32 %v1366, 16
      %v1696 = vrot.slane %v1694, 4
      %v1697 = vor.u32 %v1696, %v1692
      %v1698 = vrot.slane %v1697, 4
      %v1700 = vshll.u32 %v1378, 16
      %v1702 = vrot.slane %v1700, 5
      %v1703 = vsel %vm1429, %v1698, %v1702
      %v1704 = vshrl.u32 %v1378, 16
      %v1706 = vrot.slane %v1704, 4
      %v1707 = vor.u32 %v1706, %v1702
      %v1708 = vrot.slane %v1707, 4
      %v1710 = vshll.u32 %v1390, 16
      %v1712 = vrot.slane %v1710, 5
      %v1713 = vsel %vm1429, %v1708, %v1712
      %v1714 = vshrl.u32 %v1390, 16
      %v1716 = vrot.slane %v1714, 4
      %v1717 = vor.u32 %v1716, %v1712
      %v1718 = vrot.slane %v1717, 4
      %v1720 = vshll.u32 %v1402, 16
      %v1722 = vrot.slane %v1720, 5
      %v1723 = vsel %vm1429, %v1718, %v1722
      %v1724 = vshrl.u32 %v1402, 16
      %v1726 = vrot.slane %v1724, 4
      %v1727 = vor.u32 %v1726, %v1722
      %v1728 = vrot.slane %v1727, 4
      %v1730 = vshll.u32 %v1414, 16
      %v1732 = vrot.slane %v1730, 5
      %v1733 = vsel %vm1429, %v1728, %v1732
      %v1734 = vshrl.u32 %v1414, 16
      %v1736 = vrot.slane %v1734, 4
      %v1737 = vor.u32 %v1736, %v1732
      %v1738 = vrot.slane %v1737, 4
      %v1740 = vshll.u32 %v1426, 16
      %v1742 = vrot.slane %v1740, 5
      %v1743 = vsel %vm1429, %v1738, %v1742
      %v1744 = vshrl.u32 %v1426, 16
      %v1746 = vrot.slane %v1744, 4
      %v1747 = vor.u32 %v1746, %v1742
      %v1748 = vrot.slane %v1747, 4
      %v1782 = vmul.bf16 %v1010, %v1433
      %v1783 = vmul.bf16 %v1011, %v1443
      %v1784 = vmul.bf16 %v1012, %v1453
      %v1785 = vmul.bf16 %v1013, %v1463
      %v1786 = vmul.bf16 %v1014, %v1473
      %v1787 = vmul.bf16 %v1015, %v1483
      %v1788 = vmul.bf16 %v1016, %v1493
      %v1789 = vmul.bf16 %v1017, %v1503
      %v1790 = vmul.bf16 %v1018, %v1513
      %v1791 = vmul.bf16 %v1019, %v1523
      %v1792 = vmul.bf16 %v1020, %v1533
      %v1793 = vmul.bf16 %v1021, %v1543
      %v1794 = vmul.bf16 %v1022, %v1553
      %v1795 = vmul.bf16 %v1023, %v1563
      %v1796 = vmul.bf16 %v1024, %v1573
      %v1797 = vmul.bf16 %v1025, %v1583
      %v1798 = vmul.bf16 %v1026, %v1593
      %v1799 = vmul.bf16 %v1027, %v1603
      %v1800 = vmul.bf16 %v1028, %v1613
      %v1801 = vmul.bf16 %v1029, %v1623
      %v1802 = vmul.bf16 %v1030, %v1633
      %v1803 = vmul.bf16 %v1031, %v1643
      %v1804 = vmul.bf16 %v1032, %v1653
      %v1805 = vmul.bf16 %v1033, %v1663
      %v1806 = vmul.bf16 %v1034, %v1673
      %v1807 = vmul.bf16 %v1035, %v1683
      %v1808 = vmul.bf16 %v1036, %v1693
      %v1809 = vmul.bf16 %v1037, %v1703
      %v1810 = vmul.bf16 %v1038, %v1713
      %v1811 = vmul.bf16 %v1039, %v1723
      %v1812 = vmul.bf16 %v1040, %v1733
      %v1813 = vmul.bf16 %v1041, %v1743
      %v1814 = vmul.bf16 %v1042, %v1748
      %v1815 = vld [vmem:[%s5] sm:$0xf]
      %v1816 = vld [vmem:[%s5 + $0x4] sm:$0xf]
      %v1817 = vld [vmem:[%s5 + $0x8] sm:$0xf]
      %v1818 = vld [vmem:[%s5 + $0xc] sm:$0xf]
      %v1819 = vld [vmem:[%s5 + $0x10] sm:$0xf]
      %v1820 = vld [vmem:[%s5 + $0x14] sm:$0xf]
      %v1821 = vld [vmem:[%s5 + $0x18] sm:$0xf]
      %v1822 = vld [vmem:[%s5 + $0x1c] sm:$0xf]
      %v1823 = vld [vmem:[%s5 + $0x20] sm:$0xf]
      %v1824 = vld [vmem:[%s5 + $0x24] sm:$0xf]
      %v1825 = vld [vmem:[%s5 + $0x28] sm:$0xf]
      %v1826 = vld [vmem:[%s5 + $0x2c] sm:$0xf]
      %v1827 = vld [vmem:[%s5 + $0x30] sm:$0xf]
      %v1828 = vld [vmem:[%s5 + $0x34] sm:$0xf]
      %v1829 = vld [vmem:[%s5 + $0x38] sm:$0xf]
      %v1830 = vld [vmem:[%s5 + $0x3c] sm:$0xf]
      %v1831 = vld [vmem:[%s5 + $0x40] sm:$0xf]
      %v1832 = vld [vmem:[%s5 + $0x44] sm:$0xf]
      %v1833 = vld [vmem:[%s5 + $0x48] sm:$0xf]
      %v1834 = vld [vmem:[%s5 + $0x4c] sm:$0xf]
      %v1835 = vld [vmem:[%s5 + $0x50] sm:$0xf]
      %v1836 = vld [vmem:[%s5 + $0x54] sm:$0xf]
      %v1837 = vld [vmem:[%s5 + $0x58] sm:$0xf]
      %v1838 = vld [vmem:[%s5 + $0x5c] sm:$0xf]
      %v1839 = vld [vmem:[%s5 + $0x60] sm:$0xf]
      %v1840 = vld [vmem:[%s5 + $0x64] sm:$0xf]
      %v1841 = vld [vmem:[%s5 + $0x68] sm:$0xf]
      %v1842 = vld [vmem:[%s5 + $0x6c] sm:$0xf]
      %v1843 = vld [vmem:[%s5 + $0x70] sm:$0xf]
      %v1844 = vld [vmem:[%s5 + $0x74] sm:$0xf]
      %v1845 = vld [vmem:[%s5 + $0x78] sm:$0xf]
      %v1846 = vld [vmem:[%s5 + $0x7c] sm:$0xf]
      %v1879 = vunpack.c.l.b16 %v1011
      %v1880 = vunpack.c.l.b16 %v1012
      %v1881 = vunpack.c.l.b16 %v1013
      %v1882 = vunpack.c.l.b16 %v1014
      %v1883 = vunpack.c.l.b16 %v1015
      %v1884 = vunpack.c.l.b16 %v1016
      %v1885 = vunpack.c.l.b16 %v1017
      %v1886 = vunpack.c.l.b16 %v1018
      %v1887 = vunpack.c.l.b16 %v1019
      %v1888 = vunpack.c.l.b16 %v1020
      %v1889 = vunpack.c.l.b16 %v1021
      %v1890 = vunpack.c.l.b16 %v1022
      %v1891 = vunpack.c.l.b16 %v1023
      %v1892 = vunpack.c.l.b16 %v1024
      %v1893 = vunpack.c.l.b16 %v1025
      %v1894 = vunpack.c.l.b16 %v1026
      %v1895 = vunpack.c.l.b16 %v1027
      %v1896 = vunpack.c.l.b16 %v1028
      %v1897 = vunpack.c.l.b16 %v1029
      %v1898 = vunpack.c.l.b16 %v1030
      %v1899 = vunpack.c.l.b16 %v1031
      %v1900 = vunpack.c.l.b16 %v1032
      %v1901 = vunpack.c.l.b16 %v1033
      %v1902 = vunpack.c.l.b16 %v1034
      %v1903 = vunpack.c.l.b16 %v1035
      %v1904 = vunpack.c.l.b16 %v1036
      %v1905 = vunpack.c.l.b16 %v1037
      %v1906 = vunpack.c.l.b16 %v1038
      %v1907 = vunpack.c.l.b16 %v1039
      %v1908 = vunpack.c.l.b16 %v1040
      %v1909 = vunpack.c.l.b16 %v1041
      %v1910 = vunpack.c.l.b16 %v1042
      %v1911 = vpack.c.b16 %v1880, %v1879
      %v1912 = vpack.c.b16 %v1882, %v1881
      %v1913 = vpack.c.b16 %v1884, %v1883
      %v1914 = vpack.c.b16 %v1886, %v1885
      %v1915 = vpack.c.b16 %v1888, %v1887
      %v1916 = vpack.c.b16 %v1890, %v1889
      %v1917 = vpack.c.b16 %v1892, %v1891
      %v1918 = vpack.c.b16 %v1894, %v1893
      %v1919 = vpack.c.b16 %v1896, %v1895
      %v1920 = vpack.c.b16 %v1898, %v1897
      %v1921 = vpack.c.b16 %v1900, %v1899
      %v1922 = vpack.c.b16 %v1902, %v1901
      %v1923 = vpack.c.b16 %v1904, %v1903
      %v1924 = vpack.c.b16 %v1906, %v1905
      %v1925 = vpack.c.b16 %v1908, %v1907
      %v1926 = vpack.c.b16 %v1910, %v1909
      %v1959 = vunpack.c.l.b16 %v1831
      %v1960 = vunpack.c.l.b16 %v1832
      %v1961 = vunpack.c.l.b16 %v1833
      %v1962 = vunpack.c.l.b16 %v1834
      %v1963 = vunpack.c.l.b16 %v1835
      %v1964 = vunpack.c.l.b16 %v1836
      %v1965 = vunpack.c.l.b16 %v1837
      %v1966 = vunpack.c.l.b16 %v1838
      %v1967 = vunpack.c.l.b16 %v1839
      %v1968 = vunpack.c.l.b16 %v1840
      %v1969 = vunpack.c.l.b16 %v1841
      %v1970 = vunpack.c.l.b16 %v1842
      %v1971 = vunpack.c.l.b16 %v1843
      %v1972 = vunpack.c.l.b16 %v1844
      %v1973 = vunpack.c.l.b16 %v1845
      %v1974 = vunpack.c.l.b16 %v1846
      %v1975 = vpack.c.b16 %v1960, %v1959
      %v1976 = vpack.c.b16 %v1962, %v1961
      %v1977 = vpack.c.b16 %v1964, %v1963
      %v1978 = vpack.c.b16 %v1966, %v1965
      %v1979 = vpack.c.b16 %v1968, %v1967
      %v1980 = vpack.c.b16 %v1970, %v1969
      %v1981 = vpack.c.b16 %v1972, %v1971
      %v1982 = vpack.c.b16 %v1974, %v1973
      %1991 = vmatprep.subr.bf16.mxu0 0
      %1992 = vmatpush1.bf16.msra.mxu0 %v1982
      %1993 = vmatprep.subr.bf16.mxu0 0
      %1994 = vmatpush1.bf16.msra.mxu0 %v1981
      %1995 = vmatprep.subr.bf16.mxu0 0
      %1996 = vmatpush1.bf16.msra.mxu0 %v1980
      %1997 = vmatprep.subr.bf16.mxu0 0
      %1998 = vmatpush1.bf16.msra.mxu0 %v1979
      %1999 = vmatprep.subr.bf16.mxu0 0
      %2000 = vmatpush1.bf16.msra.mxu0 %v1978
      %2001 = vmatprep.subr.bf16.mxu0 0
      %2002 = vmatpush1.bf16.msra.mxu0 %v1977
      %2003 = vmatprep.subr.bf16.mxu0 0
      %2004 = vmatpush1.bf16.msra.mxu0 %v1976
      %2005 = vmatprep.subr.bf16.mxu0 0
      %2006 = vmatpush1.bf16.msra.mxu0 %v1975
      %2007 = vmatprep.subr.bf16.mxu0 0
      %2008 = vmatpush2.bf16.msra.mxu0 0
      %2009 = vmatprep.subr.bf16.mxu0 0
      %2010 = vmatpush2.bf16.msra.mxu0 0
      %2011 = vmatprep.subr.bf16.mxu0 0
      %2012 = vmatpush2.bf16.msra.mxu0 0
      %2013 = vmatprep.subr.bf16.mxu0 0
      %2014 = vmatpush2.bf16.msra.mxu0 0
      %2015 = vmatprep.subr.bf16.mxu0 0
      %2016 = vmatpush2.bf16.msra.mxu0 0
      %2017 = vmatprep.subr.bf16.mxu0 0
      %2018 = vmatpush2.bf16.msra.mxu0 0
      %2019 = vmatprep.subr.bf16.mxu0 0
      %2020 = vmatpush2.bf16.msra.mxu0 0
      %2021 = vmatprep.subr.bf16.mxu0 0
      %2022 = vmatpush2.bf16.msra.mxu0 0
      %2023 = vmatprep.mubr.bf16.mxu0 0
      %2024 = vmatmul.mubr.bf16.gmra.mxu0 %v1911
      %v2025 = vpop.f32.mrf.mxu0
      %v2026 = vadd.f32 0.0, %v2025
      %v2027 = vpop.f32.mrf.mxu0
      %v2028 = vpop.f32.mrf.mxu0
      %v2029 = vadd.f32 0.0, %v2028
      %v2030 = vpop.f32.mrf.mxu0
      %2031 = vmatprep.mubr.bf16.mxu0 0
      %2032 = vmatmul.mubr.bf16.gmra.mxu0 %v1912
      %v2033 = vpop.f32.mrf.mxu0
      %v2034 = vadd.f32 0.0, %v2033
      %v2035 = vpop.f32.mrf.mxu0
      %v2036 = vpop.f32.mrf.mxu0
      %v2037 = vadd.f32 0.0, %v2036
      %v2038 = vpop.f32.mrf.mxu0
      %2039 = vmatprep.mubr.bf16.mxu0 0
      %2040 = vmatmul.mubr.bf16.gmra.mxu0 %v1913
      %v2041 = vpop.f32.mrf.mxu0
      %v2042 = vadd.f32 0.0, %v2041
      %v2043 = vpop.f32.mrf.mxu0
      %v2044 = vpop.f32.mrf.mxu0
      %v2045 = vadd.f32 0.0, %v2044
      %v2046 = vpop.f32.mrf.mxu0
      %2047 = vmatprep.mubr.bf16.mxu0 0
      %2048 = vmatmul.mubr.bf16.gmra.mxu0 %v1914
      %v2049 = vpop.f32.mrf.mxu0
      %v2050 = vadd.f32 0.0, %v2049
      %v2051 = vpop.f32.mrf.mxu0
      %v2052 = vpop.f32.mrf.mxu0
      %v2053 = vadd.f32 0.0, %v2052
      %v2054 = vpop.f32.mrf.mxu0
      %2055 = vmatprep.mubr.bf16.mxu0 0
      %2056 = vmatmul.mubr.bf16.gmra.mxu0 %v1915
      %v2057 = vpop.f32.mrf.mxu0
      %v2058 = vadd.f32 0.0, %v2057
      %v2059 = vpop.f32.mrf.mxu0
      %v2060 = vpop.f32.mrf.mxu0
      %v2061 = vadd.f32 0.0, %v2060
      %v2062 = vpop.f32.mrf.mxu0
      %2063 = vmatprep.mubr.bf16.mxu0 0
      %2064 = vmatmul.mubr.bf16.gmra.mxu0 %v1916
      %v2065 = vpop.f32.mrf.mxu0
      %v2066 = vadd.f32 0.0, %v2065
      %v2067 = vpop.f32.mrf.mxu0
      %v2068 = vpop.f32.mrf.mxu0
      %v2069 = vadd.f32 0.0, %v2068
      %v2070 = vpop.f32.mrf.mxu0
      %2071 = vmatprep.mubr.bf16.mxu0 0
      %2072 = vmatmul.mubr.bf16.gmra.mxu0 %v1917
      %v2073 = vpop.f32.mrf.mxu0
      %v2074 = vadd.f32 0.0, %v2073
      %v2075 = vpop.f32.mrf.mxu0
      %v2076 = vpop.f32.mrf.mxu0
      %v2077 = vadd.f32 0.0, %v2076
      %v2078 = vpop.f32.mrf.mxu0
      %2079 = vmatprep.mubr.bf16.mxu0 0
      %2080 = vmatmul.mubr.bf16.gmra.mxu0 %v1918
      %v2081 = vpop.f32.mrf.mxu0
      %v2082 = vadd.f32 0.0, %v2081
      %v2083 = vpop.f32.mrf.mxu0
      %v2084 = vpop.f32.mrf.mxu0
      %v2085 = vadd.f32 0.0, %v2084
      %v2086 = vpop.f32.mrf.mxu0
      %2087 = vmatprep.mubr.bf16.mxu0 0
      %2088 = vmatmul.mubr.bf16.gmra.mxu0 %v1919
      %v2089 = vpop.f32.mrf.mxu0
      %v2090 = vadd.f32 0.0, %v2089
      %v2091 = vpop.f32.mrf.mxu0
      %v2092 = vpop.f32.mrf.mxu0
      %v2093 = vadd.f32 0.0, %v2092
      %v2094 = vpop.f32.mrf.mxu0
      %2095 = vmatprep.mubr.bf16.mxu0 0
      %2096 = vmatmul.mubr.bf16.gmra.mxu0 %v1920
      %v2097 = vpop.f32.mrf.mxu0
      %v2098 = vadd.f32 0.0, %v2097
      %v2099 = vpop.f32.mrf.mxu0
      %v2100 = vpop.f32.mrf.mxu0
      %v2101 = vadd.f32 0.0, %v2100
      %v2102 = vpop.f32.mrf.mxu0
      %2103 = vmatprep.mubr.bf16.mxu0 0
      %2104 = vmatmul.mubr.bf16.gmra.mxu0 %v1921
      %v2105 = vpop.f32.mrf.mxu0
      %v2106 = vadd.f32 0.0, %v2105
      %v2107 = vpop.f32.mrf.mxu0
      %v2108 = vpop.f32.mrf.mxu0
      %v2109 = vadd.f32 0.0, %v2108
      %v2110 = vpop.f32.mrf.mxu0
      %2111 = vmatprep.mubr.bf16.mxu0 0
      %2112 = vmatmul.mubr.bf16.gmra.mxu0 %v1922
      %v2113 = vpop.f32.mrf.mxu0
      %v2114 = vadd.f32 0.0, %v2113
      %v2115 = vpop.f32.mrf.mxu0
      %v2116 = vpop.f32.mrf.mxu0
      %v2117 = vadd.f32 0.0, %v2116
      %v2118 = vpop.f32.mrf.mxu0
      %2119 = vmatprep.mubr.bf16.mxu0 0
      %2120 = vmatmul.mubr.bf16.gmra.mxu0 %v1923
      %v2121 = vpop.f32.mrf.mxu0
      %v2122 = vadd.f32 0.0, %v2121
      %v2123 = vpop.f32.mrf.mxu0
      %v2124 = vpop.f32.mrf.mxu0
      %v2125 = vadd.f32 0.0, %v2124
      %v2126 = vpop.f32.mrf.mxu0
      %2127 = vmatprep.mubr.bf16.mxu0 0
      %2128 = vmatmul.mubr.bf16.gmra.mxu0 %v1924
      %v2129 = vpop.f32.mrf.mxu0
      %v2130 = vadd.f32 0.0, %v2129
      %v2131 = vpop.f32.mrf.mxu0
      %v2132 = vpop.f32.mrf.mxu0
      %v2133 = vadd.f32 0.0, %v2132
      %v2134 = vpop.f32.mrf.mxu0
      %2135 = vmatprep.mubr.bf16.mxu0 0
      %2136 = vmatmul.mubr.bf16.gmra.mxu0 %v1925
      %v2137 = vpop.f32.mrf.mxu0
      %v2138 = vadd.f32 0.0, %v2137
      %v2139 = vpop.f32.mrf.mxu0
      %v2140 = vpop.f32.mrf.mxu0
      %v2141 = vadd.f32 0.0, %v2140
      %v2142 = vpop.f32.mrf.mxu0
      %2143 = vmatprep.mubr.bf16.mxu0 0
      %2144 = vmatmul.mubr.bf16.gmra.mxu0 %v1926
      %v2145 = vpop.f32.mrf.mxu0
      %v2146 = vadd.f32 0.0, %v2145
      %v2147 = vpop.f32.mrf.mxu0
      %v2148 = vpop.f32.mrf.mxu0
      %v2149 = vadd.f32 0.0, %v2148
      %v2150 = vpop.f32.mrf.mxu0
      %2151 = vdwg.mxu0
      %v2185 = vunpack.c.l.b16 %v1782
      %v2186 = vunpack.c.l.b16 %v1783
      %v2187 = vunpack.c.l.b16 %v1784
      %v2188 = vunpack.c.l.b16 %v1785
      %v2189 = vunpack.c.l.b16 %v1786
      %v2190 = vunpack.c.l.b16 %v1787
      %v2191 = vunpack.c.l.b16 %v1788
      %v2192 = vunpack.c.l.b16 %v1789
      %v2193 = vunpack.c.l.b16 %v1790
      %v2194 = vunpack.c.l.b16 %v1791
      %v2195 = vunpack.c.l.b16 %v1792
      %v2196 = vunpack.c.l.b16 %v1793
      %v2197 = vunpack.c.l.b16 %v1794
      %v2198 = vunpack.c.l.b16 %v1795
      %v2199 = vunpack.c.l.b16 %v1796
      %v2200 = vunpack.c.l.b16 %v1797
      %v2201 = vunpack.c.l.b16 %v1798
      %v2202 = vunpack.c.l.b16 %v1799
      %v2203 = vunpack.c.l.b16 %v1800
      %v2204 = vunpack.c.l.b16 %v1801
      %v2205 = vunpack.c.l.b16 %v1802
      %v2206 = vunpack.c.l.b16 %v1803
      %v2207 = vunpack.c.l.b16 %v1804
      %v2208 = vunpack.c.l.b16 %v1805
      %v2209 = vunpack.c.l.b16 %v1806
      %v2210 = vunpack.c.l.b16 %v1807
      %v2211 = vunpack.c.l.b16 %v1808
      %v2212 = vunpack.c.l.b16 %v1809
      %v2213 = vunpack.c.l.b16 %v1810
      %v2214 = vunpack.c.l.b16 %v1811
      %v2215 = vunpack.c.l.b16 %v1812
      %v2216 = vunpack.c.l.b16 %v1813
      %v2217 = vunpack.c.l.b16 %v1814
      %v2218 = vpack.c.b16 %v2186, %v2185
      %v2219 = vpack.c.b16 %v2188, %v2187
      %v2220 = vpack.c.b16 %v2190, %v2189
      %v2221 = vpack.c.b16 %v2192, %v2191
      %v2222 = vpack.c.b16 %v2194, %v2193
      %v2223 = vpack.c.b16 %v2196, %v2195
      %v2224 = vpack.c.b16 %v2198, %v2197
      %v2225 = vpack.c.b16 %v2200, %v2199
      %v2226 = vpack.c.b16 %v2202, %v2201
      %v2227 = vpack.c.b16 %v2204, %v2203
      %v2228 = vpack.c.b16 %v2206, %v2205
      %v2229 = vpack.c.b16 %v2208, %v2207
      %v2230 = vpack.c.b16 %v2210, %v2209
      %v2231 = vpack.c.b16 %v2212, %v2211
      %v2232 = vpack.c.b16 %v2214, %v2213
      %v2233 = vpack.c.b16 %v2216, %v2215
      %v2234 = vpack.c.b16 %v2217, %v2217
      %vm2235 = vsmask.f32 4352
      %v2237 = vshrl.u32 %v2218, 16
      %v2239 = vrot.slane %v2237, 3
      %v2240 = vshll.u32 %v2218, 16
      %v2242 = vrot.slane %v2240, 4
      %v2243 = vor.u32 %v2239, %v2242
      %v2245 = vshrl.u32 %v2219, 16
      %v2247 = vrot.slane %v2245, 3
      %v2248 = vshll.u32 %v2219, 16
      %v2250 = vrot.slane %v2248, 4
      %v2251 = vor.u32 %v2247, %v2250
      %v2252 = vsel %vm2235, %v2243, %v2251
      %v2254 = vshrl.u32 %v2220, 16
      %v2256 = vrot.slane %v2254, 3
      %v2257 = vshll.u32 %v2220, 16
      %v2259 = vrot.slane %v2257, 4
      %v2260 = vor.u32 %v2256, %v2259
      %v2261 = vsel %vm2235, %v2251, %v2260
      %v2263 = vshrl.u32 %v2221, 16
      %v2265 = vrot.slane %v2263, 3
      %v2266 = vshll.u32 %v2221, 16
      %v2268 = vrot.slane %v2266, 4
      %v2269 = vor.u32 %v2265, %v2268
      %v2270 = vsel %vm2235, %v2260, %v2269
      %v2272 = vshrl.u32 %v2222, 16
      %v2274 = vrot.slane %v2272, 3
      %v2275 = vshll.u32 %v2222, 16
      %v2277 = vrot.slane %v2275, 4
      %v2278 = vor.u32 %v2274, %v2277
      %v2279 = vsel %vm2235, %v2269, %v2278
      %v2281 = vshrl.u32 %v2223, 16
      %v2283 = vrot.slane %v2281, 3
      %v2284 = vshll.u32 %v2223, 16
      %v2286 = vrot.slane %v2284, 4
      %v2287 = vor.u32 %v2283, %v2286
      %v2288 = vsel %vm2235, %v2278, %v2287
      %v2290 = vshrl.u32 %v2224, 16
      %v2292 = vrot.slane %v2290, 3
      %v2293 = vshll.u32 %v2224, 16
      %v2295 = vrot.slane %v2293, 4
      %v2296 = vor.u32 %v2292, %v2295
      %v2297 = vsel %vm2235, %v2287, %v2296
      %v2299 = vshrl.u32 %v2225, 16
      %v2301 = vrot.slane %v2299, 3
      %v2302 = vshll.u32 %v2225, 16
      %v2304 = vrot.slane %v2302, 4
      %v2305 = vor.u32 %v2301, %v2304
      %v2306 = vsel %vm2235, %v2296, %v2305
      %v2308 = vshrl.u32 %v2226, 16
      %v2310 = vrot.slane %v2308, 3
      %v2311 = vshll.u32 %v2226, 16
      %v2313 = vrot.slane %v2311, 4
      %v2314 = vor.u32 %v2310, %v2313
      %v2315 = vsel %vm2235, %v2305, %v2314
      %v2317 = vshrl.u32 %v2227, 16
      %v2319 = vrot.slane %v2317, 3
      %v2320 = vshll.u32 %v2227, 16
      %v2322 = vrot.slane %v2320, 4
      %v2323 = vor.u32 %v2319, %v2322
      %v2324 = vsel %vm2235, %v2314, %v2323
      %v2326 = vshrl.u32 %v2228, 16
      %v2328 = vrot.slane %v2326, 3
      %v2329 = vshll.u32 %v2228, 16
      %v2331 = vrot.slane %v2329, 4
      %v2332 = vor.u32 %v2328, %v2331
      %v2333 = vsel %vm2235, %v2323, %v2332
      %v2335 = vshrl.u32 %v2229, 16
      %v2337 = vrot.slane %v2335, 3
      %v2338 = vshll.u32 %v2229, 16
      %v2340 = vrot.slane %v2338, 4
      %v2341 = vor.u32 %v2337, %v2340
      %v2342 = vsel %vm2235, %v2332, %v2341
      %v2344 = vshrl.u32 %v2230, 16
      %v2346 = vrot.slane %v2344, 3
      %v2347 = vshll.u32 %v2230, 16
      %v2349 = vrot.slane %v2347, 4
      %v2350 = vor.u32 %v2346, %v2349
      %v2351 = vsel %vm2235, %v2341, %v2350
      %v2353 = vshrl.u32 %v2231, 16
      %v2355 = vrot.slane %v2353, 3
      %v2356 = vshll.u32 %v2231, 16
      %v2358 = vrot.slane %v2356, 4
      %v2359 = vor.u32 %v2355, %v2358
      %v2360 = vsel %vm2235, %v2350, %v2359
      %v2362 = vshrl.u32 %v2232, 16
      %v2364 = vrot.slane %v2362, 3
      %v2365 = vshll.u32 %v2232, 16
      %v2367 = vrot.slane %v2365, 4
      %v2368 = vor.u32 %v2364, %v2367
      %v2369 = vsel %vm2235, %v2359, %v2368
      %v2371 = vshrl.u32 %v2233, 16
      %v2373 = vrot.slane %v2371, 3
      %v2374 = vshll.u32 %v2233, 16
      %v2376 = vrot.slane %v2374, 4
      %v2377 = vor.u32 %v2373, %v2376
      %v2378 = vsel %vm2235, %v2368, %v2377
      %v2380 = vshrl.u32 %v2234, 16
      %v2382 = vrot.slane %v2380, 3
      %v2383 = vshll.u32 %v2234, 16
      %v2385 = vrot.slane %v2383, 4
      %v2386 = vor.u32 %v2382, %v2385
      %v2387 = vsel %vm2235, %v2377, %v2386
      %v2420 = vunpack.c.l.b16 %v1815
      %v2421 = vunpack.c.l.b16 %v1816
      %v2422 = vunpack.c.l.b16 %v1817
      %v2423 = vunpack.c.l.b16 %v1818
      %v2424 = vunpack.c.l.b16 %v1819
      %v2425 = vunpack.c.l.b16 %v1820
      %v2426 = vunpack.c.l.b16 %v1821
      %v2427 = vunpack.c.l.b16 %v1822
      %v2428 = vunpack.c.l.b16 %v1823
      %v2429 = vunpack.c.l.b16 %v1824
      %v2430 = vunpack.c.l.b16 %v1825
      %v2431 = vunpack.c.l.b16 %v1826
      %v2432 = vunpack.c.l.b16 %v1827
      %v2433 = vunpack.c.l.b16 %v1828
      %v2434 = vunpack.c.l.b16 %v1829
      %v2435 = vunpack.c.l.b16 %v1830
      %v2436 = vpack.c.b16 %v2421, %v2420
      %v2437 = vpack.c.b16 %v2423, %v2422
      %v2438 = vpack.c.b16 %v2425, %v2424
      %v2439 = vpack.c.b16 %v2427, %v2426
      %v2440 = vpack.c.b16 %v2429, %v2428
      %v2441 = vpack.c.b16 %v2431, %v2430
      %v2442 = vpack.c.b16 %v2433, %v2432
      %v2443 = vpack.c.b16 %v2435, %v2434
      %2452 = vmatprep.subr.bf16.mxu0 0
      %2453 = vmatpush1.bf16.msra.mxu0 %v2443
      %2454 = vmatprep.subr.bf16.mxu0 0
      %2455 = vmatpush1.bf16.msra.mxu0 %v2442
      %2456 = vmatprep.subr.bf16.mxu0 0
      %2457 = vmatpush1.bf16.msra.mxu0 %v2441
      %2458 = vmatprep.subr.bf16.mxu0 0
      %2459 = vmatpush1.bf16.msra.mxu0 %v2440
      %2460 = vmatprep.subr.bf16.mxu0 0
      %2461 = vmatpush1.bf16.msra.mxu0 %v2439
      %2462 = vmatprep.subr.bf16.mxu0 0
      %2463 = vmatpush1.bf16.msra.mxu0 %v2438
      %2464 = vmatprep.subr.bf16.mxu0 0
      %2465 = vmatpush1.bf16.msra.mxu0 %v2437
      %2466 = vmatprep.subr.bf16.mxu0 0
      %2467 = vmatpush1.bf16.msra.mxu0 %v2436
      %2468 = vmatprep.subr.bf16.mxu0 0
      %2469 = vmatpush2.bf16.msra.mxu0 0
      %2470 = vmatprep.subr.bf16.mxu0 0
      %2471 = vmatpush2.bf16.msra.mxu0 0
      %2472 = vmatprep.subr.bf16.mxu0 0
      %2473 = vmatpush2.bf16.msra.mxu0 0
      %2474 = vmatprep.subr.bf16.mxu0 0
      %2475 = vmatpush2.bf16.msra.mxu0 0
      %2476 = vmatprep.subr.bf16.mxu0 0
      %2477 = vmatpush2.bf16.msra.mxu0 0
      %2478 = vmatprep.subr.bf16.mxu0 0
      %2479 = vmatpush2.bf16.msra.mxu0 0
      %2480 = vmatprep.subr.bf16.mxu0 0
      %2481 = vmatpush2.bf16.msra.mxu0 0
      %2482 = vmatprep.subr.bf16.mxu0 0
      %2483 = vmatpush2.bf16.msra.mxu0 0
      %2484 = vmatprep.mubr.bf16.mxu0 0
      %2485 = vmatmul.mubr.bf16.gmra.mxu0 %v2252
      %v2486 = vpop.f32.mrf.mxu0
      %v2487 = vadd.f32 %v2026, %v2486
      %v2488 = vpop.f32.mrf.mxu0
      %v2489 = vpop.f32.mrf.mxu0
      %v2490 = vadd.f32 %v2029, %v2489
      %v2491 = vpop.f32.mrf.mxu0
      %2492 = vmatprep.mubr.bf16.mxu0 0
      %2493 = vmatmul.mubr.bf16.gmra.mxu0 %v2261
      %v2494 = vpop.f32.mrf.mxu0
      %v2495 = vadd.f32 %v2034, %v2494
      %v2496 = vpop.f32.mrf.mxu0
      %v2497 = vpop.f32.mrf.mxu0
      %v2498 = vadd.f32 %v2037, %v2497
      %v2499 = vpop.f32.mrf.mxu0
      %2500 = vmatprep.mubr.bf16.mxu0 0
      %2501 = vmatmul.mubr.bf16.gmra.mxu0 %v2270
      %v2502 = vpop.f32.mrf.mxu0
      %v2503 = vadd.f32 %v2042, %v2502
      %v2504 = vpop.f32.mrf.mxu0
      %v2505 = vpop.f32.mrf.mxu0
      %v2506 = vadd.f32 %v2045, %v2505
      %v2507 = vpop.f32.mrf.mxu0
      %2508 = vmatprep.mubr.bf16.mxu0 0
      %2509 = vmatmul.mubr.bf16.gmra.mxu0 %v2279
      %v2510 = vpop.f32.mrf.mxu0
      %v2511 = vadd.f32 %v2050, %v2510
      %v2512 = vpop.f32.mrf.mxu0
      %v2513 = vpop.f32.mrf.mxu0
      %v2514 = vadd.f32 %v2053, %v2513
      %v2515 = vpop.f32.mrf.mxu0
      %2516 = vmatprep.mubr.bf16.mxu0 0
      %2517 = vmatmul.mubr.bf16.gmra.mxu0 %v2288
      %v2518 = vpop.f32.mrf.mxu0
      %v2519 = vadd.f32 %v2058, %v2518
      %v2520 = vpop.f32.mrf.mxu0
      %v2521 = vpop.f32.mrf.mxu0
      %v2522 = vadd.f32 %v2061, %v2521
      %v2523 = vpop.f32.mrf.mxu0
      %2524 = vmatprep.mubr.bf16.mxu0 0
      %2525 = vmatmul.mubr.bf16.gmra.mxu0 %v2297
      %v2526 = vpop.f32.mrf.mxu0
      %v2527 = vadd.f32 %v2066, %v2526
      %v2528 = vpop.f32.mrf.mxu0
      %v2529 = vpop.f32.mrf.mxu0
      %v2530 = vadd.f32 %v2069, %v2529
      %v2531 = vpop.f32.mrf.mxu0
      %2532 = vmatprep.mubr.bf16.mxu0 0
      %2533 = vmatmul.mubr.bf16.gmra.mxu0 %v2306
      %v2534 = vpop.f32.mrf.mxu0
      %v2535 = vadd.f32 %v2074, %v2534
      %v2536 = vpop.f32.mrf.mxu0
      %v2537 = vpop.f32.mrf.mxu0
      %v2538 = vadd.f32 %v2077, %v2537
      %v2539 = vpop.f32.mrf.mxu0
      %2540 = vmatprep.mubr.bf16.mxu0 0
      %2541 = vmatmul.mubr.bf16.gmra.mxu0 %v2315
      %v2542 = vpop.f32.mrf.mxu0
      %v2543 = vadd.f32 %v2082, %v2542
      %v2544 = vpop.f32.mrf.mxu0
      %v2545 = vpop.f32.mrf.mxu0
      %v2546 = vadd.f32 %v2085, %v2545
      %v2547 = vpop.f32.mrf.mxu0
      %2548 = vmatprep.mubr.bf16.mxu0 0
      %2549 = vmatmul.mubr.bf16.gmra.mxu0 %v2324
      %v2550 = vpop.f32.mrf.mxu0
      %v2551 = vadd.f32 %v2090, %v2550
      %v2552 = vpop.f32.mrf.mxu0
      %v2553 = vpop.f32.mrf.mxu0
      %v2554 = vadd.f32 %v2093, %v2553
      %v2555 = vpop.f32.mrf.mxu0
      %2556 = vmatprep.mubr.bf16.mxu0 0
      %2557 = vmatmul.mubr.bf16.gmra.mxu0 %v2333
      %v2558 = vpop.f32.mrf.mxu0
      %v2559 = vadd.f32 %v2098, %v2558
      %v2560 = vpop.f32.mrf.mxu0
      %v2561 = vpop.f32.mrf.mxu0
      %v2562 = vadd.f32 %v2101, %v2561
      %v2563 = vpop.f32.mrf.mxu0
      %2564 = vmatprep.mubr.bf16.mxu0 0
      %2565 = vmatmul.mubr.bf16.gmra.mxu0 %v2342
      %v2566 = vpop.f32.mrf.mxu0
      %v2567 = vadd.f32 %v2106, %v2566
      %v2568 = vpop.f32.mrf.mxu0
      %v2569 = vpop.f32.mrf.mxu0
      %v2570 = vadd.f32 %v2109, %v2569
      %v2571 = vpop.f32.mrf.mxu0
      %2572 = vmatprep.mubr.bf16.mxu0 0
      %2573 = vmatmul.mubr.bf16.gmra.mxu0 %v2351
      %v2574 = vpop.f32.mrf.mxu0
      %v2575 = vadd.f32 %v2114, %v2574
      %v2576 = vpop.f32.mrf.mxu0
      %v2577 = vpop.f32.mrf.mxu0
      %v2578 = vadd.f32 %v2117, %v2577
      %v2579 = vpop.f32.mrf.mxu0
      %2580 = vmatprep.mubr.bf16.mxu0 0
      %2581 = vmatmul.mubr.bf16.gmra.mxu0 %v2360
      %v2582 = vpop.f32.mrf.mxu0
      %v2583 = vadd.f32 %v2122, %v2582
      %v2584 = vpop.f32.mrf.mxu0
      %v2585 = vpop.f32.mrf.mxu0
      %v2586 = vadd.f32 %v2125, %v2585
      %v2587 = vpop.f32.mrf.mxu0
      %2588 = vmatprep.mubr.bf16.mxu0 0
      %2589 = vmatmul.mubr.bf16.gmra.mxu0 %v2369
      %v2590 = vpop.f32.mrf.mxu0
      %v2591 = vadd.f32 %v2130, %v2590
      %v2592 = vpop.f32.mrf.mxu0
      %v2593 = vpop.f32.mrf.mxu0
      %v2594 = vadd.f32 %v2133, %v2593
      %v2595 = vpop.f32.mrf.mxu0
      %2596 = vmatprep.mubr.bf16.mxu0 0
      %2597 = vmatmul.mubr.bf16.gmra.mxu0 %v2378
      %v2598 = vpop.f32.mrf.mxu0
      %v2599 = vadd.f32 %v2138, %v2598
      %v2600 = vpop.f32.mrf.mxu0
      %v2601 = vpop.f32.mrf.mxu0
      %v2602 = vadd.f32 %v2141, %v2601
      %v2603 = vpop.f32.mrf.mxu0
      %2604 = vmatprep.mubr.bf16.mxu0 0
      %2605 = vmatmul.mubr.bf16.gmra.mxu0 %v2387
      %v2606 = vpop.f32.mrf.mxu0
      %v2607 = vadd.f32 %v2146, %v2606
      %v2608 = vpop.f32.mrf.mxu0
      %v2609 = vpop.f32.mrf.mxu0
      %v2610 = vadd.f32 %v2149, %v2609
      %v2611 = vpop.f32.mrf.mxu0
      %2612 = vdwg.mxu0
      %v2613 = vld [vmem:[#allocation2 + $0x4] sm:$0xf]
      %v2614 = vld [vmem:[#allocation2 + $0x8] sm:$0xf]
      %v2615 = vld [vmem:[#allocation2 + $0xc] sm:$0xf]
      %v2616 = vld [vmem:[#allocation2 + $0x10] sm:$0xf]
      %v2617 = vld [vmem:[#allocation2 + $0x14] sm:$0xf]
      %v2618 = vld [vmem:[#allocation2 + $0x18] sm:$0xf]
      %v2619 = vld [vmem:[#allocation2 + $0x1c] sm:$0xf]
      %v2620 = vld [vmem:[#allocation2 + $0x20] sm:$0xf]
      %v2621 = vld [vmem:[#allocation2 + $0x24] sm:$0xf]
      %v2622 = vld [vmem:[#allocation2 + $0x28] sm:$0xf]
      %v2623 = vld [vmem:[#allocation2 + $0x2c] sm:$0xf]
      %v2624 = vld [vmem:[#allocation2 + $0x30] sm:$0xf]
      %v2625 = vld [vmem:[#allocation2 + $0x34] sm:$0xf]
      %v2626 = vld [vmem:[#allocation2 + $0x38] sm:$0xf]
      %v2627 = vld [vmem:[#allocation2 + $0x3c] sm:$0xf]
      %v2628 = vld [vmem:[#allocation2 + $0x40] sm:$0xf]
      %v2629 = vld [vmem:[#allocation2 + $0x44] sm:$0xf]
      %v2630 = vld [vmem:[#allocation2 + $0x48] sm:$0xf]
      %v2631 = vld [vmem:[#allocation2 + $0x4c] sm:$0xf]
      %v2632 = vld [vmem:[#allocation2 + $0x50] sm:$0xf]
      %v2633 = vld [vmem:[#allocation2 + $0x54] sm:$0xf]
      %v2634 = vld [vmem:[#allocation2 + $0x58] sm:$0xf]
      %v2635 = vld [vmem:[#allocation2 + $0x5c] sm:$0xf]
      %v2636 = vld [vmem:[#allocation2 + $0x60] sm:$0xf]
      %v2637 = vld [vmem:[#allocation2 + $0x64] sm:$0xf]
      %v2638 = vld [vmem:[#allocation2 + $0x68] sm:$0xf]
      %v2639 = vld [vmem:[#allocation2 + $0x6c] sm:$0xf]
      %v2640 = vld [vmem:[#allocation2 + $0x70] sm:$0xf]
      %v2641 = vld [vmem:[#allocation2 + $0x74] sm:$0xf]
      %v2642 = vld [vmem:[#allocation2 + $0x78] sm:$0xf]
      %v2643 = vld [vmem:[#allocation2 + $0x7c] sm:$0xf]
      %v2644 = vld [vmem:[#allocation2 + $0x80] sm:$0xf]
      %v2645 = vld [vmem:[#allocation2 + $0x84] sm:$0x1]
      %2647 = vset.pattern.permute.xlu0 0
      %2648 = vperm.xlu0 %2647, %v978
      %v2649 = vpop.permute.xlu0 %2648
      %v2652 = vunpack.c.l.s4 839922192
      %v2653 = vunpack.c.0.s8 %v2652
      %v2654 = vlaneseq
      %v2655 = vshrl.u32 %v2654, 7
      %v2656 = vsub.s32 %v2653, %v2655
      %v2657 = vrot.slane %v2649, %v2656
      %2659 = vset.pattern.permute.xlu0 0
      %2660 = vperm.xlu0 %2659, %v979
      %v2661 = vpop.permute.xlu0 %2660
      %v2664 = vunpack.c.l.s4 839922192
      %v2665 = vunpack.c.0.s8 %v2664
      %v2666 = vlaneseq
      %v2667 = vshrl.u32 %v2666, 7
      %v2668 = vsub.s32 %v2665, %v2667
      %v2669 = vrot.slane %v2661, %v2668
      %2671 = vset.pattern.permute.xlu0 0
      %2672 = vperm.xlu0 %2671, %v980
      %v2673 = vpop.permute.xlu0 %2672
      %v2676 = vunpack.c.l.s4 839922192
      %v2677 = vunpack.c.0.s8 %v2676
      %v2678 = vlaneseq
      %v2679 = vshrl.u32 %v2678, 7
      %v2680 = vsub.s32 %v2677, %v2679
      %v2681 = vrot.slane %v2673, %v2680
      %2683 = vset.pattern.permute.xlu0 0
      %2684 = vperm.xlu0 %2683, %v981
      %v2685 = vpop.permute.xlu0 %2684
      %v2688 = vunpack.c.l.s4 839922192
      %v2689 = vunpack.c.0.s8 %v2688
      %v2690 = vlaneseq
      %v2691 = vshrl.u32 %v2690, 7
      %v2692 = vsub.s32 %v2689, %v2691
      %v2693 = vrot.slane %v2685, %v2692
      %2695 = vset.pattern.permute.xlu0 0
      %2696 = vperm.xlu0 %2695, %v982
      %v2697 = vpop.permute.xlu0 %2696
      %v2700 = vunpack.c.l.s4 839922192
      %v2701 = vunpack.c.0.s8 %v2700
      %v2702 = vlaneseq
      %v2703 = vshrl.u32 %v2702, 7
      %v2704 = vsub.s32 %v2701, %v2703
      %v2705 = vrot.slane %v2697, %v2704
      %2707 = vset.pattern.permute.xlu0 0
      %2708 = vperm.xlu0 %2707, %v983
      %v2709 = vpop.permute.xlu0 %2708
      %v2712 = vunpack.c.l.s4 839922192
      %v2713 = vunpack.c.0.s8 %v2712
      %v2714 = vlaneseq
      %v2715 = vshrl.u32 %v2714, 7
      %v2716 = vsub.s32 %v2713, %v2715
      %v2717 = vrot.slane %v2709, %v2716
      %2719 = vset.pattern.permute.xlu0 0
      %2720 = vperm.xlu0 %2719, %v984
      %v2721 = vpop.permute.xlu0 %2720
      %v2724 = vunpack.c.l.s4 839922192
      %v2725 = vunpack.c.0.s8 %v2724
      %v2726 = vlaneseq
      %v2727 = vshrl.u32 %v2726, 7
      %v2728 = vsub.s32 %v2725, %v2727
      %v2729 = vrot.slane %v2721, %v2728
      %2731 = vset.pattern.permute.xlu0 0
      %2732 = vperm.xlu0 %2731, %v985
      %v2733 = vpop.permute.xlu0 %2732
      %v2736 = vunpack.c.l.s4 839922192
      %v2737 = vunpack.c.0.s8 %v2736
      %v2738 = vlaneseq
      %v2739 = vshrl.u32 %v2738, 7
      %v2740 = vsub.s32 %v2737, %v2739
      %v2741 = vrot.slane %v2733, %v2740
      %2743 = vset.pattern.permute.xlu0 0
      %2744 = vperm.xlu0 %2743, %v986
      %v2745 = vpop.permute.xlu0 %2744
      %v2748 = vunpack.c.l.s4 839922192
      %v2749 = vunpack.c.0.s8 %v2748
      %v2750 = vlaneseq
      %v2751 = vshrl.u32 %v2750, 7
      %v2752 = vsub.s32 %v2749, %v2751
      %v2753 = vrot.slane %v2745, %v2752
      %2755 = vset.pattern.permute.xlu0 0
      %2756 = vperm.xlu0 %2755, %v987
      %v2757 = vpop.permute.xlu0 %2756
      %v2760 = vunpack.c.l.s4 839922192
      %v2761 = vunpack.c.0.s8 %v2760
      %v2762 = vlaneseq
      %v2763 = vshrl.u32 %v2762, 7
      %v2764 = vsub.s32 %v2761, %v2763
      %v2765 = vrot.slane %v2757, %v2764
      %2767 = vset.pattern.permute.xlu0 0
      %2768 = vperm.xlu0 %2767, %v988
      %v2769 = vpop.permute.xlu0 %2768
      %v2772 = vunpack.c.l.s4 839922192
      %v2773 = vunpack.c.0.s8 %v2772
      %v2774 = vlaneseq
      %v2775 = vshrl.u32 %v2774, 7
      %v2776 = vsub.s32 %v2773, %v2775
      %v2777 = vrot.slane %v2769, %v2776
      %2779 = vset.pattern.permute.xlu0 0
      %2780 = vperm.xlu0 %2779, %v989
      %v2781 = vpop.permute.xlu0 %2780
      %v2784 = vunpack.c.l.s4 839922192
      %v2785 = vunpack.c.0.s8 %v2784
      %v2786 = vlaneseq
      %v2787 = vshrl.u32 %v2786, 7
      %v2788 = vsub.s32 %v2785, %v2787
      %v2789 = vrot.slane %v2781, %v2788
      %2791 = vset.pattern.permute.xlu0 0
      %2792 = vperm.xlu0 %2791, %v990
      %v2793 = vpop.permute.xlu0 %2792
      %v2796 = vunpack.c.l.s4 839922192
      %v2797 = vunpack.c.0.s8 %v2796
      %v2798 = vlaneseq
      %v2799 = vshrl.u32 %v2798, 7
      %v2800 = vsub.s32 %v2797, %v2799
      %v2801 = vrot.slane %v2793, %v2800
      %2803 = vset.pattern.permute.xlu0 0
      %2804 = vperm.xlu0 %2803, %v991
      %v2805 = vpop.permute.xlu0 %2804
      %v2808 = vunpack.c.l.s4 839922192
      %v2809 = vunpack.c.0.s8 %v2808
      %v2810 = vlaneseq
      %v2811 = vshrl.u32 %v2810, 7
      %v2812 = vsub.s32 %v2809, %v2811
      %v2813 = vrot.slane %v2805, %v2812
      %2815 = vset.pattern.permute.xlu0 0
      %2816 = vperm.xlu0 %2815, %v992
      %v2817 = vpop.permute.xlu0 %2816
      %v2820 = vunpack.c.l.s4 839922192
      %v2821 = vunpack.c.0.s8 %v2820
      %v2822 = vlaneseq
      %v2823 = vshrl.u32 %v2822, 7
      %v2824 = vsub.s32 %v2821, %v2823
      %v2825 = vrot.slane %v2817, %v2824
      %2827 = vset.pattern.permute.xlu0 0
      %2828 = vperm.xlu0 %2827, %v993
      %v2829 = vpop.permute.xlu0 %2828
      %v2832 = vunpack.c.l.s4 839922192
      %v2833 = vunpack.c.0.s8 %v2832
      %v2834 = vlaneseq
      %v2835 = vshrl.u32 %v2834, 7
      %v2836 = vsub.s32 %v2833, %v2835
      %v2837 = vrot.slane %v2829, %v2836
      %2839 = vset.pattern.permute.xlu0 0
      %2840 = vperm.xlu0 %2839, %v994
      %v2841 = vpop.permute.xlu0 %2840
      %v2844 = vunpack.c.l.s4 839922192
      %v2845 = vunpack.c.0.s8 %v2844
      %v2846 = vlaneseq
      %v2847 = vshrl.u32 %v2846, 7
      %v2848 = vsub.s32 %v2845, %v2847
      %v2849 = vrot.slane %v2841, %v2848
      %2851 = vset.pattern.permute.xlu0 0
      %2852 = vperm.xlu0 %2851, %v995
      %v2853 = vpop.permute.xlu0 %2852
      %v2856 = vunpack.c.l.s4 839922192
      %v2857 = vunpack.c.0.s8 %v2856
      %v2858 = vlaneseq
      %v2859 = vshrl.u32 %v2858, 7
      %v2860 = vsub.s32 %v2857, %v2859
      %v2861 = vrot.slane %v2853, %v2860
      %2863 = vset.pattern.permute.xlu0 0
      %2864 = vperm.xlu0 %2863, %v996
      %v2865 = vpop.permute.xlu0 %2864
      %v2868 = vunpack.c.l.s4 839922192
      %v2869 = vunpack.c.0.s8 %v2868
      %v2870 = vlaneseq
      %v2871 = vshrl.u32 %v2870, 7
      %v2872 = vsub.s32 %v2869, %v2871
      %v2873 = vrot.slane %v2865, %v2872
      %2875 = vset.pattern.permute.xlu0 0
      %2876 = vperm.xlu0 %2875, %v997
      %v2877 = vpop.permute.xlu0 %2876
      %v2880 = vunpack.c.l.s4 839922192
      %v2881 = vunpack.c.0.s8 %v2880
      %v2882 = vlaneseq
      %v2883 = vshrl.u32 %v2882, 7
      %v2884 = vsub.s32 %v2881, %v2883
      %v2885 = vrot.slane %v2877, %v2884
      %2887 = vset.pattern.permute.xlu0 0
      %2888 = vperm.xlu0 %2887, %v998
      %v2889 = vpop.permute.xlu0 %2888
      %v2892 = vunpack.c.l.s4 839922192
      %v2893 = vunpack.c.0.s8 %v2892
      %v2894 = vlaneseq
      %v2895 = vshrl.u32 %v2894, 7
      %v2896 = vsub.s32 %v2893, %v2895
      %v2897 = vrot.slane %v2889, %v2896
      %2899 = vset.pattern.permute.xlu0 0
      %2900 = vperm.xlu0 %2899, %v999
      %v2901 = vpop.permute.xlu0 %2900
      %v2904 = vunpack.c.l.s4 839922192
      %v2905 = vunpack.c.0.s8 %v2904
      %v2906 = vlaneseq
      %v2907 = vshrl.u32 %v2906, 7
      %v2908 = vsub.s32 %v2905, %v2907
      %v2909 = vrot.slane %v2901, %v2908
      %2911 = vset.pattern.permute.xlu0 0
      %2912 = vperm.xlu0 %2911, %v1000
      %v2913 = vpop.permute.xlu0 %2912
      %v2916 = vunpack.c.l.s4 839922192
      %v2917 = vunpack.c.0.s8 %v2916
      %v2918 = vlaneseq
      %v2919 = vshrl.u32 %v2918, 7
      %v2920 = vsub.s32 %v2917, %v2919
      %v2921 = vrot.slane %v2913, %v2920
      %2923 = vset.pattern.permute.xlu0 0
      %2924 = vperm.xlu0 %2923, %v1001
      %v2925 = vpop.permute.xlu0 %2924
      %v2928 = vunpack.c.l.s4 839922192
      %v2929 = vunpack.c.0.s8 %v2928
      %v2930 = vlaneseq
      %v2931 = vshrl.u32 %v2930, 7
      %v2932 = vsub.s32 %v2929, %v2931
      %v2933 = vrot.slane %v2925, %v2932
      %2935 = vset.pattern.permute.xlu0 0
      %2936 = vperm.xlu0 %2935, %v1002
      %v2937 = vpop.permute.xlu0 %2936
      %v2940 = vunpack.c.l.s4 839922192
      %v2941 = vunpack.c.0.s8 %v2940
      %v2942 = vlaneseq
      %v2943 = vshrl.u32 %v2942, 7
      %v2944 = vsub.s32 %v2941, %v2943
      %v2945 = vrot.slane %v2937, %v2944
      %2947 = vset.pattern.permute.xlu0 0
      %2948 = vperm.xlu0 %2947, %v1003
      %v2949 = vpop.permute.xlu0 %2948
      %v2952 = vunpack.c.l.s4 839922192
      %v2953 = vunpack.c.0.s8 %v2952
      %v2954 = vlaneseq
      %v2955 = vshrl.u32 %v2954, 7
      %v2956 = vsub.s32 %v2953, %v2955
      %v2957 = vrot.slane %v2949, %v2956
      %2959 = vset.pattern.permute.xlu0 0
      %2960 = vperm.xlu0 %2959, %v1004
      %v2961 = vpop.permute.xlu0 %2960
      %v2964 = vunpack.c.l.s4 839922192
      %v2965 = vunpack.c.0.s8 %v2964
      %v2966 = vlaneseq
      %v2967 = vshrl.u32 %v2966, 7
      %v2968 = vsub.s32 %v2965, %v2967
      %v2969 = vrot.slane %v2961, %v2968
      %2971 = vset.pattern.permute.xlu0 0
      %2972 = vperm.xlu0 %2971, %v1005
      %v2973 = vpop.permute.xlu0 %2972
      %v2976 = vunpack.c.l.s4 839922192
      %v2977 = vunpack.c.0.s8 %v2976
      %v2978 = vlaneseq
      %v2979 = vshrl.u32 %v2978, 7
      %v2980 = vsub.s32 %v2977, %v2979
      %v2981 = vrot.slane %v2973, %v2980
      %2983 = vset.pattern.permute.xlu0 0
      %2984 = vperm.xlu0 %2983, %v1006
      %v2985 = vpop.permute.xlu0 %2984
      %v2988 = vunpack.c.l.s4 839922192
      %v2989 = vunpack.c.0.s8 %v2988
      %v2990 = vlaneseq
      %v2991 = vshrl.u32 %v2990, 7
      %v2992 = vsub.s32 %v2989, %v2991
      %v2993 = vrot.slane %v2985, %v2992
      %2995 = vset.pattern.permute.xlu0 0
      %2996 = vperm.xlu0 %2995, %v1007
      %v2997 = vpop.permute.xlu0 %2996
      %v3000 = vunpack.c.l.s4 839922192
      %v3001 = vunpack.c.0.s8 %v3000
      %v3002 = vlaneseq
      %v3003 = vshrl.u32 %v3002, 7
      %v3004 = vsub.s32 %v3001, %v3003
      %v3005 = vrot.slane %v2997, %v3004
      %3007 = vset.pattern.permute.xlu0 0
      %3008 = vperm.xlu0 %3007, %v1008
      %v3009 = vpop.permute.xlu0 %3008
      %v3012 = vunpack.c.l.s4 839922192
      %v3013 = vunpack.c.0.s8 %v3012
      %v3014 = vlaneseq
      %v3015 = vshrl.u32 %v3014, 7
      %v3016 = vsub.s32 %v3013, %v3015
      %v3017 = vrot.slane %v3009, %v3016
      %3019 = vset.pattern.permute.xlu0 0
      %3020 = vperm.xlu0 %3019, %v1009
      %v3021 = vpop.permute.xlu0 %3020
      %v3024 = vunpack.c.l.s4 839922192
      %v3025 = vunpack.c.0.s8 %v3024
      %v3026 = vlaneseq
      %v3027 = vshrl.u32 %v3026, 7
      %v3028 = vsub.s32 %v3025, %v3027
      %v3029 = vrot.slane %v3021, %v3028
      %vm3030 = vsmask.f32 256
      %vm3031 = vsmask.f32 4368
      %vm3032 = vmor %vm3030, %vm3031
      %v3034 = vshrl.u32 %v2657, 16
      %v3036 = vrot.slane %v3034, 7
      %v3037 = vshll.u32 %v2657, 16
      %v3039 = vor.u32 %v3036, %v3037
      %v3040 = vrot.slane %v3036, 4
      %v3042 = vshrl.u32 %v2669, 16
      %v3044 = vrot.slane %v3042, 7
      %v3045 = vshll.u32 %v2669, 16
      %v3047 = vor.u32 %v3044, %v3045
      %v3048 = vsel %vm3032, %v3040, %v3047
      %v3049 = vrot.slane %v3044, 4
      %v3051 = vshrl.u32 %v2681, 16
      %v3053 = vrot.slane %v3051, 7
      %v3054 = vshll.u32 %v2681, 16
      %v3056 = vor.u32 %v3053, %v3054
      %v3057 = vsel %vm3032, %v3049, %v3056
      %v3058 = vrot.slane %v3053, 4
      %v3060 = vshrl.u32 %v2693, 16
      %v3062 = vrot.slane %v3060, 7
      %v3063 = vshll.u32 %v2693, 16
      %v3065 = vor.u32 %v3062, %v3063
      %v3066 = vsel %vm3032, %v3058, %v3065
      %v3067 = vrot.slane %v3062, 4
      %v3069 = vshrl.u32 %v2705, 16
      %v3071 = vrot.slane %v3069, 7
      %v3072 = vshll.u32 %v2705, 16
      %v3074 = vor.u32 %v3071, %v3072
      %v3075 = vsel %vm3032, %v3067, %v3074
      %v3076 = vrot.slane %v3071, 4
      %v3078 = vshrl.u32 %v2717, 16
      %v3080 = vrot.slane %v3078, 7
      %v3081 = vshll.u32 %v2717, 16
      %v3083 = vor.u32 %v3080, %v3081
      %v3084 = vsel %vm3032, %v3076, %v3083
      %v3085 = vrot.slane %v3080, 4
      %v3087 = vshrl.u32 %v2729, 16
      %v3089 = vrot.slane %v3087, 7
      %v3090 = vshll.u32 %v2729, 16
      %v3092 = vor.u32 %v3089, %v3090
      %v3093 = vsel %vm3032, %v3085, %v3092
      %v3094 = vrot.slane %v3089, 4
      %v3096 = vshrl.u32 %v2741, 16
      %v3098 = vrot.slane %v3096, 7
      %v3099 = vshll.u32 %v2741, 16
      %v3101 = vor.u32 %v3098, %v3099
      %v3102 = vsel %vm3032, %v3094, %v3101
      %v3103 = vrot.slane %v3098, 4
      %v3105 = vshrl.u32 %v2753, 16
      %v3107 = vrot.slane %v3105, 7
      %v3108 = vshll.u32 %v2753, 16
      %v3110 = vor.u32 %v3107, %v3108
      %v3111 = vsel %vm3032, %v3103, %v3110
      %v3112 = vrot.slane %v3107, 4
      %v3114 = vshrl.u32 %v2765, 16
      %v3116 = vrot.slane %v3114, 7
      %v3117 = vshll.u32 %v2765, 16
      %v3119 = vor.u32 %v3116, %v3117
      %v3120 = vsel %vm3032, %v3112, %v3119
      %v3121 = vrot.slane %v3116, 4
      %v3123 = vshrl.u32 %v2777, 16
      %v3125 = vrot.slane %v3123, 7
      %v3126 = vshll.u32 %v2777, 16
      %v3128 = vor.u32 %v3125, %v3126
      %v3129 = vsel %vm3032, %v3121, %v3128
      %v3130 = vrot.slane %v3125, 4
      %v3132 = vshrl.u32 %v2789, 16
      %v3134 = vrot.slane %v3132, 7
      %v3135 = vshll.u32 %v2789, 16
      %v3137 = vor.u32 %v3134, %v3135
      %v3138 = vsel %vm3032, %v3130, %v3137
      %v3139 = vrot.slane %v3134, 4
      %v3141 = vshrl.u32 %v2801, 16
      %v3143 = vrot.slane %v3141, 7
      %v3144 = vshll.u32 %v2801, 16
      %v3146 = vor.u32 %v3143, %v3144
      %v3147 = vsel %vm3032, %v3139, %v3146
      %v3148 = vrot.slane %v3143, 4
      %v3150 = vshrl.u32 %v2813, 16
      %v3152 = vrot.slane %v3150, 7
      %v3153 = vshll.u32 %v2813, 16
      %v3155 = vor.u32 %v3152, %v3153
      %v3156 = vsel %vm3032, %v3148, %v3155
      %v3157 = vrot.slane %v3152, 4
      %v3159 = vshrl.u32 %v2825, 16
      %v3161 = vrot.slane %v3159, 7
      %v3162 = vshll.u32 %v2825, 16
      %v3164 = vor.u32 %v3161, %v3162
      %v3165 = vsel %vm3032, %v3157, %v3164
      %v3166 = vrot.slane %v3161, 4
      %v3168 = vshrl.u32 %v2837, 16
      %v3170 = vrot.slane %v3168, 7
      %v3171 = vshll.u32 %v2837, 16
      %v3173 = vor.u32 %v3170, %v3171
      %v3174 = vsel %vm3032, %v3166, %v3173
      %v3175 = vrot.slane %v3170, 4
      %v3177 = vshrl.u32 %v2849, 16
      %v3179 = vrot.slane %v3177, 7
      %v3180 = vshll.u32 %v2849, 16
      %v3182 = vor.u32 %v3179, %v3180
      %v3183 = vsel %vm3032, %v3175, %v3182
      %v3184 = vrot.slane %v3179, 4
      %v3186 = vshrl.u32 %v2861, 16
      %v3188 = vrot.slane %v3186, 7
      %v3189 = vshll.u32 %v2861, 16
      %v3191 = vor.u32 %v3188, %v3189
      %v3192 = vsel %vm3032, %v3184, %v3191
      %v3193 = vrot.slane %v3188, 4
      %v3195 = vshrl.u32 %v2873, 16
      %v3197 = vrot.slane %v3195, 7
      %v3198 = vshll.u32 %v2873, 16
      %v3200 = vor.u32 %v3197, %v3198
      %v3201 = vsel %vm3032, %v3193, %v3200
      %v3202 = vrot.slane %v3197, 4
      %v3204 = vshrl.u32 %v2885, 16
      %v3206 = vrot.slane %v3204, 7
      %v3207 = vshll.u32 %v2885, 16
      %v3209 = vor.u32 %v3206, %v3207
      %v3210 = vsel %vm3032, %v3202, %v3209
      %v3211 = vrot.slane %v3206, 4
      %v3213 = vshrl.u32 %v2897, 16
      %v3215 = vrot.slane %v3213, 7
      %v3216 = vshll.u32 %v2897, 16
      %v3218 = vor.u32 %v3215, %v3216
      %v3219 = vsel %vm3032, %v3211, %v3218
      %v3220 = vrot.slane %v3215, 4
      %v3222 = vshrl.u32 %v2909, 16
      %v3224 = vrot.slane %v3222, 7
      %v3225 = vshll.u32 %v2909, 16
      %v3227 = vor.u32 %v3224, %v3225
      %v3228 = vsel %vm3032, %v3220, %v3227
      %v3229 = vrot.slane %v3224, 4
      %v3231 = vshrl.u32 %v2921, 16
      %v3233 = vrot.slane %v3231, 7
      %v3234 = vshll.u32 %v2921, 16
      %v3236 = vor.u32 %v3233, %v3234
      %v3237 = vsel %vm3032, %v3229, %v3236
      %v3238 = vrot.slane %v3233, 4
      %v3240 = vshrl.u32 %v2933, 16
      %v3242 = vrot.slane %v3240, 7
      %v3243 = vshll.u32 %v2933, 16
      %v3245 = vor.u32 %v3242, %v3243
      %v3246 = vsel %vm3032, %v3238, %v3245
      %v3247 = vrot.slane %v3242, 4
      %v3249 = vshrl.u32 %v2945, 16
      %v3251 = vrot.slane %v3249, 7
      %v3252 = vshll.u32 %v2945, 16
      %v3254 = vor.u32 %v3251, %v3252
      %v3255 = vsel %vm3032, %v3247, %v3254
      %v3256 = vrot.slane %v3251, 4
      %v3258 = vshrl.u32 %v2957, 16
      %v3260 = vrot.slane %v3258, 7
      %v3261 = vshll.u32 %v2957, 16
      %v3263 = vor.u32 %v3260, %v3261
      %v3264 = vsel %vm3032, %v3256, %v3263
      %v3265 = vrot.slane %v3260, 4
      %v3267 = vshrl.u32 %v2969, 16
      %v3269 = vrot.slane %v3267, 7
      %v3270 = vshll.u32 %v2969, 16
      %v3272 = vor.u32 %v3269, %v3270
      %v3273 = vsel %vm3032, %v3265, %v3272
      %v3274 = vrot.slane %v3269, 4
      %v3276 = vshrl.u32 %v2981, 16
      %v3278 = vrot.slane %v3276, 7
      %v3279 = vshll.u32 %v2981, 16
      %v3281 = vor.u32 %v3278, %v3279
      %v3282 = vsel %vm3032, %v3274, %v3281
      %v3283 = vrot.slane %v3278, 4
      %v3285 = vshrl.u32 %v2993, 16
      %v3287 = vrot.slane %v3285, 7
      %v3288 = vshll.u32 %v2993, 16
      %v3290 = vor.u32 %v3287, %v3288
      %v3291 = vsel %vm3032, %v3283, %v3290
      %v3292 = vrot.slane %v3287, 4
      %v3294 = vshrl.u32 %v3005, 16
      %v3296 = vrot.slane %v3294, 7
      %v3297 = vshll.u32 %v3005, 16
      %v3299 = vor.u32 %v3296, %v3297
      %v3300 = vsel %vm3032, %v3292, %v3299
      %v3301 = vrot.slane %v3296, 4
      %v3303 = vshrl.u32 %v3017, 16
      %v3305 = vrot.slane %v3303, 7
      %v3306 = vshll.u32 %v3017, 16
      %v3308 = vor.u32 %v3305, %v3306
      %v3309 = vsel %vm3032, %v3301, %v3308
      %v3310 = vrot.slane %v3305, 4
      %v3312 = vshrl.u32 %v3029, 16
      %v3314 = vrot.slane %v3312, 7
      %v3315 = vshll.u32 %v3029, 16
      %v3317 = vor.u32 %v3314, %v3315
      %v3318 = vsel %vm3032, %v3310, %v3317
      %v3319 = vrot.slane %v3314, 4
      %v3353 = vmul.bf16 %v2613, %v3039
      %v3354 = vmul.bf16 %v2614, %v3048
      %v3355 = vmul.bf16 %v2615, %v3057
      %v3356 = vmul.bf16 %v2616, %v3066
      %v3357 = vmul.bf16 %v2617, %v3075
      %v3358 = vmul.bf16 %v2618, %v3084
      %v3359 = vmul.bf16 %v2619, %v3093
      %v3360 = vmul.bf16 %v2620, %v3102
      %v3361 = vmul.bf16 %v2621, %v3111
      %v3362 = vmul.bf16 %v2622, %v3120
      %v3363 = vmul.bf16 %v2623, %v3129
      %v3364 = vmul.bf16 %v2624, %v3138
      %v3365 = vmul.bf16 %v2625, %v3147
      %v3366 = vmul.bf16 %v2626, %v3156
      %v3367 = vmul.bf16 %v2627, %v3165
      %v3368 = vmul.bf16 %v2628, %v3174
      %v3369 = vmul.bf16 %v2629, %v3183
      %v3370 = vmul.bf16 %v2630, %v3192
      %v3371 = vmul.bf16 %v2631, %v3201
      %v3372 = vmul.bf16 %v2632, %v3210
      %v3373 = vmul.bf16 %v2633, %v3219
      %v3374 = vmul.bf16 %v2634, %v3228
      %v3375 = vmul.bf16 %v2635, %v3237
      %v3376 = vmul.bf16 %v2636, %v3246
      %v3377 = vmul.bf16 %v2637, %v3255
      %v3378 = vmul.bf16 %v2638, %v3264
      %v3379 = vmul.bf16 %v2639, %v3273
      %v3380 = vmul.bf16 %v2640, %v3282
      %v3381 = vmul.bf16 %v2641, %v3291
      %v3382 = vmul.bf16 %v2642, %v3300
      %v3383 = vmul.bf16 %v2643, %v3309
      %v3384 = vmul.bf16 %v2644, %v3318
      %v3385 = vmul.bf16 %v2645, %v3319
      %v3386 = vld [vmem:[%s5 + $0x80] sm:$0xf]
      %v3387 = vld [vmem:[%s5 + $0x84] sm:$0xf]
      %v3388 = vld [vmem:[%s5 + $0x88] sm:$0xf]
      %v3389 = vld [vmem:[%s5 + $0x8c] sm:$0xf]
      %v3390 = vld [vmem:[%s5 + $0x90] sm:$0xf]
      %v3391 = vld [vmem:[%s5 + $0x94] sm:$0xf]
      %v3392 = vld [vmem:[%s5 + $0x98] sm:$0xf]
      %v3393 = vld [vmem:[%s5 + $0x9c] sm:$0xf]
      %v3394 = vld [vmem:[%s5 + $0xa0] sm:$0xf]
      %v3395 = vld [vmem:[%s5 + $0xa4] sm:$0xf]
      %v3396 = vld [vmem:[%s5 + $0xa8] sm:$0xf]
      %v3397 = vld [vmem:[%s5 + $0xac] sm:$0xf]
      %v3398 = vld [vmem:[%s5 + $0xb0] sm:$0xf]
      %v3399 = vld [vmem:[%s5 + $0xb4] sm:$0xf]
      %v3400 = vld [vmem:[%s5 + $0xb8] sm:$0xf]
      %v3401 = vld [vmem:[%s5 + $0xbc] sm:$0xf]
      %v3435 = vunpack.c.l.b16 %v3353
      %v3436 = vunpack.c.l.b16 %v3354
      %v3437 = vunpack.c.l.b16 %v3355
      %v3438 = vunpack.c.l.b16 %v3356
      %v3439 = vunpack.c.l.b16 %v3357
      %v3440 = vunpack.c.l.b16 %v3358
      %v3441 = vunpack.c.l.b16 %v3359
      %v3442 = vunpack.c.l.b16 %v3360
      %v3443 = vunpack.c.l.b16 %v3361
      %v3444 = vunpack.c.l.b16 %v3362
      %v3445 = vunpack.c.l.b16 %v3363
      %v3446 = vunpack.c.l.b16 %v3364
      %v3447 = vunpack.c.l.b16 %v3365
      %v3448 = vunpack.c.l.b16 %v3366
      %v3449 = vunpack.c.l.b16 %v3367
      %v3450 = vunpack.c.l.b16 %v3368
      %v3451 = vunpack.c.l.b16 %v3369
      %v3452 = vunpack.c.l.b16 %v3370
      %v3453 = vunpack.c.l.b16 %v3371
      %v3454 = vunpack.c.l.b16 %v3372
      %v3455 = vunpack.c.l.b16 %v3373
      %v3456 = vunpack.c.l.b16 %v3374
      %v3457 = vunpack.c.l.b16 %v3375
      %v3458 = vunpack.c.l.b16 %v3376
      %v3459 = vunpack.c.l.b16 %v3377
      %v3460 = vunpack.c.l.b16 %v3378
      %v3461 = vunpack.c.l.b16 %v3379
      %v3462 = vunpack.c.l.b16 %v3380
      %v3463 = vunpack.c.l.b16 %v3381
      %v3464 = vunpack.c.l.b16 %v3382
      %v3465 = vunpack.c.l.b16 %v3383
      %v3466 = vunpack.c.l.b16 %v3384
      %v3467 = vunpack.c.l.b16 %v3385
      %v3468 = vpack.c.b16 %v3436, %v3435
      %v3469 = vpack.c.b16 %v3438, %v3437
      %v3470 = vpack.c.b16 %v3440, %v3439
      %v3471 = vpack.c.b16 %v3442, %v3441
      %v3472 = vpack.c.b16 %v3444, %v3443
      %v3473 = vpack.c.b16 %v3446, %v3445
      %v3474 = vpack.c.b16 %v3448, %v3447
      %v3475 = vpack.c.b16 %v3450, %v3449
      %v3476 = vpack.c.b16 %v3452, %v3451
      %v3477 = vpack.c.b16 %v3454, %v3453
      %v3478 = vpack.c.b16 %v3456, %v3455
      %v3479 = vpack.c.b16 %v3458, %v3457
      %v3480 = vpack.c.b16 %v3460, %v3459
      %v3481 = vpack.c.b16 %v3462, %v3461
      %v3482 = vpack.c.b16 %v3464, %v3463
      %v3483 = vpack.c.b16 %v3466, %v3465
      %v3484 = vpack.c.b16 %v3467, %v3467
      %vm3485 = vsmask.f32 7424
      %v3487 = vshrl.u32 %v3468, 16
      %v3489 = vshll.u32 %v3468, 16
      %v3491 = vrot.slane %v3489, 1
      %v3492 = vor.u32 %v3487, %v3491
      %v3494 = vshll.u32 %v3469, 16
      %v3496 = vrot.slane %v3494, 1
      %v3497 = vsel %vm3485, %v3492, %v3496
      %v3498 = vshrl.u32 %v3469, 16
      %v3500 = vor.u32 %v3498, %v3496
      %v3502 = vshll.u32 %v3470, 16
      %v3504 = vrot.slane %v3502, 1
      %v3505 = vsel %vm3485, %v3500, %v3504
      %v3506 = vshrl.u32 %v3470, 16
      %v3508 = vor.u32 %v3506, %v3504
      %v3510 = vshll.u32 %v3471, 16
      %v3512 = vrot.slane %v3510, 1
      %v3513 = vsel %vm3485, %v3508, %v3512
      %v3514 = vshrl.u32 %v3471, 16
      %v3516 = vor.u32 %v3514, %v3512
      %v3518 = vshll.u32 %v3472, 16
      %v3520 = vrot.slane %v3518, 1
      %v3521 = vsel %vm3485, %v3516, %v3520
      %v3522 = vshrl.u32 %v3472, 16
      %v3524 = vor.u32 %v3522, %v3520
      %v3526 = vshll.u32 %v3473, 16
      %v3528 = vrot.slane %v3526, 1
      %v3529 = vsel %vm3485, %v3524, %v3528
      %v3530 = vshrl.u32 %v3473, 16
      %v3532 = vor.u32 %v3530, %v3528
      %v3534 = vshll.u32 %v3474, 16
      %v3536 = vrot.slane %v3534, 1
      %v3537 = vsel %vm3485, %v3532, %v3536
      %v3538 = vshrl.u32 %v3474, 16
      %v3540 = vor.u32 %v3538, %v3536
      %v3542 = vshll.u32 %v3475, 16
      %v3544 = vrot.slane %v3542, 1
      %v3545 = vsel %vm3485, %v3540, %v3544
      %v3546 = vshrl.u32 %v3475, 16
      %v3548 = vor.u32 %v3546, %v3544
      %v3550 = vshll.u32 %v3476, 16
      %v3552 = vrot.slane %v3550, 1
      %v3553 = vsel %vm3485, %v3548, %v3552
      %v3554 = vshrl.u32 %v3476, 16
      %v3556 = vor.u32 %v3554, %v3552
      %v3558 = vshll.u32 %v3477, 16
      %v3560 = vrot.slane %v3558, 1
      %v3561 = vsel %vm3485, %v3556, %v3560
      %v3562 = vshrl.u32 %v3477, 16
      %v3564 = vor.u32 %v3562, %v3560
      %v3566 = vshll.u32 %v3478, 16
      %v3568 = vrot.slane %v3566, 1
      %v3569 = vsel %vm3485, %v3564, %v3568
      %v3570 = vshrl.u32 %v3478, 16
      %v3572 = vor.u32 %v3570, %v3568
      %v3574 = vshll.u32 %v3479, 16
      %v3576 = vrot.slane %v3574, 1
      %v3577 = vsel %vm3485, %v3572, %v3576
      %v3578 = vshrl.u32 %v3479, 16
      %v3580 = vor.u32 %v3578, %v3576
      %v3582 = vshll.u32 %v3480, 16
      %v3584 = vrot.slane %v3582, 1
      %v3585 = vsel %vm3485, %v3580, %v3584
      %v3586 = vshrl.u32 %v3480, 16
      %v3588 = vor.u32 %v3586, %v3584
      %v3590 = vshll.u32 %v3481, 16
      %v3592 = vrot.slane %v3590, 1
      %v3593 = vsel %vm3485, %v3588, %v3592
      %v3594 = vshrl.u32 %v3481, 16
      %v3596 = vor.u32 %v3594, %v3592
      %v3598 = vshll.u32 %v3482, 16
      %v3600 = vrot.slane %v3598, 1
      %v3601 = vsel %vm3485, %v3596, %v3600
      %v3602 = vshrl.u32 %v3482, 16
      %v3604 = vor.u32 %v3602, %v3600
      %v3606 = vshll.u32 %v3483, 16
      %v3608 = vrot.slane %v3606, 1
      %v3609 = vsel %vm3485, %v3604, %v3608
      %v3610 = vshrl.u32 %v3483, 16
      %v3612 = vor.u32 %v3610, %v3608
      %v3614 = vshll.u32 %v3484, 16
      %v3616 = vrot.slane %v3614, 1
      %v3617 = vsel %vm3485, %v3612, %v3616
      %v3650 = vunpack.c.l.b16 %v3386
      %v3651 = vunpack.c.l.b16 %v3387
      %v3652 = vunpack.c.l.b16 %v3388
      %v3653 = vunpack.c.l.b16 %v3389
      %v3654 = vunpack.c.l.b16 %v3390
      %v3655 = vunpack.c.l.b16 %v3391
      %v3656 = vunpack.c.l.b16 %v3392
      %v3657 = vunpack.c.l.b16 %v3393
      %v3658 = vunpack.c.l.b16 %v3394
      %v3659 = vunpack.c.l.b16 %v3395
      %v3660 = vunpack.c.l.b16 %v3396
      %v3661 = vunpack.c.l.b16 %v3397
      %v3662 = vunpack.c.l.b16 %v3398
      %v3663 = vunpack.c.l.b16 %v3399
      %v3664 = vunpack.c.l.b16 %v3400
      %v3665 = vunpack.c.l.b16 %v3401
      %v3666 = vpack.c.b16 %v3651, %v3650
      %v3667 = vpack.c.b16 %v3653, %v3652
      %v3668 = vpack.c.b16 %v3655, %v3654
      %v3669 = vpack.c.b16 %v3657, %v3656
      %v3670 = vpack.c.b16 %v3659, %v3658
      %v3671 = vpack.c.b16 %v3661, %v3660
      %v3672 = vpack.c.b16 %v3663, %v3662
      %v3673 = vpack.c.b16 %v3665, %v3664
      %3682 = vmatprep.subr.bf16.mxu0 0
      %3683 = vmatpush1.bf16.msra.mxu0 %v3673
      %3684 = vmatprep.subr.bf16.mxu0 0
      %3685 = vmatpush1.bf16.msra.mxu0 %v3672
      %3686 = vmatprep.subr.bf16.mxu0 0
      %3687 = vmatpush1.bf16.msra.mxu0 %v3671
      %3688 = vmatprep.subr.bf16.mxu0 0
      %3689 = vmatpush1.bf16.msra.mxu0 %v3670
      %3690 = vmatprep.subr.bf16.mxu0 0
      %3691 = vmatpush1.bf16.msra.mxu0 %v3669
      %3692 = vmatprep.subr.bf16.mxu0 0
      %3693 = vmatpush1.bf16.msra.mxu0 %v3668
      %3694 = vmatprep.subr.bf16.mxu0 0
      %3695 = vmatpush1.bf16.msra.mxu0 %v3667
      %3696 = vmatprep.subr.bf16.mxu0 0
      %3697 = vmatpush1.bf16.msra.mxu0 %v3666
      %3698 = vmatprep.subr.bf16.mxu0 0
      %3699 = vmatpush2.bf16.msra.mxu0 0
      %3700 = vmatprep.subr.bf16.mxu0 0
      %3701 = vmatpush2.bf16.msra.mxu0 0
      %3702 = vmatprep.subr.bf16.mxu0 0
      %3703 = vmatpush2.bf16.msra.mxu0 0
      %3704 = vmatprep.subr.bf16.mxu0 0
      %3705 = vmatpush2.bf16.msra.mxu0 0
      %3706 = vmatprep.subr.bf16.mxu0 0
      %3707 = vmatpush2.bf16.msra.mxu0 0
      %3708 = vmatprep.subr.bf16.mxu0 0
      %3709 = vmatpush2.bf16.msra.mxu0 0
      %3710 = vmatprep.subr.bf16.mxu0 0
      %3711 = vmatpush2.bf16.msra.mxu0 0
      %3712 = vmatprep.subr.bf16.mxu0 0
      %3713 = vmatpush2.bf16.msra.mxu0 0
      %3714 = vmatprep.mubr.bf16.mxu0 0
      %3715 = vmatmul.mubr.bf16.gmra.mxu0 %v3497
      %v3716 = vpop.f32.mrf.mxu0
      %v3717 = vadd.f32 0.0, %v3716
      %v3718 = vpop.f32.mrf.mxu0
      %v3719 = vpop.f32.mrf.mxu0
      %v3720 = vadd.f32 0.0, %v3719
      %v3721 = vpop.f32.mrf.mxu0
      %3722 = vmatprep.mubr.bf16.mxu0 0
      %3723 = vmatmul.mubr.bf16.gmra.mxu0 %v3505
      %v3724 = vpop.f32.mrf.mxu0
      %v3725 = vadd.f32 0.0, %v3724
      %v3726 = vpop.f32.mrf.mxu0
      %v3727 = vpop.f32.mrf.mxu0
      %v3728 = vadd.f32 0.0, %v3727
      %v3729 = vpop.f32.mrf.mxu0
      %3730 = vmatprep.mubr.bf16.mxu0 0
      %3731 = vmatmul.mubr.bf16.gmra.mxu0 %v3513
      %v3732 = vpop.f32.mrf.mxu0
      %v3733 = vadd.f32 0.0, %v3732
      %v3734 = vpop.f32.mrf.mxu0
      %v3735 = vpop.f32.mrf.mxu0
      %v3736 = vadd.f32 0.0, %v3735
      %v3737 = vpop.f32.mrf.mxu0
      %3738 = vmatprep.mubr.bf16.mxu0 0
      %3739 = vmatmul.mubr.bf16.gmra.mxu0 %v3521
      %v3740 = vpop.f32.mrf.mxu0
      %v3741 = vadd.f32 0.0, %v3740
      %v3742 = vpop.f32.mrf.mxu0
      %v3743 = vpop.f32.mrf.mxu0
      %v3744 = vadd.f32 0.0, %v3743
      %v3745 = vpop.f32.mrf.mxu0
      %3746 = vmatprep.mubr.bf16.mxu0 0
      %3747 = vmatmul.mubr.bf16.gmra.mxu0 %v3529
      %v3748 = vpop.f32.mrf.mxu0
      %v3749 = vadd.f32 0.0, %v3748
      %v3750 = vpop.f32.mrf.mxu0
      %v3751 = vpop.f32.mrf.mxu0
      %v3752 = vadd.f32 0.0, %v3751
      %v3753 = vpop.f32.mrf.mxu0
      %3754 = vmatprep.mubr.bf16.mxu0 0
      %3755 = vmatmul.mubr.bf16.gmra.mxu0 %v3537
      %v3756 = vpop.f32.mrf.mxu0
      %v3757 = vadd.f32 0.0, %v3756
      %v3758 = vpop.f32.mrf.mxu0
      %v3759 = vpop.f32.mrf.mxu0
      %v3760 = vadd.f32 0.0, %v3759
      %v3761 = vpop.f32.mrf.mxu0
      %3762 = vmatprep.mubr.bf16.mxu0 0
      %3763 = vmatmul.mubr.bf16.gmra.mxu0 %v3545
      %v3764 = vpop.f32.mrf.mxu0
      %v3765 = vadd.f32 0.0, %v3764
      %v3766 = vpop.f32.mrf.mxu0
      %v3767 = vpop.f32.mrf.mxu0
      %v3768 = vadd.f32 0.0, %v3767
      %v3769 = vpop.f32.mrf.mxu0
      %3770 = vmatprep.mubr.bf16.mxu0 0
      %3771 = vmatmul.mubr.bf16.gmra.mxu0 %v3553
      %v3772 = vpop.f32.mrf.mxu0
      %v3773 = vadd.f32 0.0, %v3772
      %v3774 = vpop.f32.mrf.mxu0
      %v3775 = vpop.f32.mrf.mxu0
      %v3776 = vadd.f32 0.0, %v3775
      %v3777 = vpop.f32.mrf.mxu0
      %3778 = vmatprep.mubr.bf16.mxu0 0
      %3779 = vmatmul.mubr.bf16.gmra.mxu0 %v3561
      %v3780 = vpop.f32.mrf.mxu0
      %v3781 = vadd.f32 0.0, %v3780
      %v3782 = vpop.f32.mrf.mxu0
      %v3783 = vpop.f32.mrf.mxu0
      %v3784 = vadd.f32 0.0, %v3783
      %v3785 = vpop.f32.mrf.mxu0
      %3786 = vmatprep.mubr.bf16.mxu0 0
      %3787 = vmatmul.mubr.bf16.gmra.mxu0 %v3569
      %v3788 = vpop.f32.mrf.mxu0
      %v3789 = vadd.f32 0.0, %v3788
      %v3790 = vpop.f32.mrf.mxu0
      %v3791 = vpop.f32.mrf.mxu0
      %v3792 = vadd.f32 0.0, %v3791
      %v3793 = vpop.f32.mrf.mxu0
      %3794 = vmatprep.mubr.bf16.mxu0 0
      %3795 = vmatmul.mubr.bf16.gmra.mxu0 %v3577
      %v3796 = vpop.f32.mrf.mxu0
      %v3797 = vadd.f32 0.0, %v3796
      %v3798 = vpop.f32.mrf.mxu0
      %v3799 = vpop.f32.mrf.mxu0
      %v3800 = vadd.f32 0.0, %v3799
      %v3801 = vpop.f32.mrf.mxu0
      %3802 = vmatprep.mubr.bf16.mxu0 0
      %3803 = vmatmul.mubr.bf16.gmra.mxu0 %v3585
      %v3804 = vpop.f32.mrf.mxu0
      %v3805 = vadd.f32 0.0, %v3804
      %v3806 = vpop.f32.mrf.mxu0
      %v3807 = vpop.f32.mrf.mxu0
      %v3808 = vadd.f32 0.0, %v3807
      %v3809 = vpop.f32.mrf.mxu0
      %3810 = vmatprep.mubr.bf16.mxu0 0
      %3811 = vmatmul.mubr.bf16.gmra.mxu0 %v3593
      %v3812 = vpop.f32.mrf.mxu0
      %v3813 = vadd.f32 0.0, %v3812
      %v3814 = vpop.f32.mrf.mxu0
      %v3815 = vpop.f32.mrf.mxu0
      %v3816 = vadd.f32 0.0, %v3815
      %v3817 = vpop.f32.mrf.mxu0
      %3818 = vmatprep.mubr.bf16.mxu0 0
      %3819 = vmatmul.mubr.bf16.gmra.mxu0 %v3601
      %v3820 = vpop.f32.mrf.mxu0
      %v3821 = vadd.f32 0.0, %v3820
      %v3822 = vpop.f32.mrf.mxu0
      %v3823 = vpop.f32.mrf.mxu0
      %v3824 = vadd.f32 0.0, %v3823
      %v3825 = vpop.f32.mrf.mxu0
      %3826 = vmatprep.mubr.bf16.mxu0 0
      %3827 = vmatmul.mubr.bf16.gmra.mxu0 %v3609
      %v3828 = vpop.f32.mrf.mxu0
      %v3829 = vadd.f32 0.0, %v3828
      %v3830 = vpop.f32.mrf.mxu0
      %v3831 = vpop.f32.mrf.mxu0
      %v3832 = vadd.f32 0.0, %v3831
      %v3833 = vpop.f32.mrf.mxu0
      %3834 = vmatprep.mubr.bf16.mxu0 0
      %3835 = vmatmul.mubr.bf16.gmra.mxu0 %v3617
      %v3836 = vpop.f32.mrf.mxu0
      %v3837 = vadd.f32 0.0, %v3836
      %v3838 = vpop.f32.mrf.mxu0
      %v3839 = vpop.f32.mrf.mxu0
      %v3840 = vadd.f32 0.0, %v3839
      %v3841 = vpop.f32.mrf.mxu0
      %3842 = vdwg.mxu0
      %v3843 = vadd.f32 %v2487, %v3717
      %v3844 = vadd.f32 %v2490, %v3720
      %v3845 = vadd.f32 %v2495, %v3725
      %v3846 = vadd.f32 %v2498, %v3728
      %v3847 = vadd.f32 %v2503, %v3733
      %v3848 = vadd.f32 %v2506, %v3736
      %v3849 = vadd.f32 %v2511, %v3741
      %v3850 = vadd.f32 %v2514, %v3744
      %v3851 = vadd.f32 %v2519, %v3749
      %v3852 = vadd.f32 %v2522, %v3752
      %v3853 = vadd.f32 %v2527, %v3757
      %v3854 = vadd.f32 %v2530, %v3760
      %v3855 = vadd.f32 %v2535, %v3765
      %v3856 = vadd.f32 %v2538, %v3768
      %v3857 = vadd.f32 %v2543, %v3773
      %v3858 = vadd.f32 %v2546, %v3776
      %v3859 = vadd.f32 %v2551, %v3781
      %v3860 = vadd.f32 %v2554, %v3784
      %v3861 = vadd.f32 %v2559, %v3789
      %v3862 = vadd.f32 %v2562, %v3792
      %v3863 = vadd.f32 %v2567, %v3797
      %v3864 = vadd.f32 %v2570, %v3800
      %v3865 = vadd.f32 %v2575, %v3805
      %v3866 = vadd.f32 %v2578, %v3808
      %v3867 = vadd.f32 %v2583, %v3813
      %v3868 = vadd.f32 %v2586, %v3816
      %v3869 = vadd.f32 %v2591, %v3821
      %v3870 = vadd.f32 %v2594, %v3824
      %v3871 = vadd.f32 %v2599, %v3829
      %v3872 = vadd.f32 %v2602, %v3832
      %v3873 = vadd.f32 %v2607, %v3837
      %v3874 = vadd.f32 %v2610, %v3840
      %v3875 = vld [vmem:[#allocation2 + $0x8] sm:$0x8]
      %v3876 = vld [vmem:[#allocation2 + $0xc] sm:$0xf]
      %v3877 = vld [vmem:[#allocation2 + $0x10] sm:$0xf]
      %v3878 = vld [vmem:[#allocation2 + $0x14] sm:$0xf]
      %v3879 = vld [vmem:[#allocation2 + $0x18] sm:$0xf]
      %v3880 = vld [vmem:[#allocation2 + $0x1c] sm:$0xf]
      %v3881 = vld [vmem:[#allocation2 + $0x20] sm:$0xf]
      %v3882 = vld [vmem:[#allocation2 + $0x24] sm:$0xf]
      %v3883 = vld [vmem:[#allocation2 + $0x28] sm:$0xf]
      %v3884 = vld [vmem:[#allocation2 + $0x2c] sm:$0xf]
      %v3885 = vld [vmem:[#allocation2 + $0x30] sm:$0xf]
      %v3886 = vld [vmem:[#allocation2 + $0x34] sm:$0xf]
      %v3887 = vld [vmem:[#allocation2 + $0x38] sm:$0xf]
      %v3888 = vld [vmem:[#allocation2 + $0x3c] sm:$0xf]
      %v3889 = vld [vmem:[#allocation2 + $0x40] sm:$0xf]
      %v3890 = vld [vmem:[#allocation2 + $0x44] sm:$0xf]
      %v3891 = vld [vmem:[#allocation2 + $0x48] sm:$0xf]
      %v3892 = vld [vmem:[#allocation2 + $0x4c] sm:$0xf]
      %v3893 = vld [vmem:[#allocation2 + $0x50] sm:$0xf]
      %v3894 = vld [vmem:[#allocation2 + $0x54] sm:$0xf]
      %v3895 = vld [vmem:[#allocation2 + $0x58] sm:$0xf]
      %v3896 = vld [vmem:[#allocation2 + $0x5c] sm:$0xf]
      %v3897 = vld [vmem:[#allocation2 + $0x60] sm:$0xf]
      %v3898 = vld [vmem:[#allocation2 + $0x64] sm:$0xf]
      %v3899 = vld [vmem:[#allocation2 + $0x68] sm:$0xf]
      %v3900 = vld [vmem:[#allocation2 + $0x6c] sm:$0xf]
      %v3901 = vld [vmem:[#allocation2 + $0x70] sm:$0xf]
      %v3902 = vld [vmem:[#allocation2 + $0x74] sm:$0xf]
      %v3903 = vld [vmem:[#allocation2 + $0x78] sm:$0xf]
      %v3904 = vld [vmem:[#allocation2 + $0x7c] sm:$0xf]
      %v3905 = vld [vmem:[#allocation2 + $0x80] sm:$0xf]
      %v3906 = vld [vmem:[#allocation2 + $0x84] sm:$0xf]
      %v3907 = vld [vmem:[#allocation2 + $0x88] sm:$0xf]
      %v3908 = vmul.bf16 %v3875, %v1433
      %v3909 = vmul.bf16 %v3876, %v1443
      %v3910 = vmul.bf16 %v3877, %v1453
      %v3911 = vmul.bf16 %v3878, %v1463
      %v3912 = vmul.bf16 %v3879, %v1473
      %v3913 = vmul.bf16 %v3880, %v1483
      %v3914 = vmul.bf16 %v3881, %v1493
      %v3915 = vmul.bf16 %v3882, %v1503
      %v3916 = vmul.bf16 %v3883, %v1513
      %v3917 = vmul.bf16 %v3884, %v1523
      %v3918 = vmul.bf16 %v3885, %v1533
      %v3919 = vmul.bf16 %v3886, %v1543
      %v3920 = vmul.bf16 %v3887, %v1553
      %v3921 = vmul.bf16 %v3888, %v1563
      %v3922 = vmul.bf16 %v3889, %v1573
      %v3923 = vmul.bf16 %v3890, %v1583
      %v3924 = vmul.bf16 %v3891, %v1593
      %v3925 = vmul.bf16 %v3892, %v1603
      %v3926 = vmul.bf16 %v3893, %v1613
      %v3927 = vmul.bf16 %v3894, %v1623
      %v3928 = vmul.bf16 %v3895, %v1633
      %v3929 = vmul.bf16 %v3896, %v1643
      %v3930 = vmul.bf16 %v3897, %v1653
      %v3931 = vmul.bf16 %v3898, %v1663
      %v3932 = vmul.bf16 %v3899, %v1673
      %v3933 = vmul.bf16 %v3900, %v1683
      %v3934 = vmul.bf16 %v3901, %v1693
      %v3935 = vmul.bf16 %v3902, %v1703
      %v3936 = vmul.bf16 %v3903, %v1713
      %v3937 = vmul.bf16 %v3904, %v1723
      %v3938 = vmul.bf16 %v3905, %v1733
      %v3939 = vmul.bf16 %v3906, %v1743
      %v3940 = vmul.bf16 %v3907, %v1748
      %v3941 = vld [vmem:[%s5 + $0xc0] sm:$0xf]
      %v3942 = vld [vmem:[%s5 + $0xc4] sm:$0xf]
      %v3943 = vld [vmem:[%s5 + $0xc8] sm:$0xf]
      %v3944 = vld [vmem:[%s5 + $0xcc] sm:$0xf]
      %v3945 = vld [vmem:[%s5 + $0xd0] sm:$0xf]
      %v3946 = vld [vmem:[%s5 + $0xd4] sm:$0xf]
      %v3947 = vld [vmem:[%s5 + $0xd8] sm:$0xf]
      %v3948 = vld [vmem:[%s5 + $0xdc] sm:$0xf]
      %v3949 = vld [vmem:[%s5 + $0xe0] sm:$0xf]
      %v3950 = vld [vmem:[%s5 + $0xe4] sm:$0xf]
      %v3951 = vld [vmem:[%s5 + $0xe8] sm:$0xf]
      %v3952 = vld [vmem:[%s5 + $0xec] sm:$0xf]
      %v3953 = vld [vmem:[%s5 + $0xf0] sm:$0xf]
      %v3954 = vld [vmem:[%s5 + $0xf4] sm:$0xf]
      %v3955 = vld [vmem:[%s5 + $0xf8] sm:$0xf]
      %v3956 = vld [vmem:[%s5 + $0xfc] sm:$0xf]
      %v3990 = vunpack.c.l.b16 %v3908
      %v3991 = vunpack.c.l.b16 %v3909
      %v3992 = vunpack.c.l.b16 %v3910
      %v3993 = vunpack.c.l.b16 %v3911
      %v3994 = vunpack.c.l.b16 %v3912
      %v3995 = vunpack.c.l.b16 %v3913
      %v3996 = vunpack.c.l.b16 %v3914
      %v3997 = vunpack.c.l.b16 %v3915
      %v3998 = vunpack.c.l.b16 %v3916
      %v3999 = vunpack.c.l.b16 %v3917
      %v4000 = vunpack.c.l.b16 %v3918
      %v4001 = vunpack.c.l.b16 %v3919
      %v4002 = vunpack.c.l.b16 %v3920
      %v4003 = vunpack.c.l.b16 %v3921
      %v4004 = vunpack.c.l.b16 %v3922
      %v4005 = vunpack.c.l.b16 %v3923
      %v4006 = vunpack.c.l.b16 %v3924
      %v4007 = vunpack.c.l.b16 %v3925
      %v4008 = vunpack.c.l.b16 %v3926
      %v4009 = vunpack.c.l.b16 %v3927
      %v4010 = vunpack.c.l.b16 %v3928
      %v4011 = vunpack.c.l.b16 %v3929
      %v4012 = vunpack.c.l.b16 %v3930
      %v4013 = vunpack.c.l.b16 %v3931
      %v4014 = vunpack.c.l.b16 %v3932
      %v4015 = vunpack.c.l.b16 %v3933
      %v4016 = vunpack.c.l.b16 %v3934
      %v4017 = vunpack.c.l.b16 %v3935
      %v4018 = vunpack.c.l.b16 %v3936
      %v4019 = vunpack.c.l.b16 %v3937
      %v4020 = vunpack.c.l.b16 %v3938
      %v4021 = vunpack.c.l.b16 %v3939
      %v4022 = vunpack.c.l.b16 %v3940
      %v4023 = vpack.c.b16 %v3991, %v3990
      %v4024 = vpack.c.b16 %v3993, %v3992
      %v4025 = vpack.c.b16 %v3995, %v3994
      %v4026 = vpack.c.b16 %v3997, %v3996
      %v4027 = vpack.c.b16 %v3999, %v3998
      %v4028 = vpack.c.b16 %v4001, %v4000
      %v4029 = vpack.c.b16 %v4003, %v4002
      %v4030 = vpack.c.b16 %v4005, %v4004
      %v4031 = vpack.c.b16 %v4007, %v4006
      %v4032 = vpack.c.b16 %v4009, %v4008
      %v4033 = vpack.c.b16 %v4011, %v4010
      %v4034 = vpack.c.b16 %v4013, %v4012
      %v4035 = vpack.c.b16 %v4015, %v4014
      %v4036 = vpack.c.b16 %v4017, %v4016
      %v4037 = vpack.c.b16 %v4019, %v4018
      %v4038 = vpack.c.b16 %v4021, %v4020
      %v4039 = vpack.c.b16 %v4022, %v4022
      %v4041 = vshrl.u32 %v4023, 16
      %v4043 = vrot.slane %v4041, 3
      %v4044 = vshll.u32 %v4023, 16
      %v4046 = vrot.slane %v4044, 4
      %v4047 = vor.u32 %v4043, %v4046
      %v4049 = vshrl.u32 %v4024, 16
      %v4051 = vrot.slane %v4049, 3
      %v4052 = vshll.u32 %v4024, 16
      %v4054 = vrot.slane %v4052, 4
      %v4055 = vor.u32 %v4051, %v4054
      %v4056 = vsel %vm2235, %v4047, %v4055
      %v4058 = vshrl.u32 %v4025, 16
      %v4060 = vrot.slane %v4058, 3
      %v4061 = vshll.u32 %v4025, 16
      %v4063 = vrot.slane %v4061, 4
      %v4064 = vor.u32 %v4060, %v4063
      %v4065 = vsel %vm2235, %v4055, %v4064
      %v4067 = vshrl.u32 %v4026, 16
      %v4069 = vrot.slane %v4067, 3
      %v4070 = vshll.u32 %v4026, 16
      %v4072 = vrot.slane %v4070, 4
      %v4073 = vor.u32 %v4069, %v4072
      %v4074 = vsel %vm2235, %v4064, %v4073
      %v4076 = vshrl.u32 %v4027, 16
      %v4078 = vrot.slane %v4076, 3
      %v4079 = vshll.u32 %v4027, 16
      %v4081 = vrot.slane %v4079, 4
      %v4082 = vor.u32 %v4078, %v4081
      %v4083 = vsel %vm2235, %v4073, %v4082
      %v4085 = vshrl.u32 %v4028, 16
      %v4087 = vrot.slane %v4085, 3
      %v4088 = vshll.u32 %v4028, 16
      %v4090 = vrot.slane %v4088, 4
      %v4091 = vor.u32 %v4087, %v4090
      %v4092 = vsel %vm2235, %v4082, %v4091
      %v4094 = vshrl.u32 %v4029, 16
      %v4096 = vrot.slane %v4094, 3
      %v4097 = vshll.u32 %v4029, 16
      %v4099 = vrot.slane %v4097, 4
      %v4100 = vor.u32 %v4096, %v4099
      %v4101 = vsel %vm2235, %v4091, %v4100
      %v4103 = vshrl.u32 %v4030, 16
      %v4105 = vrot.slane %v4103, 3
      %v4106 = vshll.u32 %v4030, 16
      %v4108 = vrot.slane %v4106, 4
      %v4109 = vor.u32 %v4105, %v4108
      %v4110 = vsel %vm2235, %v4100, %v4109
      %v4112 = vshrl.u32 %v4031, 16
      %v4114 = vrot.slane %v4112, 3
      %v4115 = vshll.u32 %v4031, 16
      %v4117 = vrot.slane %v4115, 4
      %v4118 = vor.u32 %v4114, %v4117
      %v4119 = vsel %vm2235, %v4109, %v4118
      %v4121 = vshrl.u32 %v4032, 16
      %v4123 = vrot.slane %v4121, 3
      %v4124 = vshll.u32 %v4032, 16
      %v4126 = vrot.slane %v4124, 4
      %v4127 = vor.u32 %v4123, %v4126
      %v4128 = vsel %vm2235, %v4118, %v4127
      %v4130 = vshrl.u32 %v4033, 16
      %v4132 = vrot.slane %v4130, 3
      %v4133 = vshll.u32 %v4033, 16
      %v4135 = vrot.slane %v4133, 4
      %v4136 = vor.u32 %v4132, %v4135
      %v4137 = vsel %vm2235, %v4127, %v4136
      %v4139 = vshrl.u32 %v4034, 16
      %v4141 = vrot.slane %v4139, 3
      %v4142 = vshll.u32 %v4034, 16
      %v4144 = vrot.slane %v4142, 4
      %v4145 = vor.u32 %v4141, %v4144
      %v4146 = vsel %vm2235, %v4136, %v4145
      %v4148 = vshrl.u32 %v4035, 16
      %v4150 = vrot.slane %v4148, 3
      %v4151 = vshll.u32 %v4035, 16
      %v4153 = vrot.slane %v4151, 4
      %v4154 = vor.u32 %v4150, %v4153
      %v4155 = vsel %vm2235, %v4145, %v4154
      %v4157 = vshrl.u32 %v4036, 16
      %v4159 = vrot.slane %v4157, 3
      %v4160 = vshll.u32 %v4036, 16
      %v4162 = vrot.slane %v4160, 4
      %v4163 = vor.u32 %v4159, %v4162
      %v4164 = vsel %vm2235, %v4154, %v4163
      %v4166 = vshrl.u32 %v4037, 16
      %v4168 = vrot.slane %v4166, 3
      %v4169 = vshll.u32 %v4037, 16
      %v4171 = vrot.slane %v4169, 4
      %v4172 = vor.u32 %v4168, %v4171
      %v4173 = vsel %vm2235, %v4163, %v4172
      %v4175 = vshrl.u32 %v4038, 16
      %v4177 = vrot.slane %v4175, 3
      %v4178 = vshll.u32 %v4038, 16
      %v4180 = vrot.slane %v4178, 4
      %v4181 = vor.u32 %v4177, %v4180
      %v4182 = vsel %vm2235, %v4172, %v4181
      %v4184 = vshrl.u32 %v4039, 16
      %v4186 = vrot.slane %v4184, 3
      %v4187 = vshll.u32 %v4039, 16
      %v4189 = vrot.slane %v4187, 4
      %v4190 = vor.u32 %v4186, %v4189
      %v4191 = vsel %vm2235, %v4181, %v4190
      %v4224 = vunpack.c.l.b16 %v3941
      %v4225 = vunpack.c.l.b16 %v3942
      %v4226 = vunpack.c.l.b16 %v3943
      %v4227 = vunpack.c.l.b16 %v3944
      %v4228 = vunpack.c.l.b16 %v3945
      %v4229 = vunpack.c.l.b16 %v3946
      %v4230 = vunpack.c.l.b16 %v3947
      %v4231 = vunpack.c.l.b16 %v3948
      %v4232 = vunpack.c.l.b16 %v3949
      %v4233 = vunpack.c.l.b16 %v3950
      %v4234 = vunpack.c.l.b16 %v3951
      %v4235 = vunpack.c.l.b16 %v3952
      %v4236 = vunpack.c.l.b16 %v3953
      %v4237 = vunpack.c.l.b16 %v3954
      %v4238 = vunpack.c.l.b16 %v3955
      %v4239 = vunpack.c.l.b16 %v3956
      %v4240 = vpack.c.b16 %v4225, %v4224
      %v4241 = vpack.c.b16 %v4227, %v4226
      %v4242 = vpack.c.b16 %v4229, %v4228
      %v4243 = vpack.c.b16 %v4231, %v4230
      %v4244 = vpack.c.b16 %v4233, %v4232
      %v4245 = vpack.c.b16 %v4235, %v4234
      %v4246 = vpack.c.b16 %v4237, %v4236
      %v4247 = vpack.c.b16 %v4239, %v4238
      %4256 = vmatprep.subr.bf16.mxu0 0
      %4257 = vmatpush1.bf16.msra.mxu0 %v4247
      %4258 = vmatprep.subr.bf16.mxu0 0
      %4259 = vmatpush1.bf16.msra.mxu0 %v4246
      %4260 = vmatprep.subr.bf16.mxu0 0
      %4261 = vmatpush1.bf16.msra.mxu0 %v4245
      %4262 = vmatprep.subr.bf16.mxu0 0
      %4263 = vmatpush1.bf16.msra.mxu0 %v4244
      %4264 = vmatprep.subr.bf16.mxu0 0
      %4265 = vmatpush1.bf16.msra.mxu0 %v4243
      %4266 = vmatprep.subr.bf16.mxu0 0
      %4267 = vmatpush1.bf16.msra.mxu0 %v4242
      %4268 = vmatprep.subr.bf16.mxu0 0
      %4269 = vmatpush1.bf16.msra.mxu0 %v4241
      %4270 = vmatprep.subr.bf16.mxu0 0
      %4271 = vmatpush1.bf16.msra.mxu0 %v4240
      %4272 = vmatprep.subr.bf16.mxu0 0
      %4273 = vmatpush2.bf16.msra.mxu0 0
      %4274 = vmatprep.subr.bf16.mxu0 0
      %4275 = vmatpush2.bf16.msra.mxu0 0
      %4276 = vmatprep.subr.bf16.mxu0 0
      %4277 = vmatpush2.bf16.msra.mxu0 0
      %4278 = vmatprep.subr.bf16.mxu0 0
      %4279 = vmatpush2.bf16.msra.mxu0 0
      %4280 = vmatprep.subr.bf16.mxu0 0
      %4281 = vmatpush2.bf16.msra.mxu0 0
      %4282 = vmatprep.subr.bf16.mxu0 0
      %4283 = vmatpush2.bf16.msra.mxu0 0
      %4284 = vmatprep.subr.bf16.mxu0 0
      %4285 = vmatpush2.bf16.msra.mxu0 0
      %4286 = vmatprep.subr.bf16.mxu0 0
      %4287 = vmatpush2.bf16.msra.mxu0 0
      %4288 = vmatprep.mubr.bf16.mxu0 0
      %4289 = vmatmul.mubr.bf16.gmra.mxu0 %v4056
      %v4290 = vpop.f32.mrf.mxu0
      %v4291 = vadd.f32 0.0, %v4290
      %v4292 = vpop.f32.mrf.mxu0
      %v4293 = vpop.f32.mrf.mxu0
      %v4294 = vadd.f32 0.0, %v4293
      %v4295 = vpop.f32.mrf.mxu0
      %4296 = vmatprep.mubr.bf16.mxu0 0
      %4297 = vmatmul.mubr.bf16.gmra.mxu0 %v4065
      %v4298 = vpop.f32.mrf.mxu0
      %v4299 = vadd.f32 0.0, %v4298
      %v4300 = vpop.f32.mrf.mxu0
      %v4301 = vpop.f32.mrf.mxu0
      %v4302 = vadd.f32 0.0, %v4301
      %v4303 = vpop.f32.mrf.mxu0
      %4304 = vmatprep.mubr.bf16.mxu0 0
      %4305 = vmatmul.mubr.bf16.gmra.mxu0 %v4074
      %v4306 = vpop.f32.mrf.mxu0
      %v4307 = vadd.f32 0.0, %v4306
      %v4308 = vpop.f32.mrf.mxu0
      %v4309 = vpop.f32.mrf.mxu0
      %v4310 = vadd.f32 0.0, %v4309
      %v4311 = vpop.f32.mrf.mxu0
      %4312 = vmatprep.mubr.bf16.mxu0 0
      %4313 = vmatmul.mubr.bf16.gmra.mxu0 %v4083
      %v4314 = vpop.f32.mrf.mxu0
      %v4315 = vadd.f32 0.0, %v4314
      %v4316 = vpop.f32.mrf.mxu0
      %v4317 = vpop.f32.mrf.mxu0
      %v4318 = vadd.f32 0.0, %v4317
      %v4319 = vpop.f32.mrf.mxu0
      %4320 = vmatprep.mubr.bf16.mxu0 0
      %4321 = vmatmul.mubr.bf16.gmra.mxu0 %v4092
      %v4322 = vpop.f32.mrf.mxu0
      %v4323 = vadd.f32 0.0, %v4322
      %v4324 = vpop.f32.mrf.mxu0
      %v4325 = vpop.f32.mrf.mxu0
      %v4326 = vadd.f32 0.0, %v4325
      %v4327 = vpop.f32.mrf.mxu0
      %4328 = vmatprep.mubr.bf16.mxu0 0
      %4329 = vmatmul.mubr.bf16.gmra.mxu0 %v4101
      %v4330 = vpop.f32.mrf.mxu0
      %v4331 = vadd.f32 0.0, %v4330
      %v4332 = vpop.f32.mrf.mxu0
      %v4333 = vpop.f32.mrf.mxu0
      %v4334 = vadd.f32 0.0, %v4333
      %v4335 = vpop.f32.mrf.mxu0
      %4336 = vmatprep.mubr.bf16.mxu0 0
      %4337 = vmatmul.mubr.bf16.gmra.mxu0 %v4110
      %v4338 = vpop.f32.mrf.mxu0
      %v4339 = vadd.f32 0.0, %v4338
      %v4340 = vpop.f32.mrf.mxu0
      %v4341 = vpop.f32.mrf.mxu0
      %v4342 = vadd.f32 0.0, %v4341
      %v4343 = vpop.f32.mrf.mxu0
      %4344 = vmatprep.mubr.bf16.mxu0 0
      %4345 = vmatmul.mubr.bf16.gmra.mxu0 %v4119
      %v4346 = vpop.f32.mrf.mxu0
      %v4347 = vadd.f32 0.0, %v4346
      %v4348 = vpop.f32.mrf.mxu0
      %v4349 = vpop.f32.mrf.mxu0
      %v4350 = vadd.f32 0.0, %v4349
      %v4351 = vpop.f32.mrf.mxu0
      %4352 = vmatprep.mubr.bf16.mxu0 0
      %4353 = vmatmul.mubr.bf16.gmra.mxu0 %v4128
      %v4354 = vpop.f32.mrf.mxu0
      %v4355 = vadd.f32 0.0, %v4354
      %v4356 = vpop.f32.mrf.mxu0
      %v4357 = vpop.f32.mrf.mxu0
      %v4358 = vadd.f32 0.0, %v4357
      %v4359 = vpop.f32.mrf.mxu0
      %4360 = vmatprep.mubr.bf16.mxu0 0
      %4361 = vmatmul.mubr.bf16.gmra.mxu0 %v4137
      %v4362 = vpop.f32.mrf.mxu0
      %v4363 = vadd.f32 0.0, %v4362
      %v4364 = vpop.f32.mrf.mxu0
      %v4365 = vpop.f32.mrf.mxu0
      %v4366 = vadd.f32 0.0, %v4365
      %v4367 = vpop.f32.mrf.mxu0
      %4368 = vmatprep.mubr.bf16.mxu0 0
      %4369 = vmatmul.mubr.bf16.gmra.mxu0 %v4146
      %v4370 = vpop.f32.mrf.mxu0
      %v4371 = vadd.f32 0.0, %v4370
      %v4372 = vpop.f32.mrf.mxu0
      %v4373 = vpop.f32.mrf.mxu0
      %v4374 = vadd.f32 0.0, %v4373
      %v4375 = vpop.f32.mrf.mxu0
      %4376 = vmatprep.mubr.bf16.mxu0 0
      %4377 = vmatmul.mubr.bf16.gmra.mxu0 %v4155
      %v4378 = vpop.f32.mrf.mxu0
      %v4379 = vadd.f32 0.0, %v4378
      %v4380 = vpop.f32.mrf.mxu0
      %v4381 = vpop.f32.mrf.mxu0
      %v4382 = vadd.f32 0.0, %v4381
      %v4383 = vpop.f32.mrf.mxu0
      %4384 = vmatprep.mubr.bf16.mxu0 0
      %4385 = vmatmul.mubr.bf16.gmra.mxu0 %v4164
      %v4386 = vpop.f32.mrf.mxu0
      %v4387 = vadd.f32 0.0, %v4386
      %v4388 = vpop.f32.mrf.mxu0
      %v4389 = vpop.f32.mrf.mxu0
      %v4390 = vadd.f32 0.0, %v4389
      %v4391 = vpop.f32.mrf.mxu0
      %4392 = vmatprep.mubr.bf16.mxu0 0
      %4393 = vmatmul.mubr.bf16.gmra.mxu0 %v4173
      %v4394 = vpop.f32.mrf.mxu0
      %v4395 = vadd.f32 0.0, %v4394
      %v4396 = vpop.f32.mrf.mxu0
      %v4397 = vpop.f32.mrf.mxu0
      %v4398 = vadd.f32 0.0, %v4397
      %v4399 = vpop.f32.mrf.mxu0
      %4400 = vmatprep.mubr.bf16.mxu0 0
      %4401 = vmatmul.mubr.bf16.gmra.mxu0 %v4182
      %v4402 = vpop.f32.mrf.mxu0
      %v4403 = vadd.f32 0.0, %v4402
      %v4404 = vpop.f32.mrf.mxu0
      %v4405 = vpop.f32.mrf.mxu0
      %v4406 = vadd.f32 0.0, %v4405
      %v4407 = vpop.f32.mrf.mxu0
      %4408 = vmatprep.mubr.bf16.mxu0 0
      %4409 = vmatmul.mubr.bf16.gmra.mxu0 %v4191
      %v4410 = vpop.f32.mrf.mxu0
      %v4411 = vadd.f32 0.0, %v4410
      %v4412 = vpop.f32.mrf.mxu0
      %v4413 = vpop.f32.mrf.mxu0
      %v4414 = vadd.f32 0.0, %v4413
      %v4415 = vpop.f32.mrf.mxu0
      %4416 = vdwg.mxu0
      %v4417 = vadd.f32 %v3843, %v4291
      %v4418 = vadd.f32 %v3844, %v4294
      %v4419 = vadd.f32 %v3845, %v4299
      %v4420 = vadd.f32 %v3846, %v4302
      %v4421 = vadd.f32 %v3847, %v4307
      %v4422 = vadd.f32 %v3848, %v4310
      %v4423 = vadd.f32 %v3849, %v4315
      %v4424 = vadd.f32 %v3850, %v4318
      %v4425 = vadd.f32 %v3851, %v4323
      %v4426 = vadd.f32 %v3852, %v4326
      %v4427 = vadd.f32 %v3853, %v4331
      %v4428 = vadd.f32 %v3854, %v4334
      %v4429 = vadd.f32 %v3855, %v4339
      %v4430 = vadd.f32 %v3856, %v4342
      %v4431 = vadd.f32 %v3857, %v4347
      %v4432 = vadd.f32 %v3858, %v4350
      %v4433 = vadd.f32 %v3859, %v4355
      %v4434 = vadd.f32 %v3860, %v4358
      %v4435 = vadd.f32 %v3861, %v4363
      %v4436 = vadd.f32 %v3862, %v4366
      %v4437 = vadd.f32 %v3863, %v4371
      %v4438 = vadd.f32 %v3864, %v4374
      %v4439 = vadd.f32 %v3865, %v4379
      %v4440 = vadd.f32 %v3866, %v4382
      %v4441 = vadd.f32 %v3867, %v4387
      %v4442 = vadd.f32 %v3868, %v4390
      %v4443 = vadd.f32 %v3869, %v4395
      %v4444 = vadd.f32 %v3870, %v4398
      %v4445 = vadd.f32 %v3871, %v4403
      %v4446 = vadd.f32 %v3872, %v4406
      %v4447 = vadd.f32 %v3873, %v4411
      %v4448 = vadd.f32 %v3874, %v4414
      %v4449 = vld [vmem:[%s5 + $0x100] sm:$0xf]
      %v4450 = vld [vmem:[%s5 + $0x104] sm:$0xf]
      %v4451 = vld [vmem:[%s5 + $0x108] sm:$0xf]
      %v4452 = vld [vmem:[%s5 + $0x10c] sm:$0xf]
      %v4453 = vld [vmem:[%s5 + $0x110] sm:$0xf]
      %v4454 = vld [vmem:[%s5 + $0x114] sm:$0xf]
      %v4455 = vld [vmem:[%s5 + $0x118] sm:$0xf]
      %v4456 = vld [vmem:[%s5 + $0x11c] sm:$0xf]
      %v4457 = vld [vmem:[%s5 + $0x120] sm:$0xf]
      %v4458 = vld [vmem:[%s5 + $0x124] sm:$0xf]
      %v4459 = vld [vmem:[%s5 + $0x128] sm:$0xf]
      %v4460 = vld [vmem:[%s5 + $0x12c] sm:$0xf]
      %v4461 = vld [vmem:[%s5 + $0x130] sm:$0xf]
      %v4462 = vld [vmem:[%s5 + $0x134] sm:$0xf]
      %v4463 = vld [vmem:[%s5 + $0x138] sm:$0xf]
      %v4464 = vld [vmem:[%s5 + $0x13c] sm:$0xf]
      %v4497 = vunpack.c.l.b16 %v3876
      %v4498 = vunpack.c.l.b16 %v3877
      %v4499 = vunpack.c.l.b16 %v3878
      %v4500 = vunpack.c.l.b16 %v3879
      %v4501 = vunpack.c.l.b16 %v3880
      %v4502 = vunpack.c.l.b16 %v3881
      %v4503 = vunpack.c.l.b16 %v3882
      %v4504 = vunpack.c.l.b16 %v3883
      %v4505 = vunpack.c.l.b16 %v3884
      %v4506 = vunpack.c.l.b16 %v3885
      %v4507 = vunpack.c.l.b16 %v3886
      %v4508 = vunpack.c.l.b16 %v3887
      %v4509 = vunpack.c.l.b16 %v3888
      %v4510 = vunpack.c.l.b16 %v3889
      %v4511 = vunpack.c.l.b16 %v3890
      %v4512 = vunpack.c.l.b16 %v3891
      %v4513 = vunpack.c.l.b16 %v3892
      %v4514 = vunpack.c.l.b16 %v3893
      %v4515 = vunpack.c.l.b16 %v3894
      %v4516 = vunpack.c.l.b16 %v3895
      %v4517 = vunpack.c.l.b16 %v3896
      %v4518 = vunpack.c.l.b16 %v3897
      %v4519 = vunpack.c.l.b16 %v3898
      %v4520 = vunpack.c.l.b16 %v3899
      %v4521 = vunpack.c.l.b16 %v3900
      %v4522 = vunpack.c.l.b16 %v3901
      %v4523 = vunpack.c.l.b16 %v3902
      %v4524 = vunpack.c.l.b16 %v3903
      %v4525 = vunpack.c.l.b16 %v3904
      %v4526 = vunpack.c.l.b16 %v3905
      %v4527 = vunpack.c.l.b16 %v3906
      %v4528 = vunpack.c.l.b16 %v3907
      %v4529 = vpack.c.b16 %v4498, %v4497
      %v4530 = vpack.c.b16 %v4500, %v4499
      %v4531 = vpack.c.b16 %v4502, %v4501
      %v4532 = vpack.c.b16 %v4504, %v4503
      %v4533 = vpack.c.b16 %v4506, %v4505
      %v4534 = vpack.c.b16 %v4508, %v4507
      %v4535 = vpack.c.b16 %v4510, %v4509
      %v4536 = vpack.c.b16 %v4512, %v4511
      %v4537 = vpack.c.b16 %v4514, %v4513
      %v4538 = vpack.c.b16 %v4516, %v4515
      %v4539 = vpack.c.b16 %v4518, %v4517
      %v4540 = vpack.c.b16 %v4520, %v4519
      %v4541 = vpack.c.b16 %v4522, %v4521
      %v4542 = vpack.c.b16 %v4524, %v4523
      %v4543 = vpack.c.b16 %v4526, %v4525
      %v4544 = vpack.c.b16 %v4528, %v4527
      %v4577 = vunpack.c.l.b16 %v4449
      %v4578 = vunpack.c.l.b16 %v4450
      %v4579 = vunpack.c.l.b16 %v4451
      %v4580 = vunpack.c.l.b16 %v4452
      %v4581 = vunpack.c.l.b16 %v4453
      %v4582 = vunpack.c.l.b16 %v4454
      %v4583 = vunpack.c.l.b16 %v4455
      %v4584 = vunpack.c.l.b16 %v4456
      %v4585 = vunpack.c.l.b16 %v4457
      %v4586 = vunpack.c.l.b16 %v4458
      %v4587 = vunpack.c.l.b16 %v4459
      %v4588 = vunpack.c.l.b16 %v4460
      %v4589 = vunpack.c.l.b16 %v4461
      %v4590 = vunpack.c.l.b16 %v4462
      %v4591 = vunpack.c.l.b16 %v4463
      %v4592 = vunpack.c.l.b16 %v4464
      %v4593 = vpack.c.b16 %v4578, %v4577
      %v4594 = vpack.c.b16 %v4580, %v4579
      %v4595 = vpack.c.b16 %v4582, %v4581
      %v4596 = vpack.c.b16 %v4584, %v4583
      %v4597 = vpack.c.b16 %v4586, %v4585
      %v4598 = vpack.c.b16 %v4588, %v4587
      %v4599 = vpack.c.b16 %v4590, %v4589
      %v4600 = vpack.c.b16 %v4592, %v4591
      %4609 = vmatprep.subr.bf16.mxu0 0
      %4610 = vmatpush1.bf16.msra.mxu0 %v4600
      %4611 = vmatprep.subr.bf16.mxu0 0
      %4612 = vmatpush1.bf16.msra.mxu0 %v4599
      %4613 = vmatprep.subr.bf16.mxu0 0
      %4614 = vmatpush1.bf16.msra.mxu0 %v4598
      %4615 = vmatprep.subr.bf16.mxu0 0
      %4616 = vmatpush1.bf16.msra.mxu0 %v4597
      %4617 = vmatprep.subr.bf16.mxu0 0
      %4618 = vmatpush1.bf16.msra.mxu0 %v4596
      %4619 = vmatprep.subr.bf16.mxu0 0
      %4620 = vmatpush1.bf16.msra.mxu0 %v4595
      %4621 = vmatprep.subr.bf16.mxu0 0
      %4622 = vmatpush1.bf16.msra.mxu0 %v4594
      %4623 = vmatprep.subr.bf16.mxu0 0
      %4624 = vmatpush1.bf16.msra.mxu0 %v4593
      %4625 = vmatprep.subr.bf16.mxu0 0
      %4626 = vmatpush2.bf16.msra.mxu0 0
      %4627 = vmatprep.subr.bf16.mxu0 0
      %4628 = vmatpush2.bf16.msra.mxu0 0
      %4629 = vmatprep.subr.bf16.mxu0 0
      %4630 = vmatpush2.bf16.msra.mxu0 0
      %4631 = vmatprep.subr.bf16.mxu0 0
      %4632 = vmatpush2.bf16.msra.mxu0 0
      %4633 = vmatprep.subr.bf16.mxu0 0
      %4634 = vmatpush2.bf16.msra.mxu0 0
      %4635 = vmatprep.subr.bf16.mxu0 0
      %4636 = vmatpush2.bf16.msra.mxu0 0
      %4637 = vmatprep.subr.bf16.mxu0 0
      %4638 = vmatpush2.bf16.msra.mxu0 0
      %4639 = vmatprep.subr.bf16.mxu0 0
      %4640 = vmatpush2.bf16.msra.mxu0 0
      %4641 = vmatprep.mubr.bf16.mxu0 0
      %4642 = vmatmul.mubr.bf16.gmra.mxu0 %v4529
      %v4643 = vpop.f32.mrf.mxu0
      %v4644 = vadd.f32 0.0, %v4643
      %v4645 = vpop.f32.mrf.mxu0
      %v4646 = vpop.f32.mrf.mxu0
      %v4647 = vadd.f32 0.0, %v4646
      %v4648 = vpop.f32.mrf.mxu0
      %4649 = vmatprep.mubr.bf16.mxu0 0
      %4650 = vmatmul.mubr.bf16.gmra.mxu0 %v4530
      %v4651 = vpop.f32.mrf.mxu0
      %v4652 = vadd.f32 0.0, %v4651
      %v4653 = vpop.f32.mrf.mxu0
      %v4654 = vpop.f32.mrf.mxu0
      %v4655 = vadd.f32 0.0, %v4654
      %v4656 = vpop.f32.mrf.mxu0
      %4657 = vmatprep.mubr.bf16.mxu0 0
      %4658 = vmatmul.mubr.bf16.gmra.mxu0 %v4531
      %v4659 = vpop.f32.mrf.mxu0
      %v4660 = vadd.f32 0.0, %v4659
      %v4661 = vpop.f32.mrf.mxu0
      %v4662 = vpop.f32.mrf.mxu0
      %v4663 = vadd.f32 0.0, %v4662
      %v4664 = vpop.f32.mrf.mxu0
      %4665 = vmatprep.mubr.bf16.mxu0 0
      %4666 = vmatmul.mubr.bf16.gmra.mxu0 %v4532
      %v4667 = vpop.f32.mrf.mxu0
      %v4668 = vadd.f32 0.0, %v4667
      %v4669 = vpop.f32.mrf.mxu0
      %v4670 = vpop.f32.mrf.mxu0
      %v4671 = vadd.f32 0.0, %v4670
      %v4672 = vpop.f32.mrf.mxu0
      %4673 = vmatprep.mubr.bf16.mxu0 0
      %4674 = vmatmul.mubr.bf16.gmra.mxu0 %v4533
      %v4675 = vpop.f32.mrf.mxu0
      %v4676 = vadd.f32 0.0, %v4675
      %v4677 = vpop.f32.mrf.mxu0
      %v4678 = vpop.f32.mrf.mxu0
      %v4679 = vadd.f32 0.0, %v4678
      %v4680 = vpop.f32.mrf.mxu0
      %4681 = vmatprep.mubr.bf16.mxu0 0
      %4682 = vmatmul.mubr.bf16.gmra.mxu0 %v4534
      %v4683 = vpop.f32.mrf.mxu0
      %v4684 = vadd.f32 0.0, %v4683
      %v4685 = vpop.f32.mrf.mxu0
      %v4686 = vpop.f32.mrf.mxu0
      %v4687 = vadd.f32 0.0, %v4686
      %v4688 = vpop.f32.mrf.mxu0
      %4689 = vmatprep.mubr.bf16.mxu0 0
      %4690 = vmatmul.mubr.bf16.gmra.mxu0 %v4535
      %v4691 = vpop.f32.mrf.mxu0
      %v4692 = vadd.f32 0.0, %v4691
      %v4693 = vpop.f32.mrf.mxu0
      %v4694 = vpop.f32.mrf.mxu0
      %v4695 = vadd.f32 0.0, %v4694
      %v4696 = vpop.f32.mrf.mxu0
      %4697 = vmatprep.mubr.bf16.mxu0 0
      %4698 = vmatmul.mubr.bf16.gmra.mxu0 %v4536
      %v4699 = vpop.f32.mrf.mxu0
      %v4700 = vadd.f32 0.0, %v4699
      %v4701 = vpop.f32.mrf.mxu0
      %v4702 = vpop.f32.mrf.mxu0
      %v4703 = vadd.f32 0.0, %v4702
      %v4704 = vpop.f32.mrf.mxu0
      %4705 = vmatprep.mubr.bf16.mxu0 0
      %4706 = vmatmul.mubr.bf16.gmra.mxu0 %v4537
      %v4707 = vpop.f32.mrf.mxu0
      %v4708 = vadd.f32 0.0, %v4707
      %v4709 = vpop.f32.mrf.mxu0
      %v4710 = vpop.f32.mrf.mxu0
      %v4711 = vadd.f32 0.0, %v4710
      %v4712 = vpop.f32.mrf.mxu0
      %4713 = vmatprep.mubr.bf16.mxu0 0
      %4714 = vmatmul.mubr.bf16.gmra.mxu0 %v4538
      %v4715 = vpop.f32.mrf.mxu0
      %v4716 = vadd.f32 0.0, %v4715
      %v4717 = vpop.f32.mrf.mxu0
      %v4718 = vpop.f32.mrf.mxu0
      %v4719 = vadd.f32 0.0, %v4718
      %v4720 = vpop.f32.mrf.mxu0
      %4721 = vmatprep.mubr.bf16.mxu0 0
      %4722 = vmatmul.mubr.bf16.gmra.mxu0 %v4539
      %v4723 = vpop.f32.mrf.mxu0
      %v4724 = vadd.f32 0.0, %v4723
      %v4725 = vpop.f32.mrf.mxu0
      %v4726 = vpop.f32.mrf.mxu0
      %v4727 = vadd.f32 0.0, %v4726
      %v4728 = vpop.f32.mrf.mxu0
      %4729 = vmatprep.mubr.bf16.mxu0 0
      %4730 = vmatmul.mubr.bf16.gmra.mxu0 %v4540
      %v4731 = vpop.f32.mrf.mxu0
      %v4732 = vadd.f32 0.0, %v4731
      %v4733 = vpop.f32.mrf.mxu0
      %v4734 = vpop.f32.mrf.mxu0
      %v4735 = vadd.f32 0.0, %v4734
      %v4736 = vpop.f32.mrf.mxu0
      %4737 = vmatprep.mubr.bf16.mxu0 0
      %4738 = vmatmul.mubr.bf16.gmra.mxu0 %v4541
      %v4739 = vpop.f32.mrf.mxu0
      %v4740 = vadd.f32 0.0, %v4739
      %v4741 = vpop.f32.mrf.mxu0
      %v4742 = vpop.f32.mrf.mxu0
      %v4743 = vadd.f32 0.0, %v4742
      %v4744 = vpop.f32.mrf.mxu0
      %4745 = vmatprep.mubr.bf16.mxu0 0
      %4746 = vmatmul.mubr.bf16.gmra.mxu0 %v4542
      %v4747 = vpop.f32.mrf.mxu0
      %v4748 = vadd.f32 0.0, %v4747
      %v4749 = vpop.f32.mrf.mxu0
      %v4750 = vpop.f32.mrf.mxu0
      %v4751 = vadd.f32 0.0, %v4750
      %v4752 = vpop.f32.mrf.mxu0
      %4753 = vmatprep.mubr.bf16.mxu0 0
      %4754 = vmatmul.mubr.bf16.gmra.mxu0 %v4543
      %v4755 = vpop.f32.mrf.mxu0
      %v4756 = vadd.f32 0.0, %v4755
      %v4757 = vpop.f32.mrf.mxu0
      %v4758 = vpop.f32.mrf.mxu0
      %v4759 = vadd.f32 0.0, %v4758
      %v4760 = vpop.f32.mrf.mxu0
      %4761 = vmatprep.mubr.bf16.mxu0 0
      %4762 = vmatmul.mubr.bf16.gmra.mxu0 %v4544
      %v4763 = vpop.f32.mrf.mxu0
      %v4764 = vadd.f32 0.0, %v4763
      %v4765 = vpop.f32.mrf.mxu0
      %v4766 = vpop.f32.mrf.mxu0
      %v4767 = vadd.f32 0.0, %v4766
      %v4768 = vpop.f32.mrf.mxu0
      %4769 = vdwg.mxu0
      %v4770 = vadd.f32 %v4417, %v4644
      %v4771 = vadd.f32 %v4418, %v4647
      %v4772 = vadd.f32 %v4419, %v4652
      %v4773 = vadd.f32 %v4420, %v4655
      %v4774 = vadd.f32 %v4421, %v4660
      %v4775 = vadd.f32 %v4422, %v4663
      %v4776 = vadd.f32 %v4423, %v4668
      %v4777 = vadd.f32 %v4424, %v4671
      %v4778 = vadd.f32 %v4425, %v4676
      %v4779 = vadd.f32 %v4426, %v4679
      %v4780 = vadd.f32 %v4427, %v4684
      %v4781 = vadd.f32 %v4428, %v4687
      %v4782 = vadd.f32 %v4429, %v4692
      %v4783 = vadd.f32 %v4430, %v4695
      %v4784 = vadd.f32 %v4431, %v4700
      %v4785 = vadd.f32 %v4432, %v4703
      %v4786 = vadd.f32 %v4433, %v4708
      %v4787 = vadd.f32 %v4434, %v4711
      %v4788 = vadd.f32 %v4435, %v4716
      %v4789 = vadd.f32 %v4436, %v4719
      %v4790 = vadd.f32 %v4437, %v4724
      %v4791 = vadd.f32 %v4438, %v4727
      %v4792 = vadd.f32 %v4439, %v4732
      %v4793 = vadd.f32 %v4440, %v4735
      %v4794 = vadd.f32 %v4441, %v4740
      %v4795 = vadd.f32 %v4442, %v4743
      %v4796 = vadd.f32 %v4443, %v4748
      %v4797 = vadd.f32 %v4444, %v4751
      %v4798 = vadd.f32 %v4445, %v4756
      %v4799 = vadd.f32 %v4446, %v4759
      %v4800 = vadd.f32 %v4447, %v4764
      %v4801 = vadd.f32 %v4448, %v4767
      %v4802 = vld [vmem:[#allocation2 + $0xc] sm:$0xf]
      %v4803 = vld [vmem:[#allocation2 + $0x10] sm:$0xf]
      %v4804 = vld [vmem:[#allocation2 + $0x14] sm:$0xf]
      %v4805 = vld [vmem:[#allocation2 + $0x18] sm:$0xf]
      %v4806 = vld [vmem:[#allocation2 + $0x1c] sm:$0xf]
      %v4807 = vld [vmem:[#allocation2 + $0x20] sm:$0xf]
      %v4808 = vld [vmem:[#allocation2 + $0x24] sm:$0xf]
      %v4809 = vld [vmem:[#allocation2 + $0x28] sm:$0xf]
      %v4810 = vld [vmem:[#allocation2 + $0x2c] sm:$0xf]
      %v4811 = vld [vmem:[#allocation2 + $0x30] sm:$0xf]
      %v4812 = vld [vmem:[#allocation2 + $0x34] sm:$0xf]
      %v4813 = vld [vmem:[#allocation2 + $0x38] sm:$0xf]
      %v4814 = vld [vmem:[#allocation2 + $0x3c] sm:$0xf]
      %v4815 = vld [vmem:[#allocation2 + $0x40] sm:$0xf]
      %v4816 = vld [vmem:[#allocation2 + $0x44] sm:$0xf]
      %v4817 = vld [vmem:[#allocation2 + $0x48] sm:$0xf]
      %v4818 = vld [vmem:[#allocation2 + $0x4c] sm:$0xf]
      %v4819 = vld [vmem:[#allocation2 + $0x50] sm:$0xf]
      %v4820 = vld [vmem:[#allocation2 + $0x54] sm:$0xf]
      %v4821 = vld [vmem:[#allocation2 + $0x58] sm:$0xf]
      %v4822 = vld [vmem:[#allocation2 + $0x5c] sm:$0xf]
      %v4823 = vld [vmem:[#allocation2 + $0x60] sm:$0xf]
      %v4824 = vld [vmem:[#allocation2 + $0x64] sm:$0xf]
      %v4825 = vld [vmem:[#allocation2 + $0x68] sm:$0xf]
      %v4826 = vld [vmem:[#allocation2 + $0x6c] sm:$0xf]
      %v4827 = vld [vmem:[#allocation2 + $0x70] sm:$0xf]
      %v4828 = vld [vmem:[#allocation2 + $0x74] sm:$0xf]
      %v4829 = vld [vmem:[#allocation2 + $0x78] sm:$0xf]
      %v4830 = vld [vmem:[#allocation2 + $0x7c] sm:$0xf]
      %v4831 = vld [vmem:[#allocation2 + $0x80] sm:$0xf]
      %v4832 = vld [vmem:[#allocation2 + $0x84] sm:$0xf]
      %v4833 = vld [vmem:[#allocation2 + $0x88] sm:$0xf]
      %v4834 = vld [vmem:[#allocation2 + $0x8c] sm:$0x1]
      %v4835 = vmul.bf16 %v4802, %v3039
      %v4836 = vmul.bf16 %v4803, %v3048
      %v4837 = vmul.bf16 %v4804, %v3057
      %v4838 = vmul.bf16 %v4805, %v3066
      %v4839 = vmul.bf16 %v4806, %v3075
      %v4840 = vmul.bf16 %v4807, %v3084
      %v4841 = vmul.bf16 %v4808, %v3093
      %v4842 = vmul.bf16 %v4809, %v3102
      %v4843 = vmul.bf16 %v4810, %v3111
      %v4844 = vmul.bf16 %v4811, %v3120
      %v4845 = vmul.bf16 %v4812, %v3129
      %v4846 = vmul.bf16 %v4813, %v3138
      %v4847 = vmul.bf16 %v4814, %v3147
      %v4848 = vmul.bf16 %v4815, %v3156
      %v4849 = vmul.bf16 %v4816, %v3165
      %v4850 = vmul.bf16 %v4817, %v3174
      %v4851 = vmul.bf16 %v4818, %v3183
      %v4852 = vmul.bf16 %v4819, %v3192
      %v4853 = vmul.bf16 %v4820, %v3201
      %v4854 = vmul.bf16 %v4821, %v3210
      %v4855 = vmul.bf16 %v4822, %v3219
      %v4856 = vmul.bf16 %v4823, %v3228
      %v4857 = vmul.bf16 %v4824, %v3237
      %v4858 = vmul.bf16 %v4825, %v3246
      %v4859 = vmul.bf16 %v4826, %v3255
      %v4860 = vmul.bf16 %v4827, %v3264
      %v4861 = vmul.bf16 %v4828, %v3273
      %v4862 = vmul.bf16 %v4829, %v3282
      %v4863 = vmul.bf16 %v4830, %v3291
      %v4864 = vmul.bf16 %v4831, %v3300
      %v4865 = vmul.bf16 %v4832, %v3309
      %v4866 = vmul.bf16 %v4833, %v3318
      %v4867 = vmul.bf16 %v4834, %v3319
      %v4868 = vld [vmem:[%s5 + $0x140] sm:$0xf]
      %v4869 = vld [vmem:[%s5 + $0x144] sm:$0xf]
      %v4870 = vld [vmem:[%s5 + $0x148] sm:$0xf]
      %v4871 = vld [vmem:[%s5 + $0x14c] sm:$0xf]
      %v4872 = vld [vmem:[%s5 + $0x150] sm:$0xf]
      %v4873 = vld [vmem:[%s5 + $0x154] sm:$0xf]
      %v4874 = vld [vmem:[%s5 + $0x158] sm:$0xf]
      %v4875 = vld [vmem:[%s5 + $0x15c] sm:$0xf]
      %v4876 = vld [vmem:[%s5 + $0x160] sm:$0xf]
      %v4877 = vld [vmem:[%s5 + $0x164] sm:$0xf]
      %v4878 = vld [vmem:[%s5 + $0x168] sm:$0xf]
      %v4879 = vld [vmem:[%s5 + $0x16c] sm:$0xf]
      %v4880 = vld [vmem:[%s5 + $0x170] sm:$0xf]
      %v4881 = vld [vmem:[%s5 + $0x174] sm:$0xf]
      %v4882 = vld [vmem:[%s5 + $0x178] sm:$0xf]
      %v4883 = vld [vmem:[%s5 + $0x17c] sm:$0xf]
      %v4917 = vunpack.c.l.b16 %v4835
      %v4918 = vunpack.c.l.b16 %v4836
      %v4919 = vunpack.c.l.b16 %v4837
      %v4920 = vunpack.c.l.b16 %v4838
      %v4921 = vunpack.c.l.b16 %v4839
      %v4922 = vunpack.c.l.b16 %v4840
      %v4923 = vunpack.c.l.b16 %v4841
      %v4924 = vunpack.c.l.b16 %v4842
      %v4925 = vunpack.c.l.b16 %v4843
      %v4926 = vunpack.c.l.b16 %v4844
      %v4927 = vunpack.c.l.b16 %v4845
      %v4928 = vunpack.c.l.b16 %v4846
      %v4929 = vunpack.c.l.b16 %v4847
      %v4930 = vunpack.c.l.b16 %v4848
      %v4931 = vunpack.c.l.b16 %v4849
      %v4932 = vunpack.c.l.b16 %v4850
      %v4933 = vunpack.c.l.b16 %v4851
      %v4934 = vunpack.c.l.b16 %v4852
      %v4935 = vunpack.c.l.b16 %v4853
      %v4936 = vunpack.c.l.b16 %v4854
      %v4937 = vunpack.c.l.b16 %v4855
      %v4938 = vunpack.c.l.b16 %v4856
      %v4939 = vunpack.c.l.b16 %v4857
      %v4940 = vunpack.c.l.b16 %v4858
      %v4941 = vunpack.c.l.b16 %v4859
      %v4942 = vunpack.c.l.b16 %v4860
      %v4943 = vunpack.c.l.b16 %v4861
      %v4944 = vunpack.c.l.b16 %v4862
      %v4945 = vunpack.c.l.b16 %v4863
      %v4946 = vunpack.c.l.b16 %v4864
      %v4947 = vunpack.c.l.b16 %v4865
      %v4948 = vunpack.c.l.b16 %v4866
      %v4949 = vunpack.c.l.b16 %v4867
      %v4950 = vpack.c.b16 %v4918, %v4917
      %v4951 = vpack.c.b16 %v4920, %v4919
      %v4952 = vpack.c.b16 %v4922, %v4921
      %v4953 = vpack.c.b16 %v4924, %v4923
      %v4954 = vpack.c.b16 %v4926, %v4925
      %v4955 = vpack.c.b16 %v4928, %v4927
      %v4956 = vpack.c.b16 %v4930, %v4929
      %v4957 = vpack.c.b16 %v4932, %v4931
      %v4958 = vpack.c.b16 %v4934, %v4933
      %v4959 = vpack.c.b16 %v4936, %v4935
      %v4960 = vpack.c.b16 %v4938, %v4937
      %v4961 = vpack.c.b16 %v4940, %v4939
      %v4962 = vpack.c.b16 %v4942, %v4941
      %v4963 = vpack.c.b16 %v4944, %v4943
      %v4964 = vpack.c.b16 %v4946, %v4945
      %v4965 = vpack.c.b16 %v4948, %v4947
      %v4966 = vpack.c.b16 %v4949, %v4949
      %v4968 = vshrl.u32 %v4950, 16
      %v4970 = vshll.u32 %v4950, 16
      %v4972 = vrot.slane %v4970, 1
      %v4973 = vor.u32 %v4968, %v4972
      %v4975 = vshll.u32 %v4951, 16
      %v4977 = vrot.slane %v4975, 1
      %v4978 = vsel %vm3485, %v4973, %v4977
      %v4979 = vshrl.u32 %v4951, 16
      %v4981 = vor.u32 %v4979, %v4977
      %v4983 = vshll.u32 %v4952, 16
      %v4985 = vrot.slane %v4983, 1
      %v4986 = vsel %vm3485, %v4981, %v4985
      %v4987 = vshrl.u32 %v4952, 16
      %v4989 = vor.u32 %v4987, %v4985
      %v4991 = vshll.u32 %v4953, 16
      %v4993 = vrot.slane %v4991, 1
      %v4994 = vsel %vm3485, %v4989, %v4993
      %v4995 = vshrl.u32 %v4953, 16
      %v4997 = vor.u32 %v4995, %v4993
      %v4999 = vshll.u32 %v4954, 16
      %v5001 = vrot.slane %v4999, 1
      %v5002 = vsel %vm3485, %v4997, %v5001
      %v5003 = vshrl.u32 %v4954, 16
      %v5005 = vor.u32 %v5003, %v5001
      %v5007 = vshll.u32 %v4955, 16
      %v5009 = vrot.slane %v5007, 1
      %v5010 = vsel %vm3485, %v5005, %v5009
      %v5011 = vshrl.u32 %v4955, 16
      %v5013 = vor.u32 %v5011, %v5009
      %v5015 = vshll.u32 %v4956, 16
      %v5017 = vrot.slane %v5015, 1
      %v5018 = vsel %vm3485, %v5013, %v5017
      %v5019 = vshrl.u32 %v4956, 16
      %v5021 = vor.u32 %v5019, %v5017
      %v5023 = vshll.u32 %v4957, 16
      %v5025 = vrot.slane %v5023, 1
      %v5026 = vsel %vm3485, %v5021, %v5025
      %v5027 = vshrl.u32 %v4957, 16
      %v5029 = vor.u32 %v5027, %v5025
      %v5031 = vshll.u32 %v4958, 16
      %v5033 = vrot.slane %v5031, 1
      %v5034 = vsel %vm3485, %v5029, %v5033
      %v5035 = vshrl.u32 %v4958, 16
      %v5037 = vor.u32 %v5035, %v5033
      %v5039 = vshll.u32 %v4959, 16
      %v5041 = vrot.slane %v5039, 1
      %v5042 = vsel %vm3485, %v5037, %v5041
      %v5043 = vshrl.u32 %v4959, 16
      %v5045 = vor.u32 %v5043, %v5041
      %v5047 = vshll.u32 %v4960, 16
      %v5049 = vrot.slane %v5047, 1
      %v5050 = vsel %vm3485, %v5045, %v5049
      %v5051 = vshrl.u32 %v4960, 16
      %v5053 = vor.u32 %v5051, %v5049
      %v5055 = vshll.u32 %v4961, 16
      %v5057 = vrot.slane %v5055, 1
      %v5058 = vsel %vm3485, %v5053, %v5057
      %v5059 = vshrl.u32 %v4961, 16
      %v5061 = vor.u32 %v5059, %v5057
      %v5063 = vshll.u32 %v4962, 16
      %v5065 = vrot.slane %v5063, 1
      %v5066 = vsel %vm3485, %v5061, %v5065
      %v5067 = vshrl.u32 %v4962, 16
      %v5069 = vor.u32 %v5067, %v5065
      %v5071 = vshll.u32 %v4963, 16
      %v5073 = vrot.slane %v5071, 1
      %v5074 = vsel %vm3485, %v5069, %v5073
      %v5075 = vshrl.u32 %v4963, 16
      %v5077 = vor.u32 %v5075, %v5073
      %v5079 = vshll.u32 %v4964, 16
      %v5081 = vrot.slane %v5079, 1
      %v5082 = vsel %vm3485, %v5077, %v5081
      %v5083 = vshrl.u32 %v4964, 16
      %v5085 = vor.u32 %v5083, %v5081
      %v5087 = vshll.u32 %v4965, 16
      %v5089 = vrot.slane %v5087, 1
      %v5090 = vsel %vm3485, %v5085, %v5089
      %v5091 = vshrl.u32 %v4965, 16
      %v5093 = vor.u32 %v5091, %v5089
      %v5095 = vshll.u32 %v4966, 16
      %v5097 = vrot.slane %v5095, 1
      %v5098 = vsel %vm3485, %v5093, %v5097
      %v5131 = vunpack.c.l.b16 %v4868
      %v5132 = vunpack.c.l.b16 %v4869
      %v5133 = vunpack.c.l.b16 %v4870
      %v5134 = vunpack.c.l.b16 %v4871
      %v5135 = vunpack.c.l.b16 %v4872
      %v5136 = vunpack.c.l.b16 %v4873
      %v5137 = vunpack.c.l.b16 %v4874
      %v5138 = vunpack.c.l.b16 %v4875
      %v5139 = vunpack.c.l.b16 %v4876
      %v5140 = vunpack.c.l.b16 %v4877
      %v5141 = vunpack.c.l.b16 %v4878
      %v5142 = vunpack.c.l.b16 %v4879
      %v5143 = vunpack.c.l.b16 %v4880
      %v5144 = vunpack.c.l.b16 %v4881
      %v5145 = vunpack.c.l.b16 %v4882
      %v5146 = vunpack.c.l.b16 %v4883
      %v5147 = vpack.c.b16 %v5132, %v5131
      %v5148 = vpack.c.b16 %v5134, %v5133
      %v5149 = vpack.c.b16 %v5136, %v5135
      %v5150 = vpack.c.b16 %v5138, %v5137
      %v5151 = vpack.c.b16 %v5140, %v5139
      %v5152 = vpack.c.b16 %v5142, %v5141
      %v5153 = vpack.c.b16 %v5144, %v5143
      %v5154 = vpack.c.b16 %v5146, %v5145
      %5163 = vmatprep.subr.bf16.mxu0 0
      %5164 = vmatpush1.bf16.msra.mxu0 %v5154
      %5165 = vmatprep.subr.bf16.mxu0 0
      %5166 = vmatpush1.bf16.msra.mxu0 %v5153
      %5167 = vmatprep.subr.bf16.mxu0 0
      %5168 = vmatpush1.bf16.msra.mxu0 %v5152
      %5169 = vmatprep.subr.bf16.mxu0 0
      %5170 = vmatpush1.bf16.msra.mxu0 %v5151
      %5171 = vmatprep.subr.bf16.mxu0 0
      %5172 = vmatpush1.bf16.msra.mxu0 %v5150
      %5173 = vmatprep.subr.bf16.mxu0 0
      %5174 = vmatpush1.bf16.msra.mxu0 %v5149
      %5175 = vmatprep.subr.bf16.mxu0 0
      %5176 = vmatpush1.bf16.msra.mxu0 %v5148
      %5177 = vmatprep.subr.bf16.mxu0 0
      %5178 = vmatpush1.bf16.msra.mxu0 %v5147
      %5179 = vmatprep.subr.bf16.mxu0 0
      %5180 = vmatpush2.bf16.msra.mxu0 0
      %5181 = vmatprep.subr.bf16.mxu0 0
      %5182 = vmatpush2.bf16.msra.mxu0 0
      %5183 = vmatprep.subr.bf16.mxu0 0
      %5184 = vmatpush2.bf16.msra.mxu0 0
      %5185 = vmatprep.subr.bf16.mxu0 0
      %5186 = vmatpush2.bf16.msra.mxu0 0
      %5187 = vmatprep.subr.bf16.mxu0 0
      %5188 = vmatpush2.bf16.msra.mxu0 0
      %5189 = vmatprep.subr.bf16.mxu0 0
      %5190 = vmatpush2.bf16.msra.mxu0 0
      %5191 = vmatprep.subr.bf16.mxu0 0
      %5192 = vmatpush2.bf16.msra.mxu0 0
      %5193 = vmatprep.subr.bf16.mxu0 0
      %5194 = vmatpush2.bf16.msra.mxu0 0
      %5195 = vmatprep.mubr.bf16.mxu0 0
      %5196 = vmatmul.mubr.bf16.gmra.mxu0 %v4978
      %v5197 = vpop.f32.mrf.mxu0
      %v5198 = vadd.f32 0.0, %v5197
      %v5199 = vpop.f32.mrf.mxu0
      %v5200 = vpop.f32.mrf.mxu0
      %v5201 = vadd.f32 0.0, %v5200
      %v5202 = vpop.f32.mrf.mxu0
      %5203 = vmatprep.mubr.bf16.mxu0 0
      %5204 = vmatmul.mubr.bf16.gmra.mxu0 %v4986
      %v5205 = vpop.f32.mrf.mxu0
      %v5206 = vadd.f32 0.0, %v5205
      %v5207 = vpop.f32.mrf.mxu0
      %v5208 = vpop.f32.mrf.mxu0
      %v5209 = vadd.f32 0.0, %v5208
      %v5210 = vpop.f32.mrf.mxu0
      %5211 = vmatprep.mubr.bf16.mxu0 0
      %5212 = vmatmul.mubr.bf16.gmra.mxu0 %v4994
      %v5213 = vpop.f32.mrf.mxu0
      %v5214 = vadd.f32 0.0, %v5213
      %v5215 = vpop.f32.mrf.mxu0
      %v5216 = vpop.f32.mrf.mxu0
      %v5217 = vadd.f32 0.0, %v5216
      %v5218 = vpop.f32.mrf.mxu0
      %5219 = vmatprep.mubr.bf16.mxu0 0
      %5220 = vmatmul.mubr.bf16.gmra.mxu0 %v5002
      %v5221 = vpop.f32.mrf.mxu0
      %v5222 = vadd.f32 0.0, %v5221
      %v5223 = vpop.f32.mrf.mxu0
      %v5224 = vpop.f32.mrf.mxu0
      %v5225 = vadd.f32 0.0, %v5224
      %v5226 = vpop.f32.mrf.mxu0
      %5227 = vmatprep.mubr.bf16.mxu0 0
      %5228 = vmatmul.mubr.bf16.gmra.mxu0 %v5010
      %v5229 = vpop.f32.mrf.mxu0
      %v5230 = vadd.f32 0.0, %v5229
      %v5231 = vpop.f32.mrf.mxu0
      %v5232 = vpop.f32.mrf.mxu0
      %v5233 = vadd.f32 0.0, %v5232
      %v5234 = vpop.f32.mrf.mxu0
      %5235 = vmatprep.mubr.bf16.mxu0 0
      %5236 = vmatmul.mubr.bf16.gmra.mxu0 %v5018
      %v5237 = vpop.f32.mrf.mxu0
      %v5238 = vadd.f32 0.0, %v5237
      %v5239 = vpop.f32.mrf.mxu0
      %v5240 = vpop.f32.mrf.mxu0
      %v5241 = vadd.f32 0.0, %v5240
      %v5242 = vpop.f32.mrf.mxu0
      %5243 = vmatprep.mubr.bf16.mxu0 0
      %5244 = vmatmul.mubr.bf16.gmra.mxu0 %v5026
      %v5245 = vpop.f32.mrf.mxu0
      %v5246 = vadd.f32 0.0, %v5245
      %v5247 = vpop.f32.mrf.mxu0
      %v5248 = vpop.f32.mrf.mxu0
      %v5249 = vadd.f32 0.0, %v5248
      %v5250 = vpop.f32.mrf.mxu0
      %5251 = vmatprep.mubr.bf16.mxu0 0
      %5252 = vmatmul.mubr.bf16.gmra.mxu0 %v5034
      %v5253 = vpop.f32.mrf.mxu0
      %v5254 = vadd.f32 0.0, %v5253
      %v5255 = vpop.f32.mrf.mxu0
      %v5256 = vpop.f32.mrf.mxu0
      %v5257 = vadd.f32 0.0, %v5256
      %v5258 = vpop.f32.mrf.mxu0
      %5259 = vmatprep.mubr.bf16.mxu0 0
      %5260 = vmatmul.mubr.bf16.gmra.mxu0 %v5042
      %v5261 = vpop.f32.mrf.mxu0
      %v5262 = vadd.f32 0.0, %v5261
      %v5263 = vpop.f32.mrf.mxu0
      %v5264 = vpop.f32.mrf.mxu0
      %v5265 = vadd.f32 0.0, %v5264
      %v5266 = vpop.f32.mrf.mxu0
      %5267 = vmatprep.mubr.bf16.mxu0 0
      %5268 = vmatmul.mubr.bf16.gmra.mxu0 %v5050
      %v5269 = vpop.f32.mrf.mxu0
      %v5270 = vadd.f32 0.0, %v5269
      %v5271 = vpop.f32.mrf.mxu0
      %v5272 = vpop.f32.mrf.mxu0
      %v5273 = vadd.f32 0.0, %v5272
      %v5274 = vpop.f32.mrf.mxu0
      %5275 = vmatprep.mubr.bf16.mxu0 0
      %5276 = vmatmul.mubr.bf16.gmra.mxu0 %v5058
      %v5277 = vpop.f32.mrf.mxu0
      %v5278 = vadd.f32 0.0, %v5277
      %v5279 = vpop.f32.mrf.mxu0
      %v5280 = vpop.f32.mrf.mxu0
      %v5281 = vadd.f32 0.0, %v5280
      %v5282 = vpop.f32.mrf.mxu0
      %5283 = vmatprep.mubr.bf16.mxu0 0
      %5284 = vmatmul.mubr.bf16.gmra.mxu0 %v5066
      %v5285 = vpop.f32.mrf.mxu0
      %v5286 = vadd.f32 0.0, %v5285
      %v5287 = vpop.f32.mrf.mxu0
      %v5288 = vpop.f32.mrf.mxu0
      %v5289 = vadd.f32 0.0, %v5288
      %v5290 = vpop.f32.mrf.mxu0
      %5291 = vmatprep.mubr.bf16.mxu0 0
      %5292 = vmatmul.mubr.bf16.gmra.mxu0 %v5074
      %v5293 = vpop.f32.mrf.mxu0
      %v5294 = vadd.f32 0.0, %v5293
      %v5295 = vpop.f32.mrf.mxu0
      %v5296 = vpop.f32.mrf.mxu0
      %v5297 = vadd.f32 0.0, %v5296
      %v5298 = vpop.f32.mrf.mxu0
      %5299 = vmatprep.mubr.bf16.mxu0 0
      %5300 = vmatmul.mubr.bf16.gmra.mxu0 %v5082
      %v5301 = vpop.f32.mrf.mxu0
      %v5302 = vadd.f32 0.0, %v5301
      %v5303 = vpop.f32.mrf.mxu0
      %v5304 = vpop.f32.mrf.mxu0
      %v5305 = vadd.f32 0.0, %v5304
      %v5306 = vpop.f32.mrf.mxu0
      %5307 = vmatprep.mubr.bf16.mxu0 0
      %5308 = vmatmul.mubr.bf16.gmra.mxu0 %v5090
      %v5309 = vpop.f32.mrf.mxu0
      %v5310 = vadd.f32 0.0, %v5309
      %v5311 = vpop.f32.mrf.mxu0
      %v5312 = vpop.f32.mrf.mxu0
      %v5313 = vadd.f32 0.0, %v5312
      %v5314 = vpop.f32.mrf.mxu0
      %5315 = vmatprep.mubr.bf16.mxu0 0
      %5316 = vmatmul.mubr.bf16.gmra.mxu0 %v5098
      %v5317 = vpop.f32.mrf.mxu0
      %v5318 = vadd.f32 0.0, %v5317
      %v5319 = vpop.f32.mrf.mxu0
      %v5320 = vpop.f32.mrf.mxu0
      %v5321 = vadd.f32 0.0, %v5320
      %v5322 = vpop.f32.mrf.mxu0
      %5323 = vdwg.mxu0
      %v5324 = vadd.f32 %v4770, %v5198
      %v5325 = vadd.f32 %v4771, %v5201
      %v5326 = vadd.f32 %v4772, %v5206
      %v5327 = vadd.f32 %v4773, %v5209
      %v5328 = vadd.f32 %v4774, %v5214
      %v5329 = vadd.f32 %v4775, %v5217
      %v5330 = vadd.f32 %v4776, %v5222
      %v5331 = vadd.f32 %v4777, %v5225
      %v5332 = vadd.f32 %v4778, %v5230
      %v5333 = vadd.f32 %v4779, %v5233
      %v5334 = vadd.f32 %v4780, %v5238
      %v5335 = vadd.f32 %v4781, %v5241
      %v5336 = vadd.f32 %v4782, %v5246
      %v5337 = vadd.f32 %v4783, %v5249
      %v5338 = vadd.f32 %v4784, %v5254
      %v5339 = vadd.f32 %v4785, %v5257
      %v5340 = vadd.f32 %v4786, %v5262
      %v5341 = vadd.f32 %v4787, %v5265
      %v5342 = vadd.f32 %v4788, %v5270
      %v5343 = vadd.f32 %v4789, %v5273
      %v5344 = vadd.f32 %v4790, %v5278
      %v5345 = vadd.f32 %v4791, %v5281
      %v5346 = vadd.f32 %v4792, %v5286
      %v5347 = vadd.f32 %v4793, %v5289
      %v5348 = vadd.f32 %v4794, %v5294
      %v5349 = vadd.f32 %v4795, %v5297
      %v5350 = vadd.f32 %v4796, %v5302
      %v5351 = vadd.f32 %v4797, %v5305
      %v5352 = vadd.f32 %v4798, %v5310
      %v5353 = vadd.f32 %v4799, %v5313
      %v5354 = vadd.f32 %v4800, %v5318
      %v5355 = vadd.f32 %v4801, %v5321
      %v5356 = vld [vmem:[#allocation2 + $0x10] sm:$0x8]
      %v5357 = vld [vmem:[#allocation2 + $0x14] sm:$0xf]
      %v5358 = vld [vmem:[#allocation2 + $0x18] sm:$0xf]
      %v5359 = vld [vmem:[#allocation2 + $0x1c] sm:$0xf]
      %v5360 = vld [vmem:[#allocation2 + $0x20] sm:$0xf]
      %v5361 = vld [vmem:[#allocation2 + $0x24] sm:$0xf]
      %v5362 = vld [vmem:[#allocation2 + $0x28] sm:$0xf]
      %v5363 = vld [vmem:[#allocation2 + $0x2c] sm:$0xf]
      %v5364 = vld [vmem:[#allocation2 + $0x30] sm:$0xf]
      %v5365 = vld [vmem:[#allocation2 + $0x34] sm:$0xf]
      %v5366 = vld [vmem:[#allocation2 + $0x38] sm:$0xf]
      %v5367 = vld [vmem:[#allocation2 + $0x3c] sm:$0xf]
      %v5368 = vld [vmem:[#allocation2 + $0x40] sm:$0xf]
      %v5369 = vld [vmem:[#allocation2 + $0x44] sm:$0xf]
      %v5370 = vld [vmem:[#allocation2 + $0x48] sm:$0xf]
      %v5371 = vld [vmem:[#allocation2 + $0x4c] sm:$0xf]
      %v5372 = vld [vmem:[#allocation2 + $0x50] sm:$0xf]
      %v5373 = vld [vmem:[#allocation2 + $0x54] sm:$0xf]
      %v5374 = vld [vmem:[#allocation2 + $0x58] sm:$0xf]
      %v5375 = vld [vmem:[#allocation2 + $0x5c] sm:$0xf]
      %v5376 = vld [vmem:[#allocation2 + $0x60] sm:$0xf]
      %v5377 = vld [vmem:[#allocation2 + $0x64] sm:$0xf]
      %v5378 = vld [vmem:[#allocation2 + $0x68] sm:$0xf]
      %v5379 = vld [vmem:[#allocation2 + $0x6c] sm:$0xf]
      %v5380 = vld [vmem:[#allocation2 + $0x70] sm:$0xf]
      %v5381 = vld [vmem:[#allocation2 + $0x74] sm:$0xf]
      %v5382 = vld [vmem:[#allocation2 + $0x78] sm:$0xf]
      %v5383 = vld [vmem:[#allocation2 + $0x7c] sm:$0xf]
      %v5384 = vld [vmem:[#allocation2 + $0x80] sm:$0xf]
      %v5385 = vld [vmem:[#allocation2 + $0x84] sm:$0xf]
      %v5386 = vld [vmem:[#allocation2 + $0x88] sm:$0xf]
      %v5387 = vld [vmem:[#allocation2 + $0x8c] sm:$0xf]
      %v5388 = vld [vmem:[#allocation2 + $0x90] sm:$0xf]
      %v5389 = vmul.bf16 %v5356, %v1433
      %v5390 = vmul.bf16 %v5357, %v1443
      %v5391 = vmul.bf16 %v5358, %v1453
      %v5392 = vmul.bf16 %v5359, %v1463
      %v5393 = vmul.bf16 %v5360, %v1473
      %v5394 = vmul.bf16 %v5361, %v1483
      %v5395 = vmul.bf16 %v5362, %v1493
      %v5396 = vmul.bf16 %v5363, %v1503
      %v5397 = vmul.bf16 %v5364, %v1513
      %v5398 = vmul.bf16 %v5365, %v1523
      %v5399 = vmul.bf16 %v5366, %v1533
      %v5400 = vmul.bf16 %v5367, %v1543
      %v5401 = vmul.bf16 %v5368, %v1553
      %v5402 = vmul.bf16 %v5369, %v1563
      %v5403 = vmul.bf16 %v5370, %v1573
      %v5404 = vmul.bf16 %v5371, %v1583
      %v5405 = vmul.bf16 %v5372, %v1593
      %v5406 = vmul.bf16 %v5373, %v1603
      %v5407 = vmul.bf16 %v5374, %v1613
      %v5408 = vmul.bf16 %v5375, %v1623
      %v5409 = vmul.bf16 %v5376, %v1633
      %v5410 = vmul.bf16 %v5377, %v1643
      %v5411 = vmul.bf16 %v5378, %v1653
      %v5412 = vmul.bf16 %v5379, %v1663
      %v5413 = vmul.bf16 %v5380, %v1673
      %v5414 = vmul.bf16 %v5381, %v1683
      %v5415 = vmul.bf16 %v5382, %v1693
      %v5416 = vmul.bf16 %v5383, %v1703
      %v5417 = vmul.bf16 %v5384, %v1713
      %v5418 = vmul.bf16 %v5385, %v1723
      %v5419 = vmul.bf16 %v5386, %v1733
      %v5420 = vmul.bf16 %v5387, %v1743
      %v5421 = vmul.bf16 %v5388, %v1748
      %v5422 = vld [vmem:[%s5 + $0x180] sm:$0xf]
      %v5423 = vld [vmem:[%s5 + $0x184] sm:$0xf]
      %v5424 = vld [vmem:[%s5 + $0x188] sm:$0xf]
      %v5425 = vld [vmem:[%s5 + $0x18c] sm:$0xf]
      %v5426 = vld [vmem:[%s5 + $0x190] sm:$0xf]
      %v5427 = vld [vmem:[%s5 + $0x194] sm:$0xf]
      %v5428 = vld [vmem:[%s5 + $0x198] sm:$0xf]
      %v5429 = vld [vmem:[%s5 + $0x19c] sm:$0xf]
      %v5430 = vld [vmem:[%s5 + $0x1a0] sm:$0xf]
      %v5431 = vld [vmem:[%s5 + $0x1a4] sm:$0xf]
      %v5432 = vld [vmem:[%s5 + $0x1a8] sm:$0xf]
      %v5433 = vld [vmem:[%s5 + $0x1ac] sm:$0xf]
      %v5434 = vld [vmem:[%s5 + $0x1b0] sm:$0xf]
      %v5435 = vld [vmem:[%s5 + $0x1b4] sm:$0xf]
      %v5436 = vld [vmem:[%s5 + $0x1b8] sm:$0xf]
      %v5437 = vld [vmem:[%s5 + $0x1bc] sm:$0xf]
      %v5471 = vunpack.c.l.b16 %v5389
      %v5472 = vunpack.c.l.b16 %v5390
      %v5473 = vunpack.c.l.b16 %v5391
      %v5474 = vunpack.c.l.b16 %v5392
      %v5475 = vunpack.c.l.b16 %v5393
      %v5476 = vunpack.c.l.b16 %v5394
      %v5477 = vunpack.c.l.b16 %v5395
      %v5478 = vunpack.c.l.b16 %v5396
      %v5479 = vunpack.c.l.b16 %v5397
      %v5480 = vunpack.c.l.b16 %v5398
      %v5481 = vunpack.c.l.b16 %v5399
      %v5482 = vunpack.c.l.b16 %v5400
      %v5483 = vunpack.c.l.b16 %v5401
      %v5484 = vunpack.c.l.b16 %v5402
      %v5485 = vunpack.c.l.b16 %v5403
      %v5486 = vunpack.c.l.b16 %v5404
      %v5487 = vunpack.c.l.b16 %v5405
      %v5488 = vunpack.c.l.b16 %v5406
      %v5489 = vunpack.c.l.b16 %v5407
      %v5490 = vunpack.c.l.b16 %v5408
      %v5491 = vunpack.c.l.b16 %v5409
      %v5492 = vunpack.c.l.b16 %v5410
      %v5493 = vunpack.c.l.b16 %v5411
      %v5494 = vunpack.c.l.b16 %v5412
      %v5495 = vunpack.c.l.b16 %v5413
      %v5496 = vunpack.c.l.b16 %v5414
      %v5497 = vunpack.c.l.b16 %v5415
      %v5498 = vunpack.c.l.b16 %v5416
      %v5499 = vunpack.c.l.b16 %v5417
      %v5500 = vunpack.c.l.b16 %v5418
      %v5501 = vunpack.c.l.b16 %v5419
      %v5502 = vunpack.c.l.b16 %v5420
      %v5503 = vunpack.c.l.b16 %v5421
      %v5504 = vpack.c.b16 %v5472, %v5471
      %v5505 = vpack.c.b16 %v5474, %v5473
      %v5506 = vpack.c.b16 %v5476, %v5475
      %v5507 = vpack.c.b16 %v5478, %v5477
      %v5508 = vpack.c.b16 %v5480, %v5479
      %v5509 = vpack.c.b16 %v5482, %v5481
      %v5510 = vpack.c.b16 %v5484, %v5483
      %v5511 = vpack.c.b16 %v5486, %v5485
      %v5512 = vpack.c.b16 %v5488, %v5487
      %v5513 = vpack.c.b16 %v5490, %v5489
      %v5514 = vpack.c.b16 %v5492, %v5491
      %v5515 = vpack.c.b16 %v5494, %v5493
      %v5516 = vpack.c.b16 %v5496, %v5495
      %v5517 = vpack.c.b16 %v5498, %v5497
      %v5518 = vpack.c.b16 %v5500, %v5499
      %v5519 = vpack.c.b16 %v5502, %v5501
      %v5520 = vpack.c.b16 %v5503, %v5503
      %v5522 = vshrl.u32 %v5504, 16
      %v5524 = vrot.slane %v5522, 3
      %v5525 = vshll.u32 %v5504, 16
      %v5527 = vrot.slane %v5525, 4
      %v5528 = vor.u32 %v5524, %v5527
      %v5530 = vshrl.u32 %v5505, 16
      %v5532 = vrot.slane %v5530, 3
      %v5533 = vshll.u32 %v5505, 16
      %v5535 = vrot.slane %v5533, 4
      %v5536 = vor.u32 %v5532, %v5535
      %v5537 = vsel %vm2235, %v5528, %v5536
      %v5539 = vshrl.u32 %v5506, 16
      %v5541 = vrot.slane %v5539, 3
      %v5542 = vshll.u32 %v5506, 16
      %v5544 = vrot.slane %v5542, 4
      %v5545 = vor.u32 %v5541, %v5544
      %v5546 = vsel %vm2235, %v5536, %v5545
      %v5548 = vshrl.u32 %v5507, 16
      %v5550 = vrot.slane %v5548, 3
      %v5551 = vshll.u32 %v5507, 16
      %v5553 = vrot.slane %v5551, 4
      %v5554 = vor.u32 %v5550, %v5553
      %v5555 = vsel %vm2235, %v5545, %v5554
      %v5557 = vshrl.u32 %v5508, 16
      %v5559 = vrot.slane %v5557, 3
      %v5560 = vshll.u32 %v5508, 16
      %v5562 = vrot.slane %v5560, 4
      %v5563 = vor.u32 %v5559, %v5562
      %v5564 = vsel %vm2235, %v5554, %v5563
      %v5566 = vshrl.u32 %v5509, 16
      %v5568 = vrot.slane %v5566, 3
      %v5569 = vshll.u32 %v5509, 16
      %v5571 = vrot.slane %v5569, 4
      %v5572 = vor.u32 %v5568, %v5571
      %v5573 = vsel %vm2235, %v5563, %v5572
      %v5575 = vshrl.u32 %v5510, 16
      %v5577 = vrot.slane %v5575, 3
      %v5578 = vshll.u32 %v5510, 16
      %v5580 = vrot.slane %v5578, 4
      %v5581 = vor.u32 %v5577, %v5580
      %v5582 = vsel %vm2235, %v5572, %v5581
      %v5584 = vshrl.u32 %v5511, 16
      %v5586 = vrot.slane %v5584, 3
      %v5587 = vshll.u32 %v5511, 16
      %v5589 = vrot.slane %v5587, 4
      %v5590 = vor.u32 %v5586, %v5589
      %v5591 = vsel %vm2235, %v5581, %v5590
      %v5593 = vshrl.u32 %v5512, 16
      %v5595 = vrot.slane %v5593, 3
      %v5596 = vshll.u32 %v5512, 16
      %v5598 = vrot.slane %v5596, 4
      %v5599 = vor.u32 %v5595, %v5598
      %v5600 = vsel %vm2235, %v5590, %v5599
      %v5602 = vshrl.u32 %v5513, 16
      %v5604 = vrot.slane %v5602, 3
      %v5605 = vshll.u32 %v5513, 16
      %v5607 = vrot.slane %v5605, 4
      %v5608 = vor.u32 %v5604, %v5607
      %v5609 = vsel %vm2235, %v5599, %v5608
      %v5611 = vshrl.u32 %v5514, 16
      %v5613 = vrot.slane %v5611, 3
      %v5614 = vshll.u32 %v5514, 16
      %v5616 = vrot.slane %v5614, 4
      %v5617 = vor.u32 %v5613, %v5616
      %v5618 = vsel %vm2235, %v5608, %v5617
      %v5620 = vshrl.u32 %v5515, 16
      %v5622 = vrot.slane %v5620, 3
      %v5623 = vshll.u32 %v5515, 16
      %v5625 = vrot.slane %v5623, 4
      %v5626 = vor.u32 %v5622, %v5625
      %v5627 = vsel %vm2235, %v5617, %v5626
      %v5629 = vshrl.u32 %v5516, 16
      %v5631 = vrot.slane %v5629, 3
      %v5632 = vshll.u32 %v5516, 16
      %v5634 = vrot.slane %v5632, 4
      %v5635 = vor.u32 %v5631, %v5634
      %v5636 = vsel %vm2235, %v5626, %v5635
      %v5638 = vshrl.u32 %v5517, 16
      %v5640 = vrot.slane %v5638, 3
      %v5641 = vshll.u32 %v5517, 16
      %v5643 = vrot.slane %v5641, 4
      %v5644 = vor.u32 %v5640, %v5643
      %v5645 = vsel %vm2235, %v5635, %v5644
      %v5647 = vshrl.u32 %v5518, 16
      %v5649 = vrot.slane %v5647, 3
      %v5650 = vshll.u32 %v5518, 16
      %v5652 = vrot.slane %v5650, 4
      %v5653 = vor.u32 %v5649, %v5652
      %v5654 = vsel %vm2235, %v5644, %v5653
      %v5656 = vshrl.u32 %v5519, 16
      %v5658 = vrot.slane %v5656, 3
      %v5659 = vshll.u32 %v5519, 16
      %v5661 = vrot.slane %v5659, 4
      %v5662 = vor.u32 %v5658, %v5661
      %v5663 = vsel %vm2235, %v5653, %v5662
      %v5665 = vshrl.u32 %v5520, 16
      %v5667 = vrot.slane %v5665, 3
      %v5668 = vshll.u32 %v5520, 16
      %v5670 = vrot.slane %v5668, 4
      %v5671 = vor.u32 %v5667, %v5670
      %v5672 = vsel %vm2235, %v5662, %v5671
      %v5705 = vunpack.c.l.b16 %v5422
      %v5706 = vunpack.c.l.b16 %v5423
      %v5707 = vunpack.c.l.b16 %v5424
      %v5708 = vunpack.c.l.b16 %v5425
      %v5709 = vunpack.c.l.b16 %v5426
      %v5710 = vunpack.c.l.b16 %v5427
      %v5711 = vunpack.c.l.b16 %v5428
      %v5712 = vunpack.c.l.b16 %v5429
      %v5713 = vunpack.c.l.b16 %v5430
      %v5714 = vunpack.c.l.b16 %v5431
      %v5715 = vunpack.c.l.b16 %v5432
      %v5716 = vunpack.c.l.b16 %v5433
      %v5717 = vunpack.c.l.b16 %v5434
      %v5718 = vunpack.c.l.b16 %v5435
      %v5719 = vunpack.c.l.b16 %v5436
      %v5720 = vunpack.c.l.b16 %v5437
      %v5721 = vpack.c.b16 %v5706, %v5705
      %v5722 = vpack.c.b16 %v5708, %v5707
      %v5723 = vpack.c.b16 %v5710, %v5709
      %v5724 = vpack.c.b16 %v5712, %v5711
      %v5725 = vpack.c.b16 %v5714, %v5713
      %v5726 = vpack.c.b16 %v5716, %v5715
      %v5727 = vpack.c.b16 %v5718, %v5717
      %v5728 = vpack.c.b16 %v5720, %v5719
      %5737 = vmatprep.subr.bf16.mxu0 0
      %5738 = vmatpush1.bf16.msra.mxu0 %v5728
      %5739 = vmatprep.subr.bf16.mxu0 0
      %5740 = vmatpush1.bf16.msra.mxu0 %v5727
      %5741 = vmatprep.subr.bf16.mxu0 0
      %5742 = vmatpush1.bf16.msra.mxu0 %v5726
      %5743 = vmatprep.subr.bf16.mxu0 0
      %5744 = vmatpush1.bf16.msra.mxu0 %v5725
      %5745 = vmatprep.subr.bf16.mxu0 0
      %5746 = vmatpush1.bf16.msra.mxu0 %v5724
      %5747 = vmatprep.subr.bf16.mxu0 0
      %5748 = vmatpush1.bf16.msra.mxu0 %v5723
      %5749 = vmatprep.subr.bf16.mxu0 0
      %5750 = vmatpush1.bf16.msra.mxu0 %v5722
      %5751 = vmatprep.subr.bf16.mxu0 0
      %5752 = vmatpush1.bf16.msra.mxu0 %v5721
      %5753 = vmatprep.subr.bf16.mxu0 0
      %5754 = vmatpush2.bf16.msra.mxu0 0
      %5755 = vmatprep.subr.bf16.mxu0 0
      %5756 = vmatpush2.bf16.msra.mxu0 0
      %5757 = vmatprep.subr.bf16.mxu0 0
      %5758 = vmatpush2.bf16.msra.mxu0 0
      %5759 = vmatprep.subr.bf16.mxu0 0
      %5760 = vmatpush2.bf16.msra.mxu0 0
      %5761 = vmatprep.subr.bf16.mxu0 0
      %5762 = vmatpush2.bf16.msra.mxu0 0
      %5763 = vmatprep.subr.bf16.mxu0 0
      %5764 = vmatpush2.bf16.msra.mxu0 0
      %5765 = vmatprep.subr.bf16.mxu0 0
      %5766 = vmatpush2.bf16.msra.mxu0 0
      %5767 = vmatprep.subr.bf16.mxu0 0
      %5768 = vmatpush2.bf16.msra.mxu0 0
      %5769 = vmatprep.mubr.bf16.mxu0 0
      %5770 = vmatmul.mubr.bf16.gmra.mxu0 %v5537
      %v5771 = vpop.f32.mrf.mxu0
      %v5772 = vadd.f32 0.0, %v5771
      %v5773 = vpop.f32.mrf.mxu0
      %v5774 = vpop.f32.mrf.mxu0
      %v5775 = vadd.f32 0.0, %v5774
      %v5776 = vpop.f32.mrf.mxu0
      %5777 = vmatprep.mubr.bf16.mxu0 0
      %5778 = vmatmul.mubr.bf16.gmra.mxu0 %v5546
      %v5779 = vpop.f32.mrf.mxu0
      %v5780 = vadd.f32 0.0, %v5779
      %v5781 = vpop.f32.mrf.mxu0
      %v5782 = vpop.f32.mrf.mxu0
      %v5783 = vadd.f32 0.0, %v5782
      %v5784 = vpop.f32.mrf.mxu0
      %5785 = vmatprep.mubr.bf16.mxu0 0
      %5786 = vmatmul.mubr.bf16.gmra.mxu0 %v5555
      %v5787 = vpop.f32.mrf.mxu0
      %v5788 = vadd.f32 0.0, %v5787
      %v5789 = vpop.f32.mrf.mxu0
      %v5790 = vpop.f32.mrf.mxu0
      %v5791 = vadd.f32 0.0, %v5790
      %v5792 = vpop.f32.mrf.mxu0
      %5793 = vmatprep.mubr.bf16.mxu0 0
      %5794 = vmatmul.mubr.bf16.gmra.mxu0 %v5564
      %v5795 = vpop.f32.mrf.mxu0
      %v5796 = vadd.f32 0.0, %v5795
      %v5797 = vpop.f32.mrf.mxu0
      %v5798 = vpop.f32.mrf.mxu0
      %v5799 = vadd.f32 0.0, %v5798
      %v5800 = vpop.f32.mrf.mxu0
      %5801 = vmatprep.mubr.bf16.mxu0 0
      %5802 = vmatmul.mubr.bf16.gmra.mxu0 %v5573
      %v5803 = vpop.f32.mrf.mxu0
      %v5804 = vadd.f32 0.0, %v5803
      %v5805 = vpop.f32.mrf.mxu0
      %v5806 = vpop.f32.mrf.mxu0
      %v5807 = vadd.f32 0.0, %v5806
      %v5808 = vpop.f32.mrf.mxu0
      %5809 = vmatprep.mubr.bf16.mxu0 0
      %5810 = vmatmul.mubr.bf16.gmra.mxu0 %v5582
      %v5811 = vpop.f32.mrf.mxu0
      %v5812 = vadd.f32 0.0, %v5811
      %v5813 = vpop.f32.mrf.mxu0
      %v5814 = vpop.f32.mrf.mxu0
      %v5815 = vadd.f32 0.0, %v5814
      %v5816 = vpop.f32.mrf.mxu0
      %5817 = vmatprep.mubr.bf16.mxu0 0
      %5818 = vmatmul.mubr.bf16.gmra.mxu0 %v5591
      %v5819 = vpop.f32.mrf.mxu0
      %v5820 = vadd.f32 0.0, %v5819
      %v5821 = vpop.f32.mrf.mxu0
      %v5822 = vpop.f32.mrf.mxu0
      %v5823 = vadd.f32 0.0, %v5822
      %v5824 = vpop.f32.mrf.mxu0
      %5825 = vmatprep.mubr.bf16.mxu0 0
      %5826 = vmatmul.mubr.bf16.gmra.mxu0 %v5600
      %v5827 = vpop.f32.mrf.mxu0
      %v5828 = vadd.f32 0.0, %v5827
      %v5829 = vpop.f32.mrf.mxu0
      %v5830 = vpop.f32.mrf.mxu0
      %v5831 = vadd.f32 0.0, %v5830
      %v5832 = vpop.f32.mrf.mxu0
      %5833 = vmatprep.mubr.bf16.mxu0 0
      %5834 = vmatmul.mubr.bf16.gmra.mxu0 %v5609
      %v5835 = vpop.f32.mrf.mxu0
      %v5836 = vadd.f32 0.0, %v5835
      %v5837 = vpop.f32.mrf.mxu0
      %v5838 = vpop.f32.mrf.mxu0
      %v5839 = vadd.f32 0.0, %v5838
      %v5840 = vpop.f32.mrf.mxu0
      %5841 = vmatprep.mubr.bf16.mxu0 0
      %5842 = vmatmul.mubr.bf16.gmra.mxu0 %v5618
      %v5843 = vpop.f32.mrf.mxu0
      %v5844 = vadd.f32 0.0, %v5843
      %v5845 = vpop.f32.mrf.mxu0
      %v5846 = vpop.f32.mrf.mxu0
      %v5847 = vadd.f32 0.0, %v5846
      %v5848 = vpop.f32.mrf.mxu0
      %5849 = vmatprep.mubr.bf16.mxu0 0
      %5850 = vmatmul.mubr.bf16.gmra.mxu0 %v5627
      %v5851 = vpop.f32.mrf.mxu0
      %v5852 = vadd.f32 0.0, %v5851
      %v5853 = vpop.f32.mrf.mxu0
      %v5854 = vpop.f32.mrf.mxu0
      %v5855 = vadd.f32 0.0, %v5854
      %v5856 = vpop.f32.mrf.mxu0
      %5857 = vmatprep.mubr.bf16.mxu0 0
      %5858 = vmatmul.mubr.bf16.gmra.mxu0 %v5636
      %v5859 = vpop.f32.mrf.mxu0
      %v5860 = vadd.f32 0.0, %v5859
      %v5861 = vpop.f32.mrf.mxu0
      %v5862 = vpop.f32.mrf.mxu0
      %v5863 = vadd.f32 0.0, %v5862
      %v5864 = vpop.f32.mrf.mxu0
      %5865 = vmatprep.mubr.bf16.mxu0 0
      %5866 = vmatmul.mubr.bf16.gmra.mxu0 %v5645
      %v5867 = vpop.f32.mrf.mxu0
      %v5868 = vadd.f32 0.0, %v5867
      %v5869 = vpop.f32.mrf.mxu0
      %v5870 = vpop.f32.mrf.mxu0
      %v5871 = vadd.f32 0.0, %v5870
      %v5872 = vpop.f32.mrf.mxu0
      %5873 = vmatprep.mubr.bf16.mxu0 0
      %5874 = vmatmul.mubr.bf16.gmra.mxu0 %v5654
      %v5875 = vpop.f32.mrf.mxu0
      %v5876 = vadd.f32 0.0, %v5875
      %v5877 = vpop.f32.mrf.mxu0
      %v5878 = vpop.f32.mrf.mxu0
      %v5879 = vadd.f32 0.0, %v5878
      %v5880 = vpop.f32.mrf.mxu0
      %5881 = vmatprep.mubr.bf16.mxu0 0
      %5882 = vmatmul.mubr.bf16.gmra.mxu0 %v5663
      %v5883 = vpop.f32.mrf.mxu0
      %v5884 = vadd.f32 0.0, %v5883
      %v5885 = vpop.f32.mrf.mxu0
      %v5886 = vpop.f32.mrf.mxu0
      %v5887 = vadd.f32 0.0, %v5886
      %v5888 = vpop.f32.mrf.mxu0
      %5889 = vmatprep.mubr.bf16.mxu0 0
      %5890 = vmatmul.mubr.bf16.gmra.mxu0 %v5672
      %v5891 = vpop.f32.mrf.mxu0
      %v5892 = vadd.f32 0.0, %v5891
      %v5893 = vpop.f32.mrf.mxu0
      %v5894 = vpop.f32.mrf.mxu0
      %v5895 = vadd.f32 0.0, %v5894
      %v5896 = vpop.f32.mrf.mxu0
      %5897 = vdwg.mxu0
      %v5898 = vadd.f32 %v5324, %v5772
      %v5899 = vadd.f32 %v5325, %v5775
      %v5900 = vadd.f32 %v5326, %v5780
      %v5901 = vadd.f32 %v5327, %v5783
      %v5902 = vadd.f32 %v5328, %v5788
      %v5903 = vadd.f32 %v5329, %v5791
      %v5904 = vadd.f32 %v5330, %v5796
      %v5905 = vadd.f32 %v5331, %v5799
      %v5906 = vadd.f32 %v5332, %v5804
      %v5907 = vadd.f32 %v5333, %v5807
      %v5908 = vadd.f32 %v5334, %v5812
      %v5909 = vadd.f32 %v5335, %v5815
      %v5910 = vadd.f32 %v5336, %v5820
      %v5911 = vadd.f32 %v5337, %v5823
      %v5912 = vadd.f32 %v5338, %v5828
      %v5913 = vadd.f32 %v5339, %v5831
      %v5914 = vadd.f32 %v5340, %v5836
      %v5915 = vadd.f32 %v5341, %v5839
      %v5916 = vadd.f32 %v5342, %v5844
      %v5917 = vadd.f32 %v5343, %v5847
      %v5918 = vadd.f32 %v5344, %v5852
      %v5919 = vadd.f32 %v5345, %v5855
      %v5920 = vadd.f32 %v5346, %v5860
      %v5921 = vadd.f32 %v5347, %v5863
      %v5922 = vadd.f32 %v5348, %v5868
      %v5923 = vadd.f32 %v5349, %v5871
      %v5924 = vadd.f32 %v5350, %v5876
      %v5925 = vadd.f32 %v5351, %v5879
      %v5926 = vadd.f32 %v5352, %v5884
      %v5927 = vadd.f32 %v5353, %v5887
      %v5928 = vadd.f32 %v5354, %v5892
      %v5929 = vadd.f32 %v5355, %v5895
      %v5930 = vld [vmem:[%s5 + $0x1c0] sm:$0xf]
      %v5931 = vld [vmem:[%s5 + $0x1c4] sm:$0xf]
      %v5932 = vld [vmem:[%s5 + $0x1c8] sm:$0xf]
      %v5933 = vld [vmem:[%s5 + $0x1cc] sm:$0xf]
      %v5934 = vld [vmem:[%s5 + $0x1d0] sm:$0xf]
      %v5935 = vld [vmem:[%s5 + $0x1d4] sm:$0xf]
      %v5936 = vld [vmem:[%s5 + $0x1d8] sm:$0xf]
      %v5937 = vld [vmem:[%s5 + $0x1dc] sm:$0xf]
      %v5938 = vld [vmem:[%s5 + $0x1e0] sm:$0xf]
      %v5939 = vld [vmem:[%s5 + $0x1e4] sm:$0xf]
      %v5940 = vld [vmem:[%s5 + $0x1e8] sm:$0xf]
      %v5941 = vld [vmem:[%s5 + $0x1ec] sm:$0xf]
      %v5942 = vld [vmem:[%s5 + $0x1f0] sm:$0xf]
      %v5943 = vld [vmem:[%s5 + $0x1f4] sm:$0xf]
      %v5944 = vld [vmem:[%s5 + $0x1f8] sm:$0xf]
      %v5945 = vld [vmem:[%s5 + $0x1fc] sm:$0xf]
      %v5978 = vunpack.c.l.b16 %v5357
      %v5979 = vunpack.c.l.b16 %v5358
      %v5980 = vunpack.c.l.b16 %v5359
      %v5981 = vunpack.c.l.b16 %v5360
      %v5982 = vunpack.c.l.b16 %v5361
      %v5983 = vunpack.c.l.b16 %v5362
      %v5984 = vunpack.c.l.b16 %v5363
      %v5985 = vunpack.c.l.b16 %v5364
      %v5986 = vunpack.c.l.b16 %v5365
      %v5987 = vunpack.c.l.b16 %v5366
      %v5988 = vunpack.c.l.b16 %v5367
      %v5989 = vunpack.c.l.b16 %v5368
      %v5990 = vunpack.c.l.b16 %v5369
      %v5991 = vunpack.c.l.b16 %v5370
      %v5992 = vunpack.c.l.b16 %v5371
      %v5993 = vunpack.c.l.b16 %v5372
      %v5994 = vunpack.c.l.b16 %v5373
      %v5995 = vunpack.c.l.b16 %v5374
      %v5996 = vunpack.c.l.b16 %v5375
      %v5997 = vunpack.c.l.b16 %v5376
      %v5998 = vunpack.c.l.b16 %v5377
      %v5999 = vunpack.c.l.b16 %v5378
      %v6000 = vunpack.c.l.b16 %v5379
      %v6001 = vunpack.c.l.b16 %v5380
      %v6002 = vunpack.c.l.b16 %v5381
      %v6003 = vunpack.c.l.b16 %v5382
      %v6004 = vunpack.c.l.b16 %v5383
      %v6005 = vunpack.c.l.b16 %v5384
      %v6006 = vunpack.c.l.b16 %v5385
      %v6007 = vunpack.c.l.b16 %v5386
      %v6008 = vunpack.c.l.b16 %v5387
      %v6009 = vunpack.c.l.b16 %v5388
      %v6010 = vpack.c.b16 %v5979, %v5978
      %v6011 = vpack.c.b16 %v5981, %v5980
      %v6012 = vpack.c.b16 %v5983, %v5982
      %v6013 = vpack.c.b16 %v5985, %v5984
      %v6014 = vpack.c.b16 %v5987, %v5986
      %v6015 = vpack.c.b16 %v5989, %v5988
      %v6016 = vpack.c.b16 %v5991, %v5990
      %v6017 = vpack.c.b16 %v5993, %v5992
      %v6018 = vpack.c.b16 %v5995, %v5994
      %v6019 = vpack.c.b16 %v5997, %v5996
      %v6020 = vpack.c.b16 %v5999, %v5998
      %v6021 = vpack.c.b16 %v6001, %v6000
      %v6022 = vpack.c.b16 %v6003, %v6002
      %v6023 = vpack.c.b16 %v6005, %v6004
      %v6024 = vpack.c.b16 %v6007, %v6006
      %v6025 = vpack.c.b16 %v6009, %v6008
      %v6058 = vunpack.c.l.b16 %v5930
      %v6059 = vunpack.c.l.b16 %v5931
      %v6060 = vunpack.c.l.b16 %v5932
      %v6061 = vunpack.c.l.b16 %v5933
      %v6062 = vunpack.c.l.b16 %v5934
      %v6063 = vunpack.c.l.b16 %v5935
      %v6064 = vunpack.c.l.b16 %v5936
      %v6065 = vunpack.c.l.b16 %v5937
      %v6066 = vunpack.c.l.b16 %v5938
      %v6067 = vunpack.c.l.b16 %v5939
      %v6068 = vunpack.c.l.b16 %v5940
      %v6069 = vunpack.c.l.b16 %v5941
      %v6070 = vunpack.c.l.b16 %v5942
      %v6071 = vunpack.c.l.b16 %v5943
      %v6072 = vunpack.c.l.b16 %v5944
      %v6073 = vunpack.c.l.b16 %v5945
      %v6074 = vpack.c.b16 %v6059, %v6058
      %v6075 = vpack.c.b16 %v6061, %v6060
      %v6076 = vpack.c.b16 %v6063, %v6062
      %v6077 = vpack.c.b16 %v6065, %v6064
      %v6078 = vpack.c.b16 %v6067, %v6066
      %v6079 = vpack.c.b16 %v6069, %v6068
      %v6080 = vpack.c.b16 %v6071, %v6070
      %v6081 = vpack.c.b16 %v6073, %v6072
      %6090 = vmatprep.subr.bf16.mxu0 0
      %6091 = vmatpush1.bf16.msra.mxu0 %v6081
      %6092 = vmatprep.subr.bf16.mxu0 0
      %6093 = vmatpush1.bf16.msra.mxu0 %v6080
      %6094 = vmatprep.subr.bf16.mxu0 0
      %6095 = vmatpush1.bf16.msra.mxu0 %v6079
      %6096 = vmatprep.subr.bf16.mxu0 0
      %6097 = vmatpush1.bf16.msra.mxu0 %v6078
      %6098 = vmatprep.subr.bf16.mxu0 0
      %6099 = vmatpush1.bf16.msra.mxu0 %v6077
      %6100 = vmatprep.subr.bf16.mxu0 0
      %6101 = vmatpush1.bf16.msra.mxu0 %v6076
      %6102 = vmatprep.subr.bf16.mxu0 0
      %6103 = vmatpush1.bf16.msra.mxu0 %v6075
      %6104 = vmatprep.subr.bf16.mxu0 0
      %6105 = vmatpush1.bf16.msra.mxu0 %v6074
      %6106 = vmatprep.subr.bf16.mxu0 0
      %6107 = vmatpush2.bf16.msra.mxu0 0
      %6108 = vmatprep.subr.bf16.mxu0 0
      %6109 = vmatpush2.bf16.msra.mxu0 0
      %6110 = vmatprep.subr.bf16.mxu0 0
      %6111 = vmatpush2.bf16.msra.mxu0 0
      %6112 = vmatprep.subr.bf16.mxu0 0
      %6113 = vmatpush2.bf16.msra.mxu0 0
      %6114 = vmatprep.subr.bf16.mxu0 0
      %6115 = vmatpush2.bf16.msra.mxu0 0
      %6116 = vmatprep.subr.bf16.mxu0 0
      %6117 = vmatpush2.bf16.msra.mxu0 0
      %6118 = vmatprep.subr.bf16.mxu0 0
      %6119 = vmatpush2.bf16.msra.mxu0 0
      %6120 = vmatprep.subr.bf16.mxu0 0
      %6121 = vmatpush2.bf16.msra.mxu0 0
      %6122 = vmatprep.mubr.bf16.mxu0 0
      %6123 = vmatmul.mubr.bf16.gmra.mxu0 %v6010
      %v6124 = vpop.f32.mrf.mxu0
      %v6125 = vadd.f32 0.0, %v6124
      %v6126 = vpop.f32.mrf.mxu0
      %v6127 = vpop.f32.mrf.mxu0
      %v6128 = vadd.f32 0.0, %v6127
      %v6129 = vpop.f32.mrf.mxu0
      %6130 = vmatprep.mubr.bf16.mxu0 0
      %6131 = vmatmul.mubr.bf16.gmra.mxu0 %v6011
      %v6132 = vpop.f32.mrf.mxu0
      %v6133 = vadd.f32 0.0, %v6132
      %v6134 = vpop.f32.mrf.mxu0
      %v6135 = vpop.f32.mrf.mxu0
      %v6136 = vadd.f32 0.0, %v6135
      %v6137 = vpop.f32.mrf.mxu0
      %6138 = vmatprep.mubr.bf16.mxu0 0
      %6139 = vmatmul.mubr.bf16.gmra.mxu0 %v6012
      %v6140 = vpop.f32.mrf.mxu0
      %v6141 = vadd.f32 0.0, %v6140
      %v6142 = vpop.f32.mrf.mxu0
      %v6143 = vpop.f32.mrf.mxu0
      %v6144 = vadd.f32 0.0, %v6143
      %v6145 = vpop.f32.mrf.mxu0
      %6146 = vmatprep.mubr.bf16.mxu0 0
      %6147 = vmatmul.mubr.bf16.gmra.mxu0 %v6013
      %v6148 = vpop.f32.mrf.mxu0
      %v6149 = vadd.f32 0.0, %v6148
      %v6150 = vpop.f32.mrf.mxu0
      %v6151 = vpop.f32.mrf.mxu0
      %v6152 = vadd.f32 0.0, %v6151
      %v6153 = vpop.f32.mrf.mxu0
      %6154 = vmatprep.mubr.bf16.mxu0 0
      %6155 = vmatmul.mubr.bf16.gmra.mxu0 %v6014
      %v6156 = vpop.f32.mrf.mxu0
      %v6157 = vadd.f32 0.0, %v6156
      %v6158 = vpop.f32.mrf.mxu0
      %v6159 = vpop.f32.mrf.mxu0
      %v6160 = vadd.f32 0.0, %v6159
      %v6161 = vpop.f32.mrf.mxu0
      %6162 = vmatprep.mubr.bf16.mxu0 0
      %6163 = vmatmul.mubr.bf16.gmra.mxu0 %v6015
      %v6164 = vpop.f32.mrf.mxu0
      %v6165 = vadd.f32 0.0, %v6164
      %v6166 = vpop.f32.mrf.mxu0
      %v6167 = vpop.f32.mrf.mxu0
      %v6168 = vadd.f32 0.0, %v6167
      %v6169 = vpop.f32.mrf.mxu0
      %6170 = vmatprep.mubr.bf16.mxu0 0
      %6171 = vmatmul.mubr.bf16.gmra.mxu0 %v6016
      %v6172 = vpop.f32.mrf.mxu0
      %v6173 = vadd.f32 0.0, %v6172
      %v6174 = vpop.f32.mrf.mxu0
      %v6175 = vpop.f32.mrf.mxu0
      %v6176 = vadd.f32 0.0, %v6175
      %v6177 = vpop.f32.mrf.mxu0
      %6178 = vmatprep.mubr.bf16.mxu0 0
      %6179 = vmatmul.mubr.bf16.gmra.mxu0 %v6017
      %v6180 = vpop.f32.mrf.mxu0
      %v6181 = vadd.f32 0.0, %v6180
      %v6182 = vpop.f32.mrf.mxu0
      %v6183 = vpop.f32.mrf.mxu0
      %v6184 = vadd.f32 0.0, %v6183
      %v6185 = vpop.f32.mrf.mxu0
      %6186 = vmatprep.mubr.bf16.mxu0 0
      %6187 = vmatmul.mubr.bf16.gmra.mxu0 %v6018
      %v6188 = vpop.f32.mrf.mxu0
      %v6189 = vadd.f32 0.0, %v6188
      %v6190 = vpop.f32.mrf.mxu0
      %v6191 = vpop.f32.mrf.mxu0
      %v6192 = vadd.f32 0.0, %v6191
      %v6193 = vpop.f32.mrf.mxu0
      %6194 = vmatprep.mubr.bf16.mxu0 0
      %6195 = vmatmul.mubr.bf16.gmra.mxu0 %v6019
      %v6196 = vpop.f32.mrf.mxu0
      %v6197 = vadd.f32 0.0, %v6196
      %v6198 = vpop.f32.mrf.mxu0
      %v6199 = vpop.f32.mrf.mxu0
      %v6200 = vadd.f32 0.0, %v6199
      %v6201 = vpop.f32.mrf.mxu0
      %6202 = vmatprep.mubr.bf16.mxu0 0
      %6203 = vmatmul.mubr.bf16.gmra.mxu0 %v6020
      %v6204 = vpop.f32.mrf.mxu0
      %v6205 = vadd.f32 0.0, %v6204
      %v6206 = vpop.f32.mrf.mxu0
      %v6207 = vpop.f32.mrf.mxu0
      %v6208 = vadd.f32 0.0, %v6207
      %v6209 = vpop.f32.mrf.mxu0
      %6210 = vmatprep.mubr.bf16.mxu0 0
      %6211 = vmatmul.mubr.bf16.gmra.mxu0 %v6021
      %v6212 = vpop.f32.mrf.mxu0
      %v6213 = vadd.f32 0.0, %v6212
      %v6214 = vpop.f32.mrf.mxu0
      %v6215 = vpop.f32.mrf.mxu0
      %v6216 = vadd.f32 0.0, %v6215
      %v6217 = vpop.f32.mrf.mxu0
      %6218 = vmatprep.mubr.bf16.mxu0 0
      %6219 = vmatmul.mubr.bf16.gmra.mxu0 %v6022
      %v6220 = vpop.f32.mrf.mxu0
      %v6221 = vadd.f32 0.0, %v6220
      %v6222 = vpop.f32.mrf.mxu0
      %v6223 = vpop.f32.mrf.mxu0
      %v6224 = vadd.f32 0.0, %v6223
      %v6225 = vpop.f32.mrf.mxu0
      %6226 = vmatprep.mubr.bf16.mxu0 0
      %6227 = vmatmul.mubr.bf16.gmra.mxu0 %v6023
      %v6228 = vpop.f32.mrf.mxu0
      %v6229 = vadd.f32 0.0, %v6228
      %v6230 = vpop.f32.mrf.mxu0
      %v6231 = vpop.f32.mrf.mxu0
      %v6232 = vadd.f32 0.0, %v6231
      %v6233 = vpop.f32.mrf.mxu0
      %6234 = vmatprep.mubr.bf16.mxu0 0
      %6235 = vmatmul.mubr.bf16.gmra.mxu0 %v6024
      %v6236 = vpop.f32.mrf.mxu0
      %v6237 = vadd.f32 0.0, %v6236
      %v6238 = vpop.f32.mrf.mxu0
      %v6239 = vpop.f32.mrf.mxu0
      %v6240 = vadd.f32 0.0, %v6239
      %v6241 = vpop.f32.mrf.mxu0
      %6242 = vmatprep.mubr.bf16.mxu0 0
      %6243 = vmatmul.mubr.bf16.gmra.mxu0 %v6025
      %v6244 = vpop.f32.mrf.mxu0
      %v6245 = vadd.f32 0.0, %v6244
      %v6246 = vpop.f32.mrf.mxu0
      %v6247 = vpop.f32.mrf.mxu0
      %v6248 = vadd.f32 0.0, %v6247
      %v6249 = vpop.f32.mrf.mxu0
      %6250 = vdwg.mxu0
      %v6251 = vadd.f32 %v5898, %v6125
      %v6252 = vadd.f32 %v5899, %v6128
      %v6253 = vadd.f32 %v5900, %v6133
      %v6254 = vadd.f32 %v5901, %v6136
      %v6255 = vadd.f32 %v5902, %v6141
      %v6256 = vadd.f32 %v5903, %v6144
      %v6257 = vadd.f32 %v5904, %v6149
      %v6258 = vadd.f32 %v5905, %v6152
      %v6259 = vadd.f32 %v5906, %v6157
      %v6260 = vadd.f32 %v5907, %v6160
      %v6261 = vadd.f32 %v5908, %v6165
      %v6262 = vadd.f32 %v5909, %v6168
      %v6263 = vadd.f32 %v5910, %v6173
      %v6264 = vadd.f32 %v5911, %v6176
      %v6265 = vadd.f32 %v5912, %v6181
      %v6266 = vadd.f32 %v5913, %v6184
      %v6267 = vadd.f32 %v5914, %v6189
      %v6268 = vadd.f32 %v5915, %v6192
      %v6269 = vadd.f32 %v5916, %v6197
      %v6270 = vadd.f32 %v5917, %v6200
      %v6271 = vadd.f32 %v5918, %v6205
      %v6272 = vadd.f32 %v5919, %v6208
      %v6273 = vadd.f32 %v5920, %v6213
      %v6274 = vadd.f32 %v5921, %v6216
      %v6275 = vadd.f32 %v5922, %v6221
      %v6276 = vadd.f32 %v5923, %v6224
      %v6277 = vadd.f32 %v5924, %v6229
      %v6278 = vadd.f32 %v5925, %v6232
      %v6279 = vadd.f32 %v5926, %v6237
      %v6280 = vadd.f32 %v5927, %v6240
      %v6281 = vadd.f32 %v5928, %v6245
      %v6282 = vadd.f32 %v5929, %v6248
      %v6283 = vld [vmem:[#allocation2 + $0x14] sm:$0xf]
      %v6284 = vld [vmem:[#allocation2 + $0x18] sm:$0xf]
      %v6285 = vld [vmem:[#allocation2 + $0x1c] sm:$0xf]
      %v6286 = vld [vmem:[#allocation2 + $0x20] sm:$0xf]
      %v6287 = vld [vmem:[#allocation2 + $0x24] sm:$0xf]
      %v6288 = vld [vmem:[#allocation2 + $0x28] sm:$0xf]
      %v6289 = vld [vmem:[#allocation2 + $0x2c] sm:$0xf]
      %v6290 = vld [vmem:[#allocation2 + $0x30] sm:$0xf]
      %v6291 = vld [vmem:[#allocation2 + $0x34] sm:$0xf]
      %v6292 = vld [vmem:[#allocation2 + $0x38] sm:$0xf]
      %v6293 = vld [vmem:[#allocation2 + $0x3c] sm:$0xf]
      %v6294 = vld [vmem:[#allocation2 + $0x40] sm:$0xf]
      %v6295 = vld [vmem:[#allocation2 + $0x44] sm:$0xf]
      %v6296 = vld [vmem:[#allocation2 + $0x48] sm:$0xf]
      %v6297 = vld [vmem:[#allocation2 + $0x4c] sm:$0xf]
      %v6298 = vld [vmem:[#allocation2 + $0x50] sm:$0xf]
      %v6299 = vld [vmem:[#allocation2 + $0x54] sm:$0xf]
      %v6300 = vld [vmem:[#allocation2 + $0x58] sm:$0xf]
      %v6301 = vld [vmem:[#allocation2 + $0x5c] sm:$0xf]
      %v6302 = vld [vmem:[#allocation2 + $0x60] sm:$0xf]
      %v6303 = vld [vmem:[#allocation2 + $0x64] sm:$0xf]
      %v6304 = vld [vmem:[#allocation2 + $0x68] sm:$0xf]
      %v6305 = vld [vmem:[#allocation2 + $0x6c] sm:$0xf]
      %v6306 = vld [vmem:[#allocation2 + $0x70] sm:$0xf]
      %v6307 = vld [vmem:[#allocation2 + $0x74] sm:$0xf]
      %v6308 = vld [vmem:[#allocation2 + $0x78] sm:$0xf]
      %v6309 = vld [vmem:[#allocation2 + $0x7c] sm:$0xf]
      %v6310 = vld [vmem:[#allocation2 + $0x80] sm:$0xf]
      %v6311 = vld [vmem:[#allocation2 + $0x84] sm:$0xf]
      %v6312 = vld [vmem:[#allocation2 + $0x88] sm:$0xf]
      %v6313 = vld [vmem:[#allocation2 + $0x8c] sm:$0xf]
      %v6314 = vld [vmem:[#allocation2 + $0x90] sm:$0xf]
      %v6315 = vld [vmem:[#allocation2 + $0x94] sm:$0x1]
      %v6316 = vmul.bf16 %v6283, %v3039
      %v6317 = vmul.bf16 %v6284, %v3048
      %v6318 = vmul.bf16 %v6285, %v3057
      %v6319 = vmul.bf16 %v6286, %v3066
      %v6320 = vmul.bf16 %v6287, %v3075
      %v6321 = vmul.bf16 %v6288, %v3084
      %v6322 = vmul.bf16 %v6289, %v3093
      %v6323 = vmul.bf16 %v6290, %v3102
      %v6324 = vmul.bf16 %v6291, %v3111
      %v6325 = vmul.bf16 %v6292, %v3120
      %v6326 = vmul.bf16 %v6293, %v3129
      %v6327 = vmul.bf16 %v6294, %v3138
      %v6328 = vmul.bf16 %v6295, %v3147
      %v6329 = vmul.bf16 %v6296, %v3156
      %v6330 = vmul.bf16 %v6297, %v3165
      %v6331 = vmul.bf16 %v6298, %v3174
      %v6332 = vmul.bf16 %v6299, %v3183
      %v6333 = vmul.bf16 %v6300, %v3192
      %v6334 = vmul.bf16 %v6301, %v3201
      %v6335 = vmul.bf16 %v6302, %v3210
      %v6336 = vmul.bf16 %v6303, %v3219
      %v6337 = vmul.bf16 %v6304, %v3228
      %v6338 = vmul.bf16 %v6305, %v3237
      %v6339 = vmul.bf16 %v6306, %v3246
      %v6340 = vmul.bf16 %v6307, %v3255
      %v6341 = vmul.bf16 %v6308, %v3264
      %v6342 = vmul.bf16 %v6309, %v3273
      %v6343 = vmul.bf16 %v6310, %v3282
      %v6344 = vmul.bf16 %v6311, %v3291
      %v6345 = vmul.bf16 %v6312, %v3300
      %v6346 = vmul.bf16 %v6313, %v3309
      %v6347 = vmul.bf16 %v6314, %v3318
      %v6348 = vmul.bf16 %v6315, %v3319
      %v6349 = vld [vmem:[%s5 + $0x200] sm:$0xf]
      %v6350 = vld [vmem:[%s5 + $0x204] sm:$0xf]
      %v6351 = vld [vmem:[%s5 + $0x208] sm:$0xf]
      %v6352 = vld [vmem:[%s5 + $0x20c] sm:$0xf]
      %v6353 = vld [vmem:[%s5 + $0x210] sm:$0xf]
      %v6354 = vld [vmem:[%s5 + $0x214] sm:$0xf]
      %v6355 = vld [vmem:[%s5 + $0x218] sm:$0xf]
      %v6356 = vld [vmem:[%s5 + $0x21c] sm:$0xf]
      %v6357 = vld [vmem:[%s5 + $0x220] sm:$0xf]
      %v6358 = vld [vmem:[%s5 + $0x224] sm:$0xf]
      %v6359 = vld [vmem:[%s5 + $0x228] sm:$0xf]
      %v6360 = vld [vmem:[%s5 + $0x22c] sm:$0xf]
      %v6361 = vld [vmem:[%s5 + $0x230] sm:$0xf]
      %v6362 = vld [vmem:[%s5 + $0x234] sm:$0xf]
      %v6363 = vld [vmem:[%s5 + $0x238] sm:$0xf]
      %v6364 = vld [vmem:[%s5 + $0x23c] sm:$0xf]
      %v6398 = vunpack.c.l.b16 %v6316
      %v6399 = vunpack.c.l.b16 %v6317
      %v6400 = vunpack.c.l.b16 %v6318
      %v6401 = vunpack.c.l.b16 %v6319
      %v6402 = vunpack.c.l.b16 %v6320
      %v6403 = vunpack.c.l.b16 %v6321
      %v6404 = vunpack.c.l.b16 %v6322
      %v6405 = vunpack.c.l.b16 %v6323
      %v6406 = vunpack.c.l.b16 %v6324
      %v6407 = vunpack.c.l.b16 %v6325
      %v6408 = vunpack.c.l.b16 %v6326
      %v6409 = vunpack.c.l.b16 %v6327
      %v6410 = vunpack.c.l.b16 %v6328
      %v6411 = vunpack.c.l.b16 %v6329
      %v6412 = vunpack.c.l.b16 %v6330
      %v6413 = vunpack.c.l.b16 %v6331
      %v6414 = vunpack.c.l.b16 %v6332
      %v6415 = vunpack.c.l.b16 %v6333
      %v6416 = vunpack.c.l.b16 %v6334
      %v6417 = vunpack.c.l.b16 %v6335
      %v6418 = vunpack.c.l.b16 %v6336
      %v6419 = vunpack.c.l.b16 %v6337
      %v6420 = vunpack.c.l.b16 %v6338
      %v6421 = vunpack.c.l.b16 %v6339
      %v6422 = vunpack.c.l.b16 %v6340
      %v6423 = vunpack.c.l.b16 %v6341
      %v6424 = vunpack.c.l.b16 %v6342
      %v6425 = vunpack.c.l.b16 %v6343
      %v6426 = vunpack.c.l.b16 %v6344
      %v6427 = vunpack.c.l.b16 %v6345
      %v6428 = vunpack.c.l.b16 %v6346
      %v6429 = vunpack.c.l.b16 %v6347
      %v6430 = vunpack.c.l.b16 %v6348
      %v6431 = vpack.c.b16 %v6399, %v6398
      %v6432 = vpack.c.b16 %v6401, %v6400
      %v6433 = vpack.c.b16 %v6403, %v6402
      %v6434 = vpack.c.b16 %v6405, %v6404
      %v6435 = vpack.c.b16 %v6407, %v6406
      %v6436 = vpack.c.b16 %v6409, %v6408
      %v6437 = vpack.c.b16 %v6411, %v6410
      %v6438 = vpack.c.b16 %v6413, %v6412
      %v6439 = vpack.c.b16 %v6415, %v6414
      %v6440 = vpack.c.b16 %v6417, %v6416
      %v6441 = vpack.c.b16 %v6419, %v6418
      %v6442 = vpack.c.b16 %v6421, %v6420
      %v6443 = vpack.c.b16 %v6423, %v6422
      %v6444 = vpack.c.b16 %v6425, %v6424
      %v6445 = vpack.c.b16 %v6427, %v6426
      %v6446 = vpack.c.b16 %v6429, %v6428
      %v6447 = vpack.c.b16 %v6430, %v6430
      %v6449 = vshrl.u32 %v6431, 16
      %v6451 = vshll.u32 %v6431, 16
      %v6453 = vrot.slane %v6451, 1
      %v6454 = vor.u32 %v6449, %v6453
      %v6456 = vshll.u32 %v6432, 16
      %v6458 = vrot.slane %v6456, 1
      %v6459 = vsel %vm3485, %v6454, %v6458
      %v6460 = vshrl.u32 %v6432, 16
      %v6462 = vor.u32 %v6460, %v6458
      %v6464 = vshll.u32 %v6433, 16
      %v6466 = vrot.slane %v6464, 1
      %v6467 = vsel %vm3485, %v6462, %v6466
      %v6468 = vshrl.u32 %v6433, 16
      %v6470 = vor.u32 %v6468, %v6466
      %v6472 = vshll.u32 %v6434, 16
      %v6474 = vrot.slane %v6472, 1
      %v6475 = vsel %vm3485, %v6470, %v6474
      %v6476 = vshrl.u32 %v6434, 16
      %v6478 = vor.u32 %v6476, %v6474
      %v6480 = vshll.u32 %v6435, 16
      %v6482 = vrot.slane %v6480, 1
      %v6483 = vsel %vm3485, %v6478, %v6482
      %v6484 = vshrl.u32 %v6435, 16
      %v6486 = vor.u32 %v6484, %v6482
      %v6488 = vshll.u32 %v6436, 16
      %v6490 = vrot.slane %v6488, 1
      %v6491 = vsel %vm3485, %v6486, %v6490
      %v6492 = vshrl.u32 %v6436, 16
      %v6494 = vor.u32 %v6492, %v6490
      %v6496 = vshll.u32 %v6437, 16
      %v6498 = vrot.slane %v6496, 1
      %v6499 = vsel %vm3485, %v6494, %v6498
      %v6500 = vshrl.u32 %v6437, 16
      %v6502 = vor.u32 %v6500, %v6498
      %v6504 = vshll.u32 %v6438, 16
      %v6506 = vrot.slane %v6504, 1
      %v6507 = vsel %vm3485, %v6502, %v6506
      %v6508 = vshrl.u32 %v6438, 16
      %v6510 = vor.u32 %v6508, %v6506
      %v6512 = vshll.u32 %v6439, 16
      %v6514 = vrot.slane %v6512, 1
      %v6515 = vsel %vm3485, %v6510, %v6514
      %v6516 = vshrl.u32 %v6439, 16
      %v6518 = vor.u32 %v6516, %v6514
      %v6520 = vshll.u32 %v6440, 16
      %v6522 = vrot.slane %v6520, 1
      %v6523 = vsel %vm3485, %v6518, %v6522
      %v6524 = vshrl.u32 %v6440, 16
      %v6526 = vor.u32 %v6524, %v6522
      %v6528 = vshll.u32 %v6441, 16
      %v6530 = vrot.slane %v6528, 1
      %v6531 = vsel %vm3485, %v6526, %v6530
      %v6532 = vshrl.u32 %v6441, 16
      %v6534 = vor.u32 %v6532, %v6530
      %v6536 = vshll.u32 %v6442, 16
      %v6538 = vrot.slane %v6536, 1
      %v6539 = vsel %vm3485, %v6534, %v6538
      %v6540 = vshrl.u32 %v6442, 16
      %v6542 = vor.u32 %v6540, %v6538
      %v6544 = vshll.u32 %v6443, 16
      %v6546 = vrot.slane %v6544, 1
      %v6547 = vsel %vm3485, %v6542, %v6546
      %v6548 = vshrl.u32 %v6443, 16
      %v6550 = vor.u32 %v6548, %v6546
      %v6552 = vshll.u32 %v6444, 16
      %v6554 = vrot.slane %v6552, 1
      %v6555 = vsel %vm3485, %v6550, %v6554
      %v6556 = vshrl.u32 %v6444, 16
      %v6558 = vor.u32 %v6556, %v6554
      %v6560 = vshll.u32 %v6445, 16
      %v6562 = vrot.slane %v6560, 1
      %v6563 = vsel %vm3485, %v6558, %v6562
      %v6564 = vshrl.u32 %v6445, 16
      %v6566 = vor.u32 %v6564, %v6562
      %v6568 = vshll.u32 %v6446, 16
      %v6570 = vrot.slane %v6568, 1
      %v6571 = vsel %vm3485, %v6566, %v6570
      %v6572 = vshrl.u32 %v6446, 16
      %v6574 = vor.u32 %v6572, %v6570
      %v6576 = vshll.u32 %v6447, 16
      %v6578 = vrot.slane %v6576, 1
      %v6579 = vsel %vm3485, %v6574, %v6578
      %v6612 = vunpack.c.l.b16 %v6349
      %v6613 = vunpack.c.l.b16 %v6350
      %v6614 = vunpack.c.l.b16 %v6351
      %v6615 = vunpack.c.l.b16 %v6352
      %v6616 = vunpack.c.l.b16 %v6353
      %v6617 = vunpack.c.l.b16 %v6354
      %v6618 = vunpack.c.l.b16 %v6355
      %v6619 = vunpack.c.l.b16 %v6356
      %v6620 = vunpack.c.l.b16 %v6357
      %v6621 = vunpack.c.l.b16 %v6358
      %v6622 = vunpack.c.l.b16 %v6359
      %v6623 = vunpack.c.l.b16 %v6360
      %v6624 = vunpack.c.l.b16 %v6361
      %v6625 = vunpack.c.l.b16 %v6362
      %v6626 = vunpack.c.l.b16 %v6363
      %v6627 = vunpack.c.l.b16 %v6364
      %v6628 = vpack.c.b16 %v6613, %v6612
      %v6629 = vpack.c.b16 %v6615, %v6614
      %v6630 = vpack.c.b16 %v6617, %v6616
      %v6631 = vpack.c.b16 %v6619, %v6618
      %v6632 = vpack.c.b16 %v6621, %v6620
      %v6633 = vpack.c.b16 %v6623, %v6622
      %v6634 = vpack.c.b16 %v6625, %v6624
      %v6635 = vpack.c.b16 %v6627, %v6626
      %6644 = vmatprep.subr.bf16.mxu0 0
      %6645 = vmatpush1.bf16.msra.mxu0 %v6635
      %6646 = vmatprep.subr.bf16.mxu0 0
      %6647 = vmatpush1.bf16.msra.mxu0 %v6634
      %6648 = vmatprep.subr.bf16.mxu0 0
      %6649 = vmatpush1.bf16.msra.mxu0 %v6633
      %6650 = vmatprep.subr.bf16.mxu0 0
      %6651 = vmatpush1.bf16.msra.mxu0 %v6632
      %6652 = vmatprep.subr.bf16.mxu0 0
      %6653 = vmatpush1.bf16.msra.mxu0 %v6631
      %6654 = vmatprep.subr.bf16.mxu0 0
      %6655 = vmatpush1.bf16.msra.mxu0 %v6630
      %6656 = vmatprep.subr.bf16.mxu0 0
      %6657 = vmatpush1.bf16.msra.mxu0 %v6629
      %6658 = vmatprep.subr.bf16.mxu0 0
      %6659 = vmatpush1.bf16.msra.mxu0 %v6628
      %6660 = vmatprep.subr.bf16.mxu0 0
      %6661 = vmatpush2.bf16.msra.mxu0 0
      %6662 = vmatprep.subr.bf16.mxu0 0
      %6663 = vmatpush2.bf16.msra.mxu0 0
      %6664 = vmatprep.subr.bf16.mxu0 0
      %6665 = vmatpush2.bf16.msra.mxu0 0
      %6666 = vmatprep.subr.bf16.mxu0 0
      %6667 = vmatpush2.bf16.msra.mxu0 0
      %6668 = vmatprep.subr.bf16.mxu0 0
      %6669 = vmatpush2.bf16.msra.mxu0 0
      %6670 = vmatprep.subr.bf16.mxu0 0
      %6671 = vmatpush2.bf16.msra.mxu0 0
      %6672 = vmatprep.subr.bf16.mxu0 0
      %6673 = vmatpush2.bf16.msra.mxu0 0
      %6674 = vmatprep.subr.bf16.mxu0 0
      %6675 = vmatpush2.bf16.msra.mxu0 0
      %6676 = vmatprep.mubr.bf16.mxu0 0
      %6677 = vmatmul.mubr.bf16.gmra.mxu0 %v6459
      %v6678 = vpop.f32.mrf.mxu0
      %v6679 = vadd.f32 0.0, %v6678
      %v6680 = vpop.f32.mrf.mxu0
      %v6681 = vpop.f32.mrf.mxu0
      %v6682 = vadd.f32 0.0, %v6681
      %v6683 = vpop.f32.mrf.mxu0
      %6684 = vmatprep.mubr.bf16.mxu0 0
      %6685 = vmatmul.mubr.bf16.gmra.mxu0 %v6467
      %v6686 = vpop.f32.mrf.mxu0
      %v6687 = vadd.f32 0.0, %v6686
      %v6688 = vpop.f32.mrf.mxu0
      %v6689 = vpop.f32.mrf.mxu0
      %v6690 = vadd.f32 0.0, %v6689
      %v6691 = vpop.f32.mrf.mxu0
      %6692 = vmatprep.mubr.bf16.mxu0 0
      %6693 = vmatmul.mubr.bf16.gmra.mxu0 %v6475
      %v6694 = vpop.f32.mrf.mxu0
      %v6695 = vadd.f32 0.0, %v6694
      %v6696 = vpop.f32.mrf.mxu0
      %v6697 = vpop.f32.mrf.mxu0
      %v6698 = vadd.f32 0.0, %v6697
      %v6699 = vpop.f32.mrf.mxu0
      %6700 = vmatprep.mubr.bf16.mxu0 0
      %6701 = vmatmul.mubr.bf16.gmra.mxu0 %v6483
      %v6702 = vpop.f32.mrf.mxu0
      %v6703 = vadd.f32 0.0, %v6702
      %v6704 = vpop.f32.mrf.mxu0
      %v6705 = vpop.f32.mrf.mxu0
      %v6706 = vadd.f32 0.0, %v6705
      %v6707 = vpop.f32.mrf.mxu0
      %6708 = vmatprep.mubr.bf16.mxu0 0
      %6709 = vmatmul.mubr.bf16.gmra.mxu0 %v6491
      %v6710 = vpop.f32.mrf.mxu0
      %v6711 = vadd.f32 0.0, %v6710
      %v6712 = vpop.f32.mrf.mxu0
      %v6713 = vpop.f32.mrf.mxu0
      %v6714 = vadd.f32 0.0, %v6713
      %v6715 = vpop.f32.mrf.mxu0
      %6716 = vmatprep.mubr.bf16.mxu0 0
      %6717 = vmatmul.mubr.bf16.gmra.mxu0 %v6499
      %v6718 = vpop.f32.mrf.mxu0
      %v6719 = vadd.f32 0.0, %v6718
      %v6720 = vpop.f32.mrf.mxu0
      %v6721 = vpop.f32.mrf.mxu0
      %v6722 = vadd.f32 0.0, %v6721
      %v6723 = vpop.f32.mrf.mxu0
      %6724 = vmatprep.mubr.bf16.mxu0 0
      %6725 = vmatmul.mubr.bf16.gmra.mxu0 %v6507
      %v6726 = vpop.f32.mrf.mxu0
      %v6727 = vadd.f32 0.0, %v6726
      %v6728 = vpop.f32.mrf.mxu0
      %v6729 = vpop.f32.mrf.mxu0
      %v6730 = vadd.f32 0.0, %v6729
      %v6731 = vpop.f32.mrf.mxu0
      %6732 = vmatprep.mubr.bf16.mxu0 0
      %6733 = vmatmul.mubr.bf16.gmra.mxu0 %v6515
      %v6734 = vpop.f32.mrf.mxu0
      %v6735 = vadd.f32 0.0, %v6734
      %v6736 = vpop.f32.mrf.mxu0
      %v6737 = vpop.f32.mrf.mxu0
      %v6738 = vadd.f32 0.0, %v6737
      %v6739 = vpop.f32.mrf.mxu0
      %6740 = vmatprep.mubr.bf16.mxu0 0
      %6741 = vmatmul.mubr.bf16.gmra.mxu0 %v6523
      %v6742 = vpop.f32.mrf.mxu0
      %v6743 = vadd.f32 0.0, %v6742
      %v6744 = vpop.f32.mrf.mxu0
      %v6745 = vpop.f32.mrf.mxu0
      %v6746 = vadd.f32 0.0, %v6745
      %v6747 = vpop.f32.mrf.mxu0
      %6748 = vmatprep.mubr.bf16.mxu0 0
      %6749 = vmatmul.mubr.bf16.gmra.mxu0 %v6531
      %v6750 = vpop.f32.mrf.mxu0
      %v6751 = vadd.f32 0.0, %v6750
      %v6752 = vpop.f32.mrf.mxu0
      %v6753 = vpop.f32.mrf.mxu0
      %v6754 = vadd.f32 0.0, %v6753
      %v6755 = vpop.f32.mrf.mxu0
      %6756 = vmatprep.mubr.bf16.mxu0 0
      %6757 = vmatmul.mubr.bf16.gmra.mxu0 %v6539
      %v6758 = vpop.f32.mrf.mxu0
      %v6759 = vadd.f32 0.0, %v6758
      %v6760 = vpop.f32.mrf.mxu0
      %v6761 = vpop.f32.mrf.mxu0
      %v6762 = vadd.f32 0.0, %v6761
      %v6763 = vpop.f32.mrf.mxu0
      %6764 = vmatprep.mubr.bf16.mxu0 0
      %6765 = vmatmul.mubr.bf16.gmra.mxu0 %v6547
      %v6766 = vpop.f32.mrf.mxu0
      %v6767 = vadd.f32 0.0, %v6766
      %v6768 = vpop.f32.mrf.mxu0
      %v6769 = vpop.f32.mrf.mxu0
      %v6770 = vadd.f32 0.0, %v6769
      %v6771 = vpop.f32.mrf.mxu0
      %6772 = vmatprep.mubr.bf16.mxu0 0
      %6773 = vmatmul.mubr.bf16.gmra.mxu0 %v6555
      %v6774 = vpop.f32.mrf.mxu0
      %v6775 = vadd.f32 0.0, %v6774
      %v6776 = vpop.f32.mrf.mxu0
      %v6777 = vpop.f32.mrf.mxu0
      %v6778 = vadd.f32 0.0, %v6777
      %v6779 = vpop.f32.mrf.mxu0
      %6780 = vmatprep.mubr.bf16.mxu0 0
      %6781 = vmatmul.mubr.bf16.gmra.mxu0 %v6563
      %v6782 = vpop.f32.mrf.mxu0
      %v6783 = vadd.f32 0.0, %v6782
      %v6784 = vpop.f32.mrf.mxu0
      %v6785 = vpop.f32.mrf.mxu0
      %v6786 = vadd.f32 0.0, %v6785
      %v6787 = vpop.f32.mrf.mxu0
      %6788 = vmatprep.mubr.bf16.mxu0 0
      %6789 = vmatmul.mubr.bf16.gmra.mxu0 %v6571
      %v6790 = vpop.f32.mrf.mxu0
      %v6791 = vadd.f32 0.0, %v6790
      %v6792 = vpop.f32.mrf.mxu0
      %v6793 = vpop.f32.mrf.mxu0
      %v6794 = vadd.f32 0.0, %v6793
      %v6795 = vpop.f32.mrf.mxu0
      %6796 = vmatprep.mubr.bf16.mxu0 0
      %6797 = vmatmul.mubr.bf16.gmra.mxu0 %v6579
      %v6798 = vpop.f32.mrf.mxu0
      %v6799 = vadd.f32 0.0, %v6798
      %v6800 = vpop.f32.mrf.mxu0
      %v6801 = vpop.f32.mrf.mxu0
      %v6802 = vadd.f32 0.0, %v6801
      %v6803 = vpop.f32.mrf.mxu0
      %6804 = vdwg.mxu0
      %v6805 = vadd.f32 %v6251, %v6679
      %v6806 = vadd.f32 %v6252, %v6682
      %v6807 = vadd.f32 %v6253, %v6687
      %v6808 = vadd.f32 %v6254, %v6690
      %v6809 = vadd.f32 %v6255, %v6695
      %v6810 = vadd.f32 %v6256, %v6698
      %v6811 = vadd.f32 %v6257, %v6703
      %v6812 = vadd.f32 %v6258, %v6706
      %v6813 = vadd.f32 %v6259, %v6711
      %v6814 = vadd.f32 %v6260, %v6714
      %v6815 = vadd.f32 %v6261, %v6719
      %v6816 = vadd.f32 %v6262, %v6722
      %v6817 = vadd.f32 %v6263, %v6727
      %v6818 = vadd.f32 %v6264, %v6730
      %v6819 = vadd.f32 %v6265, %v6735
      %v6820 = vadd.f32 %v6266, %v6738
      %v6821 = vadd.f32 %v6267, %v6743
      %v6822 = vadd.f32 %v6268, %v6746
      %v6823 = vadd.f32 %v6269, %v6751
      %v6824 = vadd.f32 %v6270, %v6754
      %v6825 = vadd.f32 %v6271, %v6759
      %v6826 = vadd.f32 %v6272, %v6762
      %v6827 = vadd.f32 %v6273, %v6767
      %v6828 = vadd.f32 %v6274, %v6770
      %v6829 = vadd.f32 %v6275, %v6775
      %v6830 = vadd.f32 %v6276, %v6778
      %v6831 = vadd.f32 %v6277, %v6783
      %v6832 = vadd.f32 %v6278, %v6786
      %v6833 = vadd.f32 %v6279, %v6791
      %v6834 = vadd.f32 %v6280, %v6794
      %v6835 = vadd.f32 %v6281, %v6799
      %v6836 = vadd.f32 %v6282, %v6802
      %v6837 = vld [vmem:[%s6] sm:$0x1]
      %v6839 = vlaneseq
      %v6840 = vshrl.u32 %v6839, 7
      %v6841 = vsub.s32 0, %v6840
      %v6842 = vrot.slane %v6837, %v6841
      %v6844 = vadd.f32 %v6805, %v6842
      %v6845 = vadd.f32 %v6806, %v6842
      %v6846 = vadd.f32 %v6807, %v6842
      %v6847 = vadd.f32 %v6808, %v6842
      %v6848 = vadd.f32 %v6809, %v6842
      %v6849 = vadd.f32 %v6810, %v6842
      %v6850 = vadd.f32 %v6811, %v6842
      %v6851 = vadd.f32 %v6812, %v6842
      %v6852 = vadd.f32 %v6813, %v6842
      %v6853 = vadd.f32 %v6814, %v6842
      %v6854 = vadd.f32 %v6815, %v6842
      %v6855 = vadd.f32 %v6816, %v6842
      %v6856 = vadd.f32 %v6817, %v6842
      %v6857 = vadd.f32 %v6818, %v6842
      %v6858 = vadd.f32 %v6819, %v6842
      %v6859 = vadd.f32 %v6820, %v6842
      %v6860 = vadd.f32 %v6821, %v6842
      %v6861 = vadd.f32 %v6822, %v6842
      %v6862 = vadd.f32 %v6823, %v6842
      %v6863 = vadd.f32 %v6824, %v6842
      %v6864 = vadd.f32 %v6825, %v6842
      %v6865 = vadd.f32 %v6826, %v6842
      %v6866 = vadd.f32 %v6827, %v6842
      %v6867 = vadd.f32 %v6828, %v6842
      %v6868 = vadd.f32 %v6829, %v6842
      %v6869 = vadd.f32 %v6830, %v6842
      %v6870 = vadd.f32 %v6831, %v6842
      %v6871 = vadd.f32 %v6832, %v6842
      %v6872 = vadd.f32 %v6833, %v6842
      %v6873 = vadd.f32 %v6834, %v6842
      %v6874 = vadd.f32 %v6835, %v6842
      %v6875 = vadd.f32 %v6836, %v6842
      %v6876 = vmax.f32 %v6844, 0.0
      %v6877 = vmax.f32 %v6845, 0.0
      %v6878 = vmax.f32 %v6846, 0.0
      %v6879 = vmax.f32 %v6847, 0.0
      %v6880 = vmax.f32 %v6848, 0.0
      %v6881 = vmax.f32 %v6849, 0.0
      %v6882 = vmax.f32 %v6850, 0.0
      %v6883 = vmax.f32 %v6851, 0.0
      %v6884 = vmax.f32 %v6852, 0.0
      %v6885 = vmax.f32 %v6853, 0.0
      %v6886 = vmax.f32 %v6854, 0.0
      %v6887 = vmax.f32 %v6855, 0.0
      %v6888 = vmax.f32 %v6856, 0.0
      %v6889 = vmax.f32 %v6857, 0.0
      %v6890 = vmax.f32 %v6858, 0.0
      %v6891 = vmax.f32 %v6859, 0.0
      %v6892 = vmax.f32 %v6860, 0.0
      %v6893 = vmax.f32 %v6861, 0.0
      %v6894 = vmax.f32 %v6862, 0.0
      %v6895 = vmax.f32 %v6863, 0.0
      %v6896 = vmax.f32 %v6864, 0.0
      %v6897 = vmax.f32 %v6865, 0.0
      %v6898 = vmax.f32 %v6866, 0.0
      %v6899 = vmax.f32 %v6867, 0.0
      %v6900 = vmax.f32 %v6868, 0.0
      %v6901 = vmax.f32 %v6869, 0.0
      %v6902 = vmax.f32 %v6870, 0.0
      %v6903 = vmax.f32 %v6871, 0.0
      %v6904 = vmax.f32 %v6872, 0.0
      %v6905 = vmax.f32 %v6873, 0.0
      %v6906 = vmax.f32 %v6874, 0.0
      %v6907 = vmax.f32 %v6875, 0.0
      %v6908 = vpack.c.bf16 %v6877, %v6876
      %v6909 = vpack.c.bf16 %v6879, %v6878
      %v6910 = vpack.c.bf16 %v6881, %v6880
      %v6911 = vpack.c.bf16 %v6883, %v6882
      %v6912 = vpack.c.bf16 %v6885, %v6884
      %v6913 = vpack.c.bf16 %v6887, %v6886
      %v6914 = vpack.c.bf16 %v6889, %v6888
      %v6915 = vpack.c.bf16 %v6891, %v6890
      %v6916 = vpack.c.bf16 %v6893, %v6892
      %v6917 = vpack.c.bf16 %v6895, %v6894
      %v6918 = vpack.c.bf16 %v6897, %v6896
      %v6919 = vpack.c.bf16 %v6899, %v6898
      %v6920 = vpack.c.bf16 %v6901, %v6900
      %v6921 = vpack.c.bf16 %v6903, %v6902
      %v6922 = vpack.c.bf16 %v6905, %v6904
      %v6923 = vpack.c.bf16 %v6907, %v6906
      %v6924 = vld [vmem:[%s7] sm:$0xf]
      %v6925 = vld [vmem:[%s7 + $0x4] sm:$0xf]
      %v6926 = vld [vmem:[%s7 + $0x8] sm:$0xf]
      %v6927 = vld [vmem:[%s7 + $0xc] sm:$0xf]
      %v6928 = vld [vmem:[%s7 + $0x10] sm:$0xf]
      %v6929 = vld [vmem:[%s7 + $0x14] sm:$0xf]
      %v6930 = vld [vmem:[%s7 + $0x18] sm:$0xf]
      %v6931 = vld [vmem:[%s7 + $0x1c] sm:$0xf]
      %v6932 = vld [vmem:[%s7 + $0x20] sm:$0xf]
      %v6933 = vld [vmem:[%s7 + $0x24] sm:$0xf]
      %v6934 = vld [vmem:[%s7 + $0x28] sm:$0xf]
      %v6935 = vld [vmem:[%s7 + $0x2c] sm:$0xf]
      %v6936 = vld [vmem:[%s7 + $0x30] sm:$0xf]
      %v6937 = vld [vmem:[%s7 + $0x34] sm:$0xf]
      %v6938 = vld [vmem:[%s7 + $0x38] sm:$0xf]
      %v6939 = vld [vmem:[%s7 + $0x3c] sm:$0xf]
      %v6940 = vld [vmem:[%s8] sm:$0x1]
      %v6942 = vlaneseq
      %v6943 = vshrl.u32 %v6942, 7
      %v6944 = vsub.s32 0, %v6943
      %v6945 = vrot.slane %v6940, %v6944
      %v6963 = vunpack.c.l.b16 %v6924
      %v6964 = vunpack.c.l.b16 %v6925
      %v6965 = vunpack.c.l.b16 %v6926
      %v6966 = vunpack.c.l.b16 %v6927
      %v6967 = vunpack.c.l.b16 %v6928
      %v6968 = vunpack.c.l.b16 %v6929
      %v6969 = vunpack.c.l.b16 %v6930
      %v6970 = vunpack.c.l.b16 %v6931
      %v6971 = vunpack.c.l.b16 %v6932
      %v6972 = vunpack.c.l.b16 %v6933
      %v6973 = vunpack.c.l.b16 %v6934
      %v6974 = vunpack.c.l.b16 %v6935
      %v6975 = vunpack.c.l.b16 %v6936
      %v6976 = vunpack.c.l.b16 %v6937
      %v6977 = vunpack.c.l.b16 %v6938
      %v6978 = vunpack.c.l.b16 %v6939
      %v6979 = vpack.c.b16 %v6964, %v6963
      %v6980 = vpack.c.b16 %v6966, %v6965
      %v6981 = vpack.c.b16 %v6968, %v6967
      %v6982 = vpack.c.b16 %v6970, %v6969
      %v6983 = vpack.c.b16 %v6972, %v6971
      %v6984 = vpack.c.b16 %v6974, %v6973
      %v6985 = vpack.c.b16 %v6976, %v6975
      %v6986 = vpack.c.b16 %v6978, %v6977
      %6995 = vmatprep.subr.bf16.mxu0 0
      %6996 = vmatpush1.bf16.msra.mxu0 %v6986
      %6997 = vmatprep.subr.bf16.mxu0 0
      %6998 = vmatpush1.bf16.msra.mxu0 %v6985
      %6999 = vmatprep.subr.bf16.mxu0 0
      %7000 = vmatpush1.bf16.msra.mxu0 %v6984
      %7001 = vmatprep.subr.bf16.mxu0 0
      %7002 = vmatpush1.bf16.msra.mxu0 %v6983
      %7003 = vmatprep.subr.bf16.mxu0 0
      %7004 = vmatpush1.bf16.msra.mxu0 %v6982
      %7005 = vmatprep.subr.bf16.mxu0 0
      %7006 = vmatpush1.bf16.msra.mxu0 %v6981
      %7007 = vmatprep.subr.bf16.mxu0 0
      %7008 = vmatpush1.bf16.msra.mxu0 %v6980
      %7009 = vmatprep.subr.bf16.mxu0 0
      %7010 = vmatpush1.bf16.msra.mxu0 %v6979
      %7011 = vmatprep.subr.bf16.mxu0 0
      %7012 = vmatpush2.bf16.msra.mxu0 0
      %7013 = vmatprep.subr.bf16.mxu0 0
      %7014 = vmatpush2.bf16.msra.mxu0 0
      %7015 = vmatprep.subr.bf16.mxu0 0
      %7016 = vmatpush2.bf16.msra.mxu0 0
      %7017 = vmatprep.subr.bf16.mxu0 0
      %7018 = vmatpush2.bf16.msra.mxu0 0
      %7019 = vmatprep.subr.bf16.mxu0 0
      %7020 = vmatpush2.bf16.msra.mxu0 0
      %7021 = vmatprep.subr.bf16.mxu0 0
      %7022 = vmatpush2.bf16.msra.mxu0 0
      %7023 = vmatprep.subr.bf16.mxu0 0
      %7024 = vmatpush2.bf16.msra.mxu0 0
      %7025 = vmatprep.subr.bf16.mxu0 0
      %7026 = vmatpush2.bf16.msra.mxu0 0
      %7027 = vmatprep.mubr.bf16.mxu0 0
      %7028 = vmatmul.mubr.bf16.gmra.mxu0 %v6908
      %v7029 = vpop.f32.mrf.mxu0
      %v7030 = vadd.f32 %v6945, %v7029
      %v7031 = vpop.f32.mrf.mxu0
      %v7032 = vpop.f32.mrf.mxu0
      %v7033 = vadd.f32 %v6945, %v7032
      %v7034 = vpop.f32.mrf.mxu0
      %7035 = vmatprep.mubr.bf16.mxu0 0
      %7036 = vmatmul.mubr.bf16.gmra.mxu0 %v6909
      %v7037 = vpop.f32.mrf.mxu0
      %v7038 = vadd.f32 %v6945, %v7037
      %v7039 = vpop.f32.mrf.mxu0
      %v7040 = vpop.f32.mrf.mxu0
      %v7041 = vadd.f32 %v6945, %v7040
      %v7042 = vpop.f32.mrf.mxu0
      %7043 = vmatprep.mubr.bf16.mxu0 0
      %7044 = vmatmul.mubr.bf16.gmra.mxu0 %v6910
      %v7045 = vpop.f32.mrf.mxu0
      %v7046 = vadd.f32 %v6945, %v7045
      %v7047 = vpop.f32.mrf.mxu0
      %v7048 = vpop.f32.mrf.mxu0
      %v7049 = vadd.f32 %v6945, %v7048
      %v7050 = vpop.f32.mrf.mxu0
      %7051 = vmatprep.mubr.bf16.mxu0 0
      %7052 = vmatmul.mubr.bf16.gmra.mxu0 %v6911
      %v7053 = vpop.f32.mrf.mxu0
      %v7054 = vadd.f32 %v6945, %v7053
      %v7055 = vpop.f32.mrf.mxu0
      %v7056 = vpop.f32.mrf.mxu0
      %v7057 = vadd.f32 %v6945, %v7056
      %v7058 = vpop.f32.mrf.mxu0
      %7059 = vmatprep.mubr.bf16.mxu0 0
      %7060 = vmatmul.mubr.bf16.gmra.mxu0 %v6912
      %v7061 = vpop.f32.mrf.mxu0
      %v7062 = vadd.f32 %v6945, %v7061
      %v7063 = vpop.f32.mrf.mxu0
      %v7064 = vpop.f32.mrf.mxu0
      %v7065 = vadd.f32 %v6945, %v7064
      %v7066 = vpop.f32.mrf.mxu0
      %7067 = vmatprep.mubr.bf16.mxu0 0
      %7068 = vmatmul.mubr.bf16.gmra.mxu0 %v6913
      %v7069 = vpop.f32.mrf.mxu0
      %v7070 = vadd.f32 %v6945, %v7069
      %v7071 = vpop.f32.mrf.mxu0
      %v7072 = vpop.f32.mrf.mxu0
      %v7073 = vadd.f32 %v6945, %v7072
      %v7074 = vpop.f32.mrf.mxu0
      %7075 = vmatprep.mubr.bf16.mxu0 0
      %7076 = vmatmul.mubr.bf16.gmra.mxu0 %v6914
      %v7077 = vpop.f32.mrf.mxu0
      %v7078 = vadd.f32 %v6945, %v7077
      %v7079 = vpop.f32.mrf.mxu0
      %v7080 = vpop.f32.mrf.mxu0
      %v7081 = vadd.f32 %v6945, %v7080
      %v7082 = vpop.f32.mrf.mxu0
      %7083 = vmatprep.mubr.bf16.mxu0 0
      %7084 = vmatmul.mubr.bf16.gmra.mxu0 %v6915
      %v7085 = vpop.f32.mrf.mxu0
      %v7086 = vadd.f32 %v6945, %v7085
      %v7087 = vpop.f32.mrf.mxu0
      %v7088 = vpop.f32.mrf.mxu0
      %v7089 = vadd.f32 %v6945, %v7088
      %v7090 = vpop.f32.mrf.mxu0
      %7091 = vmatprep.mubr.bf16.mxu0 0
      %7092 = vmatmul.mubr.bf16.gmra.mxu0 %v6916
      %v7093 = vpop.f32.mrf.mxu0
      %v7094 = vadd.f32 %v6945, %v7093
      %v7095 = vpop.f32.mrf.mxu0
      %v7096 = vpop.f32.mrf.mxu0
      %v7097 = vadd.f32 %v6945, %v7096
      %v7098 = vpop.f32.mrf.mxu0
      %7099 = vmatprep.mubr.bf16.mxu0 0
      %7100 = vmatmul.mubr.bf16.gmra.mxu0 %v6917
      %v7101 = vpop.f32.mrf.mxu0
      %v7102 = vadd.f32 %v6945, %v7101
      %v7103 = vpop.f32.mrf.mxu0
      %v7104 = vpop.f32.mrf.mxu0
      %v7105 = vadd.f32 %v6945, %v7104
      %v7106 = vpop.f32.mrf.mxu0
      %7107 = vmatprep.mubr.bf16.mxu0 0
      %7108 = vmatmul.mubr.bf16.gmra.mxu0 %v6918
      %v7109 = vpop.f32.mrf.mxu0
      %v7110 = vadd.f32 %v6945, %v7109
      %v7111 = vpop.f32.mrf.mxu0
      %v7112 = vpop.f32.mrf.mxu0
      %v7113 = vadd.f32 %v6945, %v7112
      %v7114 = vpop.f32.mrf.mxu0
      %7115 = vmatprep.mubr.bf16.mxu0 0
      %7116 = vmatmul.mubr.bf16.gmra.mxu0 %v6919
      %v7117 = vpop.f32.mrf.mxu0
      %v7118 = vadd.f32 %v6945, %v7117
      %v7119 = vpop.f32.mrf.mxu0
      %v7120 = vpop.f32.mrf.mxu0
      %v7121 = vadd.f32 %v6945, %v7120
      %v7122 = vpop.f32.mrf.mxu0
      %7123 = vmatprep.mubr.bf16.mxu0 0
      %7124 = vmatmul.mubr.bf16.gmra.mxu0 %v6920
      %v7125 = vpop.f32.mrf.mxu0
      %v7126 = vadd.f32 %v6945, %v7125
      %v7127 = vpop.f32.mrf.mxu0
      %v7128 = vpop.f32.mrf.mxu0
      %v7129 = vadd.f32 %v6945, %v7128
      %v7130 = vpop.f32.mrf.mxu0
      %7131 = vmatprep.mubr.bf16.mxu0 0
      %7132 = vmatmul.mubr.bf16.gmra.mxu0 %v6921
      %v7133 = vpop.f32.mrf.mxu0
      %v7134 = vadd.f32 %v6945, %v7133
      %v7135 = vpop.f32.mrf.mxu0
      %v7136 = vpop.f32.mrf.mxu0
      %v7137 = vadd.f32 %v6945, %v7136
      %v7138 = vpop.f32.mrf.mxu0
      %7139 = vmatprep.mubr.bf16.mxu0 0
      %7140 = vmatmul.mubr.bf16.gmra.mxu0 %v6922
      %v7141 = vpop.f32.mrf.mxu0
      %v7142 = vadd.f32 %v6945, %v7141
      %v7143 = vpop.f32.mrf.mxu0
      %v7144 = vpop.f32.mrf.mxu0
      %v7145 = vadd.f32 %v6945, %v7144
      %v7146 = vpop.f32.mrf.mxu0
      %7147 = vmatprep.mubr.bf16.mxu0 0
      %7148 = vmatmul.mubr.bf16.gmra.mxu0 %v6923
      %v7149 = vpop.f32.mrf.mxu0
      %v7150 = vadd.f32 %v6945, %v7149
      %v7151 = vpop.f32.mrf.mxu0
      %v7152 = vpop.f32.mrf.mxu0
      %v7153 = vadd.f32 %v6945, %v7152
      %v7154 = vpop.f32.mrf.mxu0
      %7155 = vdwg.mxu0
      %v7156 = vld [vmem:[%s9] sm:$0xf]
      %v7157 = vld [vmem:[%s9 + $0x4] sm:$0xf]
      %v7158 = vld [vmem:[%s9 + $0x8] sm:$0xf]
      %v7159 = vld [vmem:[%s9 + $0xc] sm:$0xf]
      %v7160 = vld [vmem:[%s9 + $0x10] sm:$0xf]
      %v7161 = vld [vmem:[%s9 + $0x14] sm:$0xf]
      %v7162 = vld [vmem:[%s9 + $0x18] sm:$0xf]
      %v7163 = vld [vmem:[%s9 + $0x1c] sm:$0xf]
      %v7164 = vld [vmem:[%s9 + $0x20] sm:$0xf]
      %v7165 = vld [vmem:[%s9 + $0x24] sm:$0xf]
      %v7166 = vld [vmem:[%s9 + $0x28] sm:$0xf]
      %v7167 = vld [vmem:[%s9 + $0x2c] sm:$0xf]
      %v7168 = vld [vmem:[%s9 + $0x30] sm:$0xf]
      %v7169 = vld [vmem:[%s9 + $0x34] sm:$0xf]
      %v7170 = vld [vmem:[%s9 + $0x38] sm:$0xf]
      %v7171 = vld [vmem:[%s9 + $0x3c] sm:$0xf]
      %v7172 = vld [vmem:[%s10] sm:$0x1]
      %v7174 = vlaneseq
      %v7175 = vshrl.u32 %v7174, 7
      %v7176 = vsub.s32 0, %v7175
      %v7177 = vrot.slane %v7172, %v7176
      %v7195 = vunpack.c.l.b16 %v7156
      %v7196 = vunpack.c.l.b16 %v7157
      %v7197 = vunpack.c.l.b16 %v7158
      %v7198 = vunpack.c.l.b16 %v7159
      %v7199 = vunpack.c.l.b16 %v7160
      %v7200 = vunpack.c.l.b16 %v7161
      %v7201 = vunpack.c.l.b16 %v7162
      %v7202 = vunpack.c.l.b16 %v7163
      %v7203 = vunpack.c.l.b16 %v7164
      %v7204 = vunpack.c.l.b16 %v7165
      %v7205 = vunpack.c.l.b16 %v7166
      %v7206 = vunpack.c.l.b16 %v7167
      %v7207 = vunpack.c.l.b16 %v7168
      %v7208 = vunpack.c.l.b16 %v7169
      %v7209 = vunpack.c.l.b16 %v7170
      %v7210 = vunpack.c.l.b16 %v7171
      %v7211 = vpack.c.b16 %v7196, %v7195
      %v7212 = vpack.c.b16 %v7198, %v7197
      %v7213 = vpack.c.b16 %v7200, %v7199
      %v7214 = vpack.c.b16 %v7202, %v7201
      %v7215 = vpack.c.b16 %v7204, %v7203
      %v7216 = vpack.c.b16 %v7206, %v7205
      %v7217 = vpack.c.b16 %v7208, %v7207
      %v7218 = vpack.c.b16 %v7210, %v7209
      %7227 = vmatprep.subr.bf16.mxu0 0
      %7228 = vmatpush1.bf16.msra.mxu0 %v7218
      %7229 = vmatprep.subr.bf16.mxu0 0
      %7230 = vmatpush1.bf16.msra.mxu0 %v7217
      %7231 = vmatprep.subr.bf16.mxu0 0
      %7232 = vmatpush1.bf16.msra.mxu0 %v7216
      %7233 = vmatprep.subr.bf16.mxu0 0
      %7234 = vmatpush1.bf16.msra.mxu0 %v7215
      %7235 = vmatprep.subr.bf16.mxu0 0
      %7236 = vmatpush1.bf16.msra.mxu0 %v7214
      %7237 = vmatprep.subr.bf16.mxu0 0
      %7238 = vmatpush1.bf16.msra.mxu0 %v7213
      %7239 = vmatprep.subr.bf16.mxu0 0
      %7240 = vmatpush1.bf16.msra.mxu0 %v7212
      %7241 = vmatprep.subr.bf16.mxu0 0
      %7242 = vmatpush1.bf16.msra.mxu0 %v7211
      %7243 = vmatprep.subr.bf16.mxu0 0
      %7244 = vmatpush2.bf16.msra.mxu0 0
      %7245 = vmatprep.subr.bf16.mxu0 0
      %7246 = vmatpush2.bf16.msra.mxu0 0
      %7247 = vmatprep.subr.bf16.mxu0 0
      %7248 = vmatpush2.bf16.msra.mxu0 0
      %7249 = vmatprep.subr.bf16.mxu0 0
      %7250 = vmatpush2.bf16.msra.mxu0 0
      %7251 = vmatprep.subr.bf16.mxu0 0
      %7252 = vmatpush2.bf16.msra.mxu0 0
      %7253 = vmatprep.subr.bf16.mxu0 0
      %7254 = vmatpush2.bf16.msra.mxu0 0
      %7255 = vmatprep.subr.bf16.mxu0 0
      %7256 = vmatpush2.bf16.msra.mxu0 0
      %7257 = vmatprep.subr.bf16.mxu0 0
      %7258 = vmatpush2.bf16.msra.mxu0 0
      %7259 = vmatprep.mubr.bf16.mxu0 0
      %7260 = vmatmul.mubr.bf16.gmra.mxu0 %v513
      %v7261 = vpop.f32.mrf.mxu0
      %v7262 = vadd.f32 %v7177, %v7261
      %v7263 = vpop.f32.mrf.mxu0
      %v7264 = vpop.f32.mrf.mxu0
      %v7265 = vadd.f32 %v7177, %v7264
      %v7266 = vpop.f32.mrf.mxu0
      %7267 = vmatprep.mubr.bf16.mxu0 0
      %7268 = vmatmul.mubr.bf16.gmra.mxu0 %v514
      %v7269 = vpop.f32.mrf.mxu0
      %v7270 = vadd.f32 %v7177, %v7269
      %v7271 = vpop.f32.mrf.mxu0
      %v7272 = vpop.f32.mrf.mxu0
      %v7273 = vadd.f32 %v7177, %v7272
      %v7274 = vpop.f32.mrf.mxu0
      %7275 = vmatprep.mubr.bf16.mxu0 0
      %7276 = vmatmul.mubr.bf16.gmra.mxu0 %v515
      %v7277 = vpop.f32.mrf.mxu0
      %v7278 = vadd.f32 %v7177, %v7277
      %v7279 = vpop.f32.mrf.mxu0
      %v7280 = vpop.f32.mrf.mxu0
      %v7281 = vadd.f32 %v7177, %v7280
      %v7282 = vpop.f32.mrf.mxu0
      %7283 = vmatprep.mubr.bf16.mxu0 0
      %7284 = vmatmul.mubr.bf16.gmra.mxu0 %v516
      %v7285 = vpop.f32.mrf.mxu0
      %v7286 = vadd.f32 %v7177, %v7285
      %v7287 = vpop.f32.mrf.mxu0
      %v7288 = vpop.f32.mrf.mxu0
      %v7289 = vadd.f32 %v7177, %v7288
      %v7290 = vpop.f32.mrf.mxu0
      %7291 = vmatprep.mubr.bf16.mxu0 0
      %7292 = vmatmul.mubr.bf16.gmra.mxu0 %v517
      %v7293 = vpop.f32.mrf.mxu0
      %v7294 = vadd.f32 %v7177, %v7293
      %v7295 = vpop.f32.mrf.mxu0
      %v7296 = vpop.f32.mrf.mxu0
      %v7297 = vadd.f32 %v7177, %v7296
      %v7298 = vpop.f32.mrf.mxu0
      %7299 = vmatprep.mubr.bf16.mxu0 0
      %7300 = vmatmul.mubr.bf16.gmra.mxu0 %v518
      %v7301 = vpop.f32.mrf.mxu0
      %v7302 = vadd.f32 %v7177, %v7301
      %v7303 = vpop.f32.mrf.mxu0
      %v7304 = vpop.f32.mrf.mxu0
      %v7305 = vadd.f32 %v7177, %v7304
      %v7306 = vpop.f32.mrf.mxu0
      %7307 = vmatprep.mubr.bf16.mxu0 0
      %7308 = vmatmul.mubr.bf16.gmra.mxu0 %v519
      %v7309 = vpop.f32.mrf.mxu0
      %v7310 = vadd.f32 %v7177, %v7309
      %v7311 = vpop.f32.mrf.mxu0
      %v7312 = vpop.f32.mrf.mxu0
      %v7313 = vadd.f32 %v7177, %v7312
      %v7314 = vpop.f32.mrf.mxu0
      %7315 = vmatprep.mubr.bf16.mxu0 0
      %7316 = vmatmul.mubr.bf16.gmra.mxu0 %v520
      %v7317 = vpop.f32.mrf.mxu0
      %v7318 = vadd.f32 %v7177, %v7317
      %v7319 = vpop.f32.mrf.mxu0
      %v7320 = vpop.f32.mrf.mxu0
      %v7321 = vadd.f32 %v7177, %v7320
      %v7322 = vpop.f32.mrf.mxu0
      %7323 = vmatprep.mubr.bf16.mxu0 0
      %7324 = vmatmul.mubr.bf16.gmra.mxu0 %v521
      %v7325 = vpop.f32.mrf.mxu0
      %v7326 = vadd.f32 %v7177, %v7325
      %v7327 = vpop.f32.mrf.mxu0
      %v7328 = vpop.f32.mrf.mxu0
      %v7329 = vadd.f32 %v7177, %v7328
      %v7330 = vpop.f32.mrf.mxu0
      %7331 = vmatprep.mubr.bf16.mxu0 0
      %7332 = vmatmul.mubr.bf16.gmra.mxu0 %v522
      %v7333 = vpop.f32.mrf.mxu0
      %v7334 = vadd.f32 %v7177, %v7333
      %v7335 = vpop.f32.mrf.mxu0
      %v7336 = vpop.f32.mrf.mxu0
      %v7337 = vadd.f32 %v7177, %v7336
      %v7338 = vpop.f32.mrf.mxu0
      %7339 = vmatprep.mubr.bf16.mxu0 0
      %7340 = vmatmul.mubr.bf16.gmra.mxu0 %v523
      %v7341 = vpop.f32.mrf.mxu0
      %v7342 = vadd.f32 %v7177, %v7341
      %v7343 = vpop.f32.mrf.mxu0
      %v7344 = vpop.f32.mrf.mxu0
      %v7345 = vadd.f32 %v7177, %v7344
      %v7346 = vpop.f32.mrf.mxu0
      %7347 = vmatprep.mubr.bf16.mxu0 0
      %7348 = vmatmul.mubr.bf16.gmra.mxu0 %v524
      %v7349 = vpop.f32.mrf.mxu0
      %v7350 = vadd.f32 %v7177, %v7349
      %v7351 = vpop.f32.mrf.mxu0
      %v7352 = vpop.f32.mrf.mxu0
      %v7353 = vadd.f32 %v7177, %v7352
      %v7354 = vpop.f32.mrf.mxu0
      %7355 = vmatprep.mubr.bf16.mxu0 0
      %7356 = vmatmul.mubr.bf16.gmra.mxu0 %v525
      %v7357 = vpop.f32.mrf.mxu0
      %v7358 = vadd.f32 %v7177, %v7357
      %v7359 = vpop.f32.mrf.mxu0
      %v7360 = vpop.f32.mrf.mxu0
      %v7361 = vadd.f32 %v7177, %v7360
      %v7362 = vpop.f32.mrf.mxu0
      %7363 = vmatprep.mubr.bf16.mxu0 0
      %7364 = vmatmul.mubr.bf16.gmra.mxu0 %v526
      %v7365 = vpop.f32.mrf.mxu0
      %v7366 = vadd.f32 %v7177, %v7365
      %v7367 = vpop.f32.mrf.mxu0
      %v7368 = vpop.f32.mrf.mxu0
      %v7369 = vadd.f32 %v7177, %v7368
      %v7370 = vpop.f32.mrf.mxu0
      %7371 = vmatprep.mubr.bf16.mxu0 0
      %7372 = vmatmul.mubr.bf16.gmra.mxu0 %v527
      %v7373 = vpop.f32.mrf.mxu0
      %v7374 = vadd.f32 %v7177, %v7373
      %v7375 = vpop.f32.mrf.mxu0
      %v7376 = vpop.f32.mrf.mxu0
      %v7377 = vadd.f32 %v7177, %v7376
      %v7378 = vpop.f32.mrf.mxu0
      %7379 = vmatprep.mubr.bf16.mxu0 0
      %7380 = vmatmul.mubr.bf16.gmra.mxu0 %v528
      %v7381 = vpop.f32.mrf.mxu0
      %v7382 = vadd.f32 %v7177, %v7381
      %v7383 = vpop.f32.mrf.mxu0
      %v7384 = vpop.f32.mrf.mxu0
      %v7385 = vadd.f32 %v7177, %v7384
      %v7386 = vpop.f32.mrf.mxu0
      %7387 = vdwg.mxu0
      %v7388 = vadd.f32 %v7030, %v7262
      %v7389 = vadd.f32 %v7033, %v7265
      %v7390 = vadd.f32 %v7038, %v7270
      %v7391 = vadd.f32 %v7041, %v7273
      %v7392 = vadd.f32 %v7046, %v7278
      %v7393 = vadd.f32 %v7049, %v7281
      %v7394 = vadd.f32 %v7054, %v7286
      %v7395 = vadd.f32 %v7057, %v7289
      %v7396 = vadd.f32 %v7062, %v7294
      %v7397 = vadd.f32 %v7065, %v7297
      %v7398 = vadd.f32 %v7070, %v7302
      %v7399 = vadd.f32 %v7073, %v7305
      %v7400 = vadd.f32 %v7078, %v7310
      %v7401 = vadd.f32 %v7081, %v7313
      %v7402 = vadd.f32 %v7086, %v7318
      %v7403 = vadd.f32 %v7089, %v7321
      %v7404 = vadd.f32 %v7094, %v7326
      %v7405 = vadd.f32 %v7097, %v7329
      %v7406 = vadd.f32 %v7102, %v7334
      %v7407 = vadd.f32 %v7105, %v7337
      %v7408 = vadd.f32 %v7110, %v7342
      %v7409 = vadd.f32 %v7113, %v7345
      %v7410 = vadd.f32 %v7118, %v7350
      %v7411 = vadd.f32 %v7121, %v7353
      %v7412 = vadd.f32 %v7126, %v7358
      %v7413 = vadd.f32 %v7129, %v7361
      %v7414 = vadd.f32 %v7134, %v7366
      %v7415 = vadd.f32 %v7137, %v7369
      %v7416 = vadd.f32 %v7142, %v7374
      %v7417 = vadd.f32 %v7145, %v7377
      %v7418 = vadd.f32 %v7150, %v7382
      %v7419 = vadd.f32 %v7153, %v7385
      %v7420 = vmax.f32 %v7388, 0.0
      %v7421 = vmax.f32 %v7389, 0.0
      %v7422 = vmax.f32 %v7390, 0.0
      %v7423 = vmax.f32 %v7391, 0.0
      %v7424 = vmax.f32 %v7392, 0.0
      %v7425 = vmax.f32 %v7393, 0.0
      %v7426 = vmax.f32 %v7394, 0.0
      %v7427 = vmax.f32 %v7395, 0.0
      %v7428 = vmax.f32 %v7396, 0.0
      %v7429 = vmax.f32 %v7397, 0.0
      %v7430 = vmax.f32 %v7398, 0.0
      %v7431 = vmax.f32 %v7399, 0.0
      %v7432 = vmax.f32 %v7400, 0.0
      %v7433 = vmax.f32 %v7401, 0.0
      %v7434 = vmax.f32 %v7402, 0.0
      %v7435 = vmax.f32 %v7403, 0.0
      %v7436 = vmax.f32 %v7404, 0.0
      %v7437 = vmax.f32 %v7405, 0.0
      %v7438 = vmax.f32 %v7406, 0.0
      %v7439 = vmax.f32 %v7407, 0.0
      %v7440 = vmax.f32 %v7408, 0.0
      %v7441 = vmax.f32 %v7409, 0.0
      %v7442 = vmax.f32 %v7410, 0.0
      %v7443 = vmax.f32 %v7411, 0.0
      %v7444 = vmax.f32 %v7412, 0.0
      %v7445 = vmax.f32 %v7413, 0.0
      %v7446 = vmax.f32 %v7414, 0.0
      %v7447 = vmax.f32 %v7415, 0.0
      %v7448 = vmax.f32 %v7416, 0.0
      %v7449 = vmax.f32 %v7417, 0.0
      %v7450 = vmax.f32 %v7418, 0.0
      %v7451 = vmax.f32 %v7419, 0.0
      %7452 = vst [vmem:[%s386] sm:$0xff] %v7420
      %7453 = vst [vmem:[%s386 + $0x8] sm:$0xff] %v7421
      %7454 = vst [vmem:[%s386 + $0x10] sm:$0xff] %v7422
      %7455 = vst [vmem:[%s386 + $0x18] sm:$0xff] %v7423
      %7456 = vst [vmem:[%s386 + $0x20] sm:$0xff] %v7424
      %7457 = vst [vmem:[%s386 + $0x28] sm:$0xff] %v7425
      %7458 = vst [vmem:[%s386 + $0x30] sm:$0xff] %v7426
      %7459 = vst [vmem:[%s386 + $0x38] sm:$0xff] %v7427
      %7460 = vst [vmem:[%s386 + $0x40] sm:$0xff] %v7428
      %7461 = vst [vmem:[%s386 + $0x48] sm:$0xff] %v7429
      %7462 = vst [vmem:[%s386 + $0x50] sm:$0xff] %v7430
      %7463 = vst [vmem:[%s386 + $0x58] sm:$0xff] %v7431
      %7464 = vst [vmem:[%s386 + $0x60] sm:$0xff] %v7432
      %7465 = vst [vmem:[%s386 + $0x68] sm:$0xff] %v7433
      %7466 = vst [vmem:[%s386 + $0x70] sm:$0xff] %v7434
      %7467 = vst [vmem:[%s386 + $0x78] sm:$0xff] %v7435
      %7468 = vst [vmem:[%s386 + $0x80] sm:$0xff] %v7436
      %7469 = vst [vmem:[%s386 + $0x88] sm:$0xff] %v7437
      %7470 = vst [vmem:[%s386 + $0x90] sm:$0xff] %v7438
      %7471 = vst [vmem:[%s386 + $0x98] sm:$0xff] %v7439
      %7472 = vst [vmem:[%s386 + $0xa0] sm:$0xff] %v7440
      %7473 = vst [vmem:[%s386 + $0xa8] sm:$0xff] %v7441
      %7474 = vst [vmem:[%s386 + $0xb0] sm:$0xff] %v7442
      %7475 = vst [vmem:[%s386 + $0xb8] sm:$0xff] %v7443
      %7476 = vst [vmem:[%s386 + $0xc0] sm:$0xff] %v7444
      %7477 = vst [vmem:[%s386 + $0xc8] sm:$0xff] %v7445
      %7478 = vst [vmem:[%s386 + $0xd0] sm:$0xff] %v7446
      %7479 = vst [vmem:[%s386 + $0xd8] sm:$0xff] %v7447
      %7480 = vst [vmem:[%s386 + $0xe0] sm:$0xff] %v7448
      %7481 = vst [vmem:[%s386 + $0xe8] sm:$0xff] %v7449
      %7482 = vst [vmem:[%s386 + $0xf0] sm:$0xff] %v7450
      %7483 = vst [vmem:[%s386 + $0xf8] sm:$0xff] %v7451
      %p7484 = scmp.lt.s32.totalorder %s22, 1
      %s7485 = scalar_select %p7484, %s22, 1
      %s7486 = smul.addr %s7485, 32
      %s7487 = smul.addr %s7486, 8
      %s7488 = scalar_lea.vmem %s11, %s7487
      // Predicated region
      $region65: #{bottleneck_forward.1} parent=63 // pred_check
        %p7489 = pneg %p276
      $region66: #{bottleneck_forward.1} parent=63 // pred_check_branch
        %7491 = sbr.rel (%p7489) target = $region68
      $region67: #{bottleneck_forward.1} parent=63 // pred_region
        _
      $region68: #{bottleneck_forward.1} parent=63 // pred_fallthru
        _
    $region64: #{bottleneck_forward.1} parent=5 // pred_fallthru
      _
    %p7492 = scmp.le.s32.totalorder 2, %s17
    // Predicated region
    $region69: #{bottleneck_forward.1} parent=5 // pred_check
      %p7493 = pneg %p7492
    $region70: #{bottleneck_forward.1} parent=5 // pred_check_branch
      %7495 = sbr.rel (%p7493) target = $region72
    $region71: #{bottleneck_forward.1} parent=5 // pred_region
      %s7496 = ssub.s32 %s17, 2
      // Predicated region
      $region73: #{bottleneck_forward.1} parent=71 // pred_check
        %p7497 = pneg %p282
      $region74: #{bottleneck_forward.1} parent=71 // pred_check_branch
        %7499 = sbr.rel (%p7497) target = $region76
      $region75: #{bottleneck_forward.1} parent=71 // pred_region
        %p7500 = scmp.lt.s32.totalorder %s23, 1
        %s7501 = scalar_select %p7500, %s23, 1
        %s7502 = smul.addr %s7501, 32
        %s7503 = smul.addr %s7502, 8
        %s7504 = scalar_lea.vmem %s11, %s7503
      $region76: #{bottleneck_forward.1} parent=71 // pred_fallthru
        _
    $region72: #{bottleneck_forward.1} parent=5 // pred_fallthru
      _
  $region6: #{bottleneck_forward.1} parent=0 // loop_footer
    %s21 = sadd.s32 1, %s17
  $region7: #{bottleneck_forward.1} parent=0 // loop_footer_branch
    %16 = sbr.rel target = $region3
  $region8: #{bottleneck_forward.1} parent=0 // loop_exit
    _

</llo_original>
